<compile_context>
chip_gen: v7x
topology: tpu7x:2x2x1
jax: 0.10.0
libtpu: 0.0.40
codegen_flags: <defaults>
</compile_context>

<pallas_src>
import functools

import jax
import jax.numpy as jnp
from jax.experimental import pallas as pl
from jax.experimental.pallas import tpu as pltpu

_LANE = 128


def _round_up(x, m):
    return (x + m - 1) // m * m


def _instance_norm(y, gamma, beta, eps=1e-5):
    # y: (HW, C) f32 for one sample; gamma/beta: (1, C) f32.
    # One-pass stats: var = E[x^2] - mu^2 (single read of y, one mul pass).
    n = y.shape[0]
    inv_n = 1.0 / n
    s = jnp.sum(y, axis=0, keepdims=True)
    ss = jnp.sum(y * y, axis=0, keepdims=True)
    mu = s * inv_n
    var = ss * inv_n - mu * mu
    inv = jax.lax.rsqrt(var + eps)
    return (y - mu) * (inv * gamma) + beta


def _bottleneck_kernel(x_ref, w1_ref, w2_ref, w3_ref,
                       g1_ref, b1_ref, g2_ref, b2_ref, g3_ref, b3_ref,
                       *rest, stride, has_projection):
    if has_projection:
        ws_ref, gs_ref, bs_ref, o_ref, pad_ref = rest
    else:
        o_ref, pad_ref = rest

    H, W, Cin = x_ref.shape[1], x_ref.shape[2], x_ref.shape[3]
    Pp = w1_ref.shape[1]          # padded bottleneck width (multiple of 128)
    C3p = w3_ref.shape[1]         # padded output channels (multiple of 128)
    Ho, Wo = o_ref.shape[1], o_ref.shape[2]
    cdt = w1_ref.dtype            # compute dtype (bf16 or f32)

    x = x_ref[0]                                   # (H, W, Cin)
    xf = x.reshape(H * W, Cin)

    # ---- conv1 (1x1) -> IN -> relu : one lane-dense MXU matmul ----
    y1 = jnp.dot(xf, w1_ref[...], preferred_element_type=jnp.float32)
    y1 = jnp.maximum(_instance_norm(y1, g1_ref[...], b1_ref[...]), 0.0)

    # ---- stage y1 into the persistent zero-padded VMEM scratch ----
    zr = jnp.zeros((1, W + 2, Pp), cdt)
    zc = jnp.zeros((H + 2, 1, Pp), cdt)
    pad_ref[0:1, :, :] = zr
    pad_ref[H + 1:H + 2, :, :] = zr
    pad_ref[:, 0:1, :] = zc
    pad_ref[:, W + 1:W + 2, :] = zc
    pad_ref[1:H + 1, 1:W + 1, :] = y1.reshape(H, W, Pp).astype(cdt)
    pad = pad_ref[...]                             # (H+2, W+2, Pp)

    # ---- conv2 (3x3, pad=1, stride) as a single im2col matmul (K = 9*Pp) ----
    if stride == 1:
        taps = [pad[di:di + Ho, dj:dj + Wo, :].reshape(Ho * Wo, Pp)
                for di in range(3) for dj in range(3)]
    else:  # stride == 2: split even/odd columns ONCE, then only cheap slices
        even = pad[:, 0::2, :]
        odd = pad[:, 1::2, :]
        col_src = (even, odd, even)
        col_off = (0, 0, 1)
        taps = []
        for di in range(3):
            for dj in range(3):
                src = col_src[dj]
                t = src[di:di + stride * (Ho - 1) + 1:stride,
                        col_off[dj]:col_off[dj] + Wo, :]
                taps.append(t.reshape(Ho * Wo, Pp))
    patches = jnp.concatenate(taps, axis=1)        # (Ho*Wo, 9*Pp), compute dtype
    y2 = jnp.dot(patches, w2_ref[...], preferred_element_type=jnp.float32)
    y2 = jnp.maximum(_instance_norm(y2, g2_ref[...], b2_ref[...]), 0.0)

    # ---- conv3 (1x1) -> IN (no relu yet) ----
    y3 = jnp.dot(y2.astype(cdt), w3_ref[...], preferred_element_type=jnp.float32)
    y3 = _instance_norm(y3, g3_ref[...], b3_ref[...])

    # ---- shortcut: projection conv1x1(stride) -> IN, or identity ----
    xs = x if stride == 1 else x[::stride, ::stride, :]
    xsf = xs.reshape(Ho * Wo, Cin)
    if has_projection:
        sc = jnp.dot(xsf, ws_ref[...], preferred_element_type=jnp.float32)
        sc = _instance_norm(sc, gs_ref[...], bs_ref[...])
    else:
        sc = xsf.astype(jnp.float32)               # Cin == C3p in this case

    out = jnp.maximum(y3 + sc, 0.0)
    o_ref[0] = out.reshape(Ho, Wo, C3p).astype(o_ref.dtype)


def bottleneck_forward(x_nchw, params, *, stride=1, compute_dtype=jnp.bfloat16):
    assert stride in (1, 2), "ResNet bottleneck uses stride 1 or 2"
    x = jnp.transpose(x_nchw, (0, 2, 3, 1)).astype(jnp.float32)   # NCHW -> NHWC
    N, H, W, Cin = x.shape
    P = params['w1'].shape[1]
    C3 = params['w3'].shape[1]
    has_projection = (stride != 1) or (Cin != C3)
    Ho = (H + 2 - 3) // stride + 1
    Wo = (W + 2 - 3) // stride + 1

    Cin_p = _round_up(Cin, _LANE)
    P_p = _round_up(P, _LANE)
    C3_p = _round_up(C3, _LANE)

    def pad2(a, r, c):
        return jnp.pad(a, ((0, r - a.shape[0]), (0, c - a.shape[1])))

    def pad_affine(a, c):
        a = a.reshape(1, -1)
        return jnp.pad(a, ((0, 0), (0, c - a.shape[1]))).astype(jnp.float32)

    xp = jnp.pad(x, ((0, 0), (0, 0), (0, 0), (0, Cin_p - Cin))).astype(compute_dtype)
    w1 = pad2(params['w1'], Cin_p, P_p).astype(compute_dtype)
    w2 = jnp.pad(params['w2'],
                 ((0, 0), (0, 0), (0, P_p - P), (0, P_p - P)))
    w2 = w2.reshape(9 * P_p, P_p).astype(compute_dtype)            # im2col weights
    w3 = pad2(params['w3'], P_p, C3_p).astype(compute_dtype)

    g1, b1 = pad_affine(params['g1'], P_p), pad_affine(params['b1'], P_p)
    g2, b2 = pad_affine(params['g2'], P_p), pad_affine(params['b2'], P_p)
    g3, b3 = pad_affine(params['g3'], C3_p), pad_affine(params['b3'], C3_p)

    args = [xp, w1, w2, w3, g1, b1, g2, b2, g3, b3]
    if has_projection:
        ws = pad2(params['ws'], Cin_p, C3_p).astype(compute_dtype)
        gs, bs = pad_affine(params['gs'], C3_p), pad_affine(params['bs'], C3_p)
        args += [ws, gs, bs]

    def const_spec(a):
        nd = a.ndim
        return pl.BlockSpec(a.shape, lambda n, _nd=nd: (0,) * _nd)

    in_specs = [pl.BlockSpec((1, H, W, Cin_p), lambda n: (n, 0, 0, 0))]
    in_specs += [const_spec(a) for a in args[1:]]

    flops = (2 * H * W * Cin_p * P_p
             + 2 * Ho * Wo * (9 * P_p) * P_p
             + 2 * Ho * Wo * P_p * C3_p)
    if has_projection:
        flops += 2 * Ho * Wo * Cin_p * C3_p
    flops *= N
    bytes_accessed = int(sum(a.size * a.dtype.itemsize for a in args)
                         + N * Ho * Wo * C3_p * 4)
    cost = pl.CostEstimate(flops=int(flops), transcendentals=0,
                           bytes_accessed=bytes_accessed)

    out = pl.pallas_call(
        functools.partial(_bottleneck_kernel, stride=stride,
                          has_projection=has_projection),
        out_shape=jax.ShapeDtypeStruct((N, Ho, Wo, C3_p), jnp.float32),
        grid=(N,),
        in_specs=in_specs,
        out_specs=pl.BlockSpec((1, Ho, Wo, C3_p), lambda n: (n, 0, 0, 0)),
        scratch_shapes=[pltpu.VMEM((H + 2, W + 2, P_p), compute_dtype)],
        compiler_params=pltpu.CompilerParams(dimension_semantics=("parallel",)),
        cost_estimate=cost,
    )(*args)

    out = out[..., :C3]                         # drop channel padding
    return jnp.transpose(out, (0, 3, 1, 2))     # NHWC -> NCHW


def init_params(key, in_planes, planes, expansion=4):
    """Parameter init matching Bottleneck.__init__ shapes.

    Conv weights: random normal (bias=False everywhere).
    GroupNorm affine params: PyTorch default (weight=1, bias=0).
    """
    c3 = expansion * planes
    ks = jax.random.split(key, 4)
    w1 = jax.random.normal(ks[0], (in_planes, planes), jnp.float32) * 0.1
    w2 = jax.random.normal(ks[1], (3, 3, planes, planes), jnp.float32) * 0.1
    w3 = jax.random.normal(ks[2], (planes, c3), jnp.float32) * 0.1
    ws = jax.random.normal(ks[3], (in_planes, c3), jnp.float32) * 0.1
    ones = lambda c: jnp.ones((1, c), jnp.float32)
    zeros = lambda c: jnp.zeros((1, c), jnp.float32)
    return dict(w1=w1, w2=w2, w3=w3, ws=ws,
                g1=ones(planes), b1=zeros(planes),
                g2=ones(planes), b2=zeros(planes),
                g3=ones(c3), b3=zeros(c3),
                gs=ones(c3), bs=zeros(c3))


def bottleneck_reference(x_nchw, params, *, stride=1):
    """Pure-JAX f32 reference mirroring the PyTorch forward (for validation)."""
    x = jnp.transpose(x_nchw, (0, 2, 3, 1)).astype(jnp.float32)

    def inorm(y, g, b, eps=1e-5):
        mu = y.mean(axis=(1, 2), keepdims=True)
        var = ((y - mu) ** 2).mean(axis=(1, 2), keepdims=True)
        g = g.reshape(1, 1, 1, -1)
        b = b.reshape(1, 1, 1, -1)
        return (y - mu) / jnp.sqrt(var + eps) * g + b

    y = jnp.einsum('nhwc,cd->nhwd', x, params['w1'])
    y = jax.nn.relu(inorm(y, params['g1'], params['b1']))
    y = jax.lax.conv_general_dilated(
        y, params['w2'], (stride, stride), ((1, 1), (1, 1)),
        dimension_numbers=('NHWC', 'HWIO', 'NHWC'))
    y = jax.nn.relu(inorm(y, params['g2'], params['b2']))
    y = jnp.einsum('nhwc,cd->nhwd', y, params['w3'])
    y = inorm(y, params['g3'], params['b3'])

    C3 = params['w3'].shape[1]
    xs = x[:, ::stride, ::stride, :]
    if stride != 1 or x.shape[-1] != C3:
        sc = jnp.einsum('nhwc,cd->nhwd', xs, params['ws'])
        sc = inorm(sc, params['gs'], params['bs'])
    else:
        sc = xs
    out = jax.nn.relu(y + sc)
    return jnp.transpose(out, (0, 3, 1, 2))


if __name__ == "__main__":
    key = jax.random.PRNGKey(0)
    k_x, k_p = jax.random.split(key)

    # batch=2, in_planes=4, planes=4, spatial=16x16, stride=1
    # -> projection shortcut (in_planes != 4*planes), like the module spec.
    N, in_planes, planes, H, W, stride = 2, 4, 4, 16, 16, 1
    x = jax.random.normal(k_x, (N, in_planes, H, W), jnp.float32)   # NCHW
    params = init_params(k_p, in_planes, planes)

    ref = bottleneck_reference(x, params, stride=stride)

    # f32 compute path: matches the reference math tightly.
    out_f32 = jax.block_until_ready(
        bottleneck_forward(x, params, stride=stride, compute_dtype=jnp.float32))
    assert out_f32.shape == (N, 4 * planes, H, W), out_f32.shape
    assert jnp.allclose(out_f32, ref, atol=1e-3, rtol=1e-3), \
        f"f32 max err {jnp.max(jnp.abs(out_f32 - ref))}"

    # bf16 MXU path (default): looser tolerance for bf16 inputs/weights.
    out_bf16 = jax.block_until_ready(bottleneck_forward(x, params, stride=stride))
    assert out_bf16.shape == (N, 4 * planes, H, W), out_bf16.shape
    assert jnp.allclose(out_bf16, ref, atol=1e-1, rtol=5e-2), \
        f"bf16 max err {jnp.max(jnp.abs(out_bf16 - ref))}"

    print("KERNEL_OK")
</pallas_src>

<mosaic_0001>
module attributes {stable_mosaic.version = 11 : i64} {
  func.func @_bottleneck_kernel(%arg0: i32, %arg1: memref<1x16x16x128xf32, #tpu.memory_space<vmem>>, %arg2: memref<128x128xf32, #tpu.memory_space<vmem>>, %arg3: memref<1152x128xf32, #tpu.memory_space<vmem>>, %arg4: memref<128x128xf32, #tpu.memory_space<vmem>>, %arg5: memref<1x128xf32, #tpu.memory_space<vmem>>, %arg6: memref<1x128xf32, #tpu.memory_space<vmem>>, %arg7: memref<1x128xf32, #tpu.memory_space<vmem>>, %arg8: memref<1x128xf32, #tpu.memory_space<vmem>>, %arg9: memref<1x128xf32, #tpu.memory_space<vmem>>, %arg10: memref<1x128xf32, #tpu.memory_space<vmem>>, %arg11: memref<128x128xf32, #tpu.memory_space<vmem>>, %arg12: memref<1x128xf32, #tpu.memory_space<vmem>>, %arg13: memref<1x128xf32, #tpu.memory_space<vmem>>, %arg14: memref<1x16x16x128xf32, #tpu.memory_space<vmem>>, %arg15: memref<18x18x128xf32, #tpu.memory_space<vmem>>) attributes {dimension_semantics = [#tpu.dimension_semantics<parallel>], iteration_bounds = array<i64: 2>, scalar_prefetch = 0 : i64, scratch_operands = 1 : i64, tpu.core_type = #tpu.core_type<tc>, window_params = [{transform_indices = @transform_0, window_bounds = array<i64: 1, 16, 16, 128>}, {pipeline_mode = #tpu.pipeline_mode<synchronous>, transform_indices = @transform_1, window_bounds = array<i64: 128, 128>}, {pipeline_mode = #tpu.pipeline_mode<synchronous>, transform_indices = @transform_2, window_bounds = array<i64: 1152, 128>}, {pipeline_mode = #tpu.pipeline_mode<synchronous>, transform_indices = @transform_3, window_bounds = array<i64: 128, 128>}, {pipeline_mode = #tpu.pipeline_mode<synchronous>, transform_indices = @transform_4, window_bounds = array<i64: 1, 128>}, {pipeline_mode = #tpu.pipeline_mode<synchronous>, transform_indices = @transform_5, window_bounds = array<i64: 1, 128>}, {pipeline_mode = #tpu.pipeline_mode<synchronous>, transform_indices = @transform_6, window_bounds = array<i64: 1, 128>}, {pipeline_mode = #tpu.pipeline_mode<synchronous>, transform_indices = @transform_7, window_bounds = array<i64: 1, 128>}, {pipeline_mode = #tpu.pipeline_mode<synchronous>, transform_indices = @transform_8, window_bounds = array<i64: 1, 128>}, {pipeline_mode = #tpu.pipeline_mode<synchronous>, transform_indices = @transform_9, window_bounds = array<i64: 1, 128>}, {pipeline_mode = #tpu.pipeline_mode<synchronous>, transform_indices = @transform_10, window_bounds = array<i64: 128, 128>}, {pipeline_mode = #tpu.pipeline_mode<synchronous>, transform_indices = @transform_11, window_bounds = array<i64: 1, 128>}, {pipeline_mode = #tpu.pipeline_mode<synchronous>, transform_indices = @transform_12, window_bounds = array<i64: 1, 128>}, {transform_indices = @transform_13, window_bounds = array<i64: 1, 16, 16, 128>}]} {
    %c0 = arith.constant 0 : index
    %c0_0 = arith.constant 0 : index
    %c0_1 = arith.constant 0 : index
    %c0_2 = arith.constant 0 : index
    %0 = vector.load %arg1[%c0, %c0_0, %c0_1, %c0_2] : memref<1x16x16x128xf32, #tpu.memory_space<vmem>>, vector<1x16x16x128xf32>
    %1 = vector.shape_cast %0 : vector<1x16x16x128xf32> to vector<16x16x128xf32>
    %2 = vector.shape_cast %1 : vector<16x16x128xf32> to vector<256x128xf32>
    %c0_3 = arith.constant 0 : index
    %c0_4 = arith.constant 0 : index
    %3 = vector.load %arg2[%c0_3, %c0_4] : memref<128x128xf32, #tpu.memory_space<vmem>>, vector<128x128xf32>
    %cst = arith.constant dense<0.000000e+00> : vector<256x128xf32>
    %4 = tpu.matmul %2, %3, %cst {dimension_numbers = #tpu.dot_dimension_numbers<[1], [0], [0], [1], [0, 0, 1, 1], [], []>} : vector<256x128xf32>, vector<128x128xf32>, vector<256x128xf32> -> vector<256x128xf32>
    %c0_5 = arith.constant 0 : index
    %c0_6 = arith.constant 0 : index
    %5 = vector.load %arg5[%c0_5, %c0_6] : memref<1x128xf32, #tpu.memory_space<vmem>>, vector<1x128xf32>
    %c0_7 = arith.constant 0 : index
    %c0_8 = arith.constant 0 : index
    %6 = vector.load %arg6[%c0_7, %c0_8] : memref<1x128xf32, #tpu.memory_space<vmem>>, vector<1x128xf32>
    %cst_9 = arith.constant dense<0.000000e+00> : vector<128xf32>
    %7 = vector.multi_reduction <add>, %4, %cst_9 [0] : vector<256x128xf32> to vector<128xf32>
    %8 = vector.shape_cast %7 : vector<128xf32> to vector<1x128xf32>
    %9 = arith.mulf %4, %4 : vector<256x128xf32>
    %cst_10 = arith.constant dense<0.000000e+00> : vector<128xf32>
    %10 = vector.multi_reduction <add>, %9, %cst_10 [0] : vector<256x128xf32> to vector<128xf32>
    %11 = vector.shape_cast %10 : vector<128xf32> to vector<1x128xf32>
    %cst_11 = arith.constant 3.906250e-03 : f32
    %12 = vector.broadcast %cst_11 : f32 to vector<1x128xf32>
    %13 = arith.mulf %8, %12 : vector<1x128xf32>
    %cst_12 = arith.constant 3.906250e-03 : f32
    %14 = vector.broadcast %cst_12 : f32 to vector<1x128xf32>
    %15 = arith.mulf %11, %14 : vector<1x128xf32>
    %16 = arith.mulf %13, %13 : vector<1x128xf32>
    %17 = arith.subf %15, %16 : vector<1x128xf32>
    %cst_13 = arith.constant 9.99999974E-6 : f32
    %18 = vector.broadcast %cst_13 : f32 to vector<1x128xf32>
    %19 = arith.addf %17, %18 : vector<1x128xf32>
    %20 = math.rsqrt %19 : vector<1x128xf32>
    %21 = vector.broadcast %13 : vector<1x128xf32> to vector<256x128xf32>
    %22 = arith.subf %4, %21 : vector<256x128xf32>
    %23 = arith.mulf %20, %5 : vector<1x128xf32>
    %24 = vector.broadcast %23 : vector<1x128xf32> to vector<256x128xf32>
    %25 = arith.mulf %22, %24 : vector<256x128xf32>
    %26 = vector.broadcast %6 : vector<1x128xf32> to vector<256x128xf32>
    %27 = arith.addf %25, %26 : vector<256x128xf32>
    %cst_14 = arith.constant 0.000000e+00 : f32
    %28 = vector.broadcast %cst_14 : f32 to vector<256x128xf32>
    %29 = arith.maximumf %27, %28 : vector<256x128xf32>
    %cst_15 = arith.constant 0.000000e+00 : f32
    %30 = vector.broadcast %cst_15 : f32 to vector<1x18x128xf32>
    %cst_16 = arith.constant 0.000000e+00 : f32
    %31 = vector.broadcast %cst_16 : f32 to vector<18x1x128xf32>
    %c0_17 = arith.constant 0 : index
    %c0_18 = arith.constant 0 : index
    %c0_19 = arith.constant 0 : index
    %32 = vector.load %arg15[%c0_17, %c0_18, %c0_19] : memref<18x18x128xf32, #tpu.memory_space<vmem>>, vector<1x18x128xf32>
    tpu.vector_store %arg15[%c0_17, %c0_18, %c0_19], %30 {strides = array<i32>} : memref<18x18x128xf32, #tpu.memory_space<vmem>>, vector<1x18x128xf32>,
    %c17 = arith.constant 17 : index
    %c0_20 = arith.constant 0 : index
    %c0_21 = arith.constant 0 : index
    %33 = vector.load %arg15[%c17, %c0_20, %c0_21] : memref<18x18x128xf32, #tpu.memory_space<vmem>>, vector<1x18x128xf32>
    tpu.vector_store %arg15[%c17, %c0_20, %c0_21], %30 {strides = array<i32>} : memref<18x18x128xf32, #tpu.memory_space<vmem>>, vector<1x18x128xf32>,
    %c0_22 = arith.constant 0 : index
    %c0_23 = arith.constant 0 : index
    %c0_24 = arith.constant 0 : index
    %34 = vector.load %arg15[%c0_22, %c0_23, %c0_24] : memref<18x18x128xf32, #tpu.memory_space<vmem>>, vector<18x1x128xf32>
    tpu.vector_store %arg15[%c0_22, %c0_23, %c0_24], %31 {strides = array<i32>} : memref<18x18x128xf32, #tpu.memory_space<vmem>>, vector<18x1x128xf32>,
    %c0_25 = arith.constant 0 : index
    %c17_26 = arith.constant 17 : index
    %c0_27 = arith.constant 0 : index
    %35 = vector.load %arg15[%c0_25, %c17_26, %c0_27] : memref<18x18x128xf32, #tpu.memory_space<vmem>>, vector<18x1x128xf32>
    tpu.vector_store %arg15[%c0_25, %c17_26, %c0_27], %31 {strides = array<i32>} : memref<18x18x128xf32, #tpu.memory_space<vmem>>, vector<18x1x128xf32>,
    %36 = vector.shape_cast %29 : vector<256x128xf32> to vector<16x16x128xf32>
    %c1 = arith.constant 1 : index
    %c1_28 = arith.constant 1 : index
    %c0_29 = arith.constant 0 : index
    %37 = vector.load %arg15[%c1, %c1_28, %c0_29] : memref<18x18x128xf32, #tpu.memory_space<vmem>>, vector<16x16x128xf32>
    tpu.vector_store %arg15[%c1, %c1_28, %c0_29], %36 {strides = array<i32>} : memref<18x18x128xf32, #tpu.memory_space<vmem>>, vector<16x16x128xf32>,
    %c0_30 = arith.constant 0 : index
    %c0_31 = arith.constant 0 : index
    %c0_32 = arith.constant 0 : index
    %38 = vector.load %arg15[%c0_30, %c0_31, %c0_32] : memref<18x18x128xf32, #tpu.memory_space<vmem>>, vector<18x18x128xf32>
    %39 = vector.extract_strided_slice %38 {offsets = [0, 0, 0], sizes = [16, 16, 128], strides = [1, 1, 1]} : vector<18x18x128xf32> to vector<16x16x128xf32>
    %40 = vector.shape_cast %39 : vector<16x16x128xf32> to vector<256x128xf32>
    %41 = vector.extract_strided_slice %38 {offsets = [0, 1, 0], sizes = [16, 16, 128], strides = [1, 1, 1]} : vector<18x18x128xf32> to vector<16x16x128xf32>
    %42 = vector.shape_cast %41 : vector<16x16x128xf32> to vector<256x128xf32>
    %43 = vector.extract_strided_slice %38 {offsets = [0, 2, 0], sizes = [16, 16, 128], strides = [1, 1, 1]} : vector<18x18x128xf32> to vector<16x16x128xf32>
    %44 = vector.shape_cast %43 : vector<16x16x128xf32> to vector<256x128xf32>
    %45 = vector.extract_strided_slice %38 {offsets = [1, 0, 0], sizes = [16, 16, 128], strides = [1, 1, 1]} : vector<18x18x128xf32> to vector<16x16x128xf32>
    %46 = vector.shape_cast %45 : vector<16x16x128xf32> to vector<256x128xf32>
    %47 = vector.extract_strided_slice %38 {offsets = [1, 1, 0], sizes = [16, 16, 128], strides = [1, 1, 1]} : vector<18x18x128xf32> to vector<16x16x128xf32>
    %48 = vector.shape_cast %47 : vector<16x16x128xf32> to vector<256x128xf32>
    %49 = vector.extract_strided_slice %38 {offsets = [1, 2, 0], sizes = [16, 16, 128], strides = [1, 1, 1]} : vector<18x18x128xf32> to vector<16x16x128xf32>
    %50 = vector.shape_cast %49 : vector<16x16x128xf32> to vector<256x128xf32>
    %51 = vector.extract_strided_slice %38 {offsets = [2, 0, 0], sizes = [16, 16, 128], strides = [1, 1, 1]} : vector<18x18x128xf32> to vector<16x16x128xf32>
    %52 = vector.shape_cast %51 : vector<16x16x128xf32> to vector<256x128xf32>
    %53 = vector.extract_strided_slice %38 {offsets = [2, 1, 0], sizes = [16, 16, 128], strides = [1, 1, 1]} : vector<18x18x128xf32> to vector<16x16x128xf32>
    %54 = vector.shape_cast %53 : vector<16x16x128xf32> to vector<256x128xf32>
    %55 = vector.extract_strided_slice %38 {offsets = [2, 2, 0], sizes = [16, 16, 128], strides = [1, 1, 1]} : vector<18x18x128xf32> to vector<16x16x128xf32>
    %56 = vector.shape_cast %55 : vector<16x16x128xf32> to vector<256x128xf32>
    %57 = tpu.concatenate %40, %42, %44, %46, %48, %50, %52, %54, %56 in 1 : vector<256x128xf32>, vector<256x128xf32>, vector<256x128xf32>, vector<256x128xf32>, vector<256x128xf32>, vector<256x128xf32>, vector<256x128xf32>, vector<256x128xf32>, vector<256x128xf32> -> vector<256x1152xf32>
    %c0_33 = arith.constant 0 : index
    %c0_34 = arith.constant 0 : index
    %58 = vector.load %arg3[%c0_33, %c0_34] : memref<1152x128xf32, #tpu.memory_space<vmem>>, vector<1152x128xf32>
    %cst_35 = arith.constant dense<0.000000e+00> : vector<256x128xf32>
    %59 = tpu.matmul %57, %58, %cst_35 {dimension_numbers = #tpu.dot_dimension_numbers<[1], [0], [0], [1], [0, 0, 1, 1], [], []>} : vector<256x1152xf32>, vector<1152x128xf32>, vector<256x128xf32> -> vector<256x128xf32>
    %c0_36 = arith.constant 0 : index
    %c0_37 = arith.constant 0 : index
    %60 = vector.load %arg7[%c0_36, %c0_37] : memref<1x128xf32, #tpu.memory_space<vmem>>, vector<1x128xf32>
    %c0_38 = arith.constant 0 : index
    %c0_39 = arith.constant 0 : index
    %61 = vector.load %arg8[%c0_38, %c0_39] : memref<1x128xf32, #tpu.memory_space<vmem>>, vector<1x128xf32>
    %cst_40 = arith.constant dense<0.000000e+00> : vector<128xf32>
    %62 = vector.multi_reduction <add>, %59, %cst_40 [0] : vector<256x128xf32> to vector<128xf32>
    %63 = vector.shape_cast %62 : vector<128xf32> to vector<1x128xf32>
    %64 = arith.mulf %59, %59 : vector<256x128xf32>
    %cst_41 = arith.constant dense<0.000000e+00> : vector<128xf32>
    %65 = vector.multi_reduction <add>, %64, %cst_41 [0] : vector<256x128xf32> to vector<128xf32>
    %66 = vector.shape_cast %65 : vector<128xf32> to vector<1x128xf32>
    %cst_42 = arith.constant 3.906250e-03 : f32
    %67 = vector.broadcast %cst_42 : f32 to vector<1x128xf32>
    %68 = arith.mulf %63, %67 : vector<1x128xf32>
    %cst_43 = arith.constant 3.906250e-03 : f32
    %69 = vector.broadcast %cst_43 : f32 to vector<1x128xf32>
    %70 = arith.mulf %66, %69 : vector<1x128xf32>
    %71 = arith.mulf %68, %68 : vector<1x128xf32>
    %72 = arith.subf %70, %71 : vector<1x128xf32>
    %cst_44 = arith.constant 9.99999974E-6 : f32
    %73 = vector.broadcast %cst_44 : f32 to vector<1x128xf32>
    %74 = arith.addf %72, %73 : vector<1x128xf32>
    %75 = math.rsqrt %74 : vector<1x128xf32>
    %76 = vector.broadcast %68 : vector<1x128xf32> to vector<256x128xf32>
    %77 = arith.subf %59, %76 : vector<256x128xf32>
    %78 = arith.mulf %75, %60 : vector<1x128xf32>
    %79 = vector.broadcast %78 : vector<1x128xf32> to vector<256x128xf32>
    %80 = arith.mulf %77, %79 : vector<256x128xf32>
    %81 = vector.broadcast %61 : vector<1x128xf32> to vector<256x128xf32>
    %82 = arith.addf %80, %81 : vector<256x128xf32>
    %cst_45 = arith.constant 0.000000e+00 : f32
    %83 = vector.broadcast %cst_45 : f32 to vector<256x128xf32>
    %84 = arith.maximumf %82, %83 : vector<256x128xf32>
    %c0_46 = arith.constant 0 : index
    %c0_47 = arith.constant 0 : index
    %85 = vector.load %arg4[%c0_46, %c0_47] : memref<128x128xf32, #tpu.memory_space<vmem>>, vector<128x128xf32>
    %cst_48 = arith.constant dense<0.000000e+00> : vector<256x128xf32>
    %86 = tpu.matmul %84, %85, %cst_48 {dimension_numbers = #tpu.dot_dimension_numbers<[1], [0], [0], [1], [0, 0, 1, 1], [], []>} : vector<256x128xf32>, vector<128x128xf32>, vector<256x128xf32> -> vector<256x128xf32>
    %c0_49 = arith.constant 0 : index
    %c0_50 = arith.constant 0 : index
    %87 = vector.load %arg9[%c0_49, %c0_50] : memref<1x128xf32, #tpu.memory_space<vmem>>, vector<1x128xf32>
    %c0_51 = arith.constant 0 : index
    %c0_52 = arith.constant 0 : index
    %88 = vector.load %arg10[%c0_51, %c0_52] : memref<1x128xf32, #tpu.memory_space<vmem>>, vector<1x128xf32>
    %cst_53 = arith.constant dense<0.000000e+00> : vector<128xf32>
    %89 = vector.multi_reduction <add>, %86, %cst_53 [0] : vector<256x128xf32> to vector<128xf32>
    %90 = vector.shape_cast %89 : vector<128xf32> to vector<1x128xf32>
    %91 = arith.mulf %86, %86 : vector<256x128xf32>
    %cst_54 = arith.constant dense<0.000000e+00> : vector<128xf32>
    %92 = vector.multi_reduction <add>, %91, %cst_54 [0] : vector<256x128xf32> to vector<128xf32>
    %93 = vector.shape_cast %92 : vector<128xf32> to vector<1x128xf32>
    %cst_55 = arith.constant 3.906250e-03 : f32
    %94 = vector.broadcast %cst_55 : f32 to vector<1x128xf32>
    %95 = arith.mulf %90, %94 : vector<1x128xf32>
    %cst_56 = arith.constant 3.906250e-03 : f32
    %96 = vector.broadcast %cst_56 : f32 to vector<1x128xf32>
    %97 = arith.mulf %93, %96 : vector<1x128xf32>
    %98 = arith.mulf %95, %95 : vector<1x128xf32>
    %99 = arith.subf %97, %98 : vector<1x128xf32>
    %cst_57 = arith.constant 9.99999974E-6 : f32
    %100 = vector.broadcast %cst_57 : f32 to vector<1x128xf32>
    %101 = arith.addf %99, %100 : vector<1x128xf32>
    %102 = math.rsqrt %101 : vector<1x128xf32>
    %103 = vector.broadcast %95 : vector<1x128xf32> to vector<256x128xf32>
    %104 = arith.subf %86, %103 : vector<256x128xf32>
    %105 = arith.mulf %102, %87 : vector<1x128xf32>
    %106 = vector.broadcast %105 : vector<1x128xf32> to vector<256x128xf32>
    %107 = arith.mulf %104, %106 : vector<256x128xf32>
    %108 = vector.broadcast %88 : vector<1x128xf32> to vector<256x128xf32>
    %109 = arith.addf %107, %108 : vector<256x128xf32>
    %110 = vector.shape_cast %1 : vector<16x16x128xf32> to vector<256x128xf32>
    %c0_58 = arith.constant 0 : index
    %c0_59 = arith.constant 0 : index
    %111 = vector.load %arg11[%c0_58, %c0_59] : memref<128x128xf32, #tpu.memory_space<vmem>>, vector<128x128xf32>
    %cst_60 = arith.constant dense<0.000000e+00> : vector<256x128xf32>
    %112 = tpu.matmul %110, %111, %cst_60 {dimension_numbers = #tpu.dot_dimension_numbers<[1], [0], [0], [1], [0, 0, 1, 1], [], []>} : vector<256x128xf32>, vector<128x128xf32>, vector<256x128xf32> -> vector<256x128xf32>
    %c0_61 = arith.constant 0 : index
    %c0_62 = arith.constant 0 : index
    %113 = vector.load %arg12[%c0_61, %c0_62] : memref<1x128xf32, #tpu.memory_space<vmem>>, vector<1x128xf32>
    %c0_63 = arith.constant 0 : index
    %c0_64 = arith.constant 0 : index
    %114 = vector.load %arg13[%c0_63, %c0_64] : memref<1x128xf32, #tpu.memory_space<vmem>>, vector<1x128xf32>
    %cst_65 = arith.constant dense<0.000000e+00> : vector<128xf32>
    %115 = vector.multi_reduction <add>, %112, %cst_65 [0] : vector<256x128xf32> to vector<128xf32>
    %116 = vector.shape_cast %115 : vector<128xf32> to vector<1x128xf32>
    %117 = arith.mulf %112, %112 : vector<256x128xf32>
    %cst_66 = arith.constant dense<0.000000e+00> : vector<128xf32>
    %118 = vector.multi_reduction <add>, %117, %cst_66 [0] : vector<256x128xf32> to vector<128xf32>
    %119 = vector.shape_cast %118 : vector<128xf32> to vector<1x128xf32>
    %cst_67 = arith.constant 3.906250e-03 : f32
    %120 = vector.broadcast %cst_67 : f32 to vector<1x128xf32>
    %121 = arith.mulf %116, %120 : vector<1x128xf32>
    %cst_68 = arith.constant 3.906250e-03 : f32
    %122 = vector.broadcast %cst_68 : f32 to vector<1x128xf32>
    %123 = arith.mulf %119, %122 : vector<1x128xf32>
    %124 = arith.mulf %121, %121 : vector<1x128xf32>
    %125 = arith.subf %123, %124 : vector<1x128xf32>
    %cst_69 = arith.constant 9.99999974E-6 : f32
    %126 = vector.broadcast %cst_69 : f32 to vector<1x128xf32>
    %127 = arith.addf %125, %126 : vector<1x128xf32>
    %128 = math.rsqrt %127 : vector<1x128xf32>
    %129 = vector.broadcast %121 : vector<1x128xf32> to vector<256x128xf32>
    %130 = arith.subf %112, %129 : vector<256x128xf32>
    %131 = arith.mulf %128, %113 : vector<1x128xf32>
    %132 = vector.broadcast %131 : vector<1x128xf32> to vector<256x128xf32>
    %133 = arith.mulf %130, %132 : vector<256x128xf32>
    %134 = vector.broadcast %114 : vector<1x128xf32> to vector<256x128xf32>
    %135 = arith.addf %133, %134 : vector<256x128xf32>
    %136 = arith.addf %109, %135 : vector<256x128xf32>
    %cst_70 = arith.constant 0.000000e+00 : f32
    %137 = vector.broadcast %cst_70 : f32 to vector<256x128xf32>
    %138 = arith.maximumf %136, %137 : vector<256x128xf32>
    %139 = vector.shape_cast %138 : vector<256x128xf32> to vector<16x16x128xf32>
    %c0_71 = arith.constant 0 : index
    %c0_72 = arith.constant 0 : index
    %c0_73 = arith.constant 0 : index
    %c0_74 = arith.constant 0 : index
    %140 = vector.load %arg14[%c0_71, %c0_72, %c0_73, %c0_74] : memref<1x16x16x128xf32, #tpu.memory_space<vmem>>, vector<1x16x16x128xf32>
    %141 = vector.shape_cast %140 : vector<1x16x16x128xf32> to vector<16x16x128xf32>
    %142 = vector.shape_cast %139 : vector<16x16x128xf32> to vector<1x16x16x128xf32>
    tpu.vector_store %arg14[%c0_71, %c0_72, %c0_73, %c0_74], %142 {strides = array<i32>} : memref<1x16x16x128xf32, #tpu.memory_space<vmem>>, vector<1x16x16x128xf32>,
    return
  }
  func.func @transform_0(%arg0: i32) -> (i32, i32, i32, i32) {
    %c0_i32 = arith.constant 0 : i32
    %c0_i32_0 = arith.constant 0 : i32
    %c0_i32_1 = arith.constant 0 : i32
    %c0_i32_2 = arith.constant 0 : i32
    return %arg0, %c0_i32, %c0_i32_0, %c0_i32_1 : i32, i32, i32, i32
  }
  func.func @transform_1(%arg0: i32) -> (i32, i32) {
    %c0_i32 = arith.constant 0 : i32
    %c0_i32_0 = arith.constant 0 : i32
    %c0_i32_1 = arith.constant 0 : i32
    return %c0_i32, %c0_i32_0 : i32, i32
  }
  func.func @transform_2(%arg0: i32) -> (i32, i32) {
    %c0_i32 = arith.constant 0 : i32
    %c0_i32_0 = arith.constant 0 : i32
    %c0_i32_1 = arith.constant 0 : i32
    return %c0_i32, %c0_i32_0 : i32, i32
  }
  func.func @transform_3(%arg0: i32) -> (i32, i32) {
    %c0_i32 = arith.constant 0 : i32
    %c0_i32_0 = arith.constant 0 : i32
    %c0_i32_1 = arith.constant 0 : i32
    return %c0_i32, %c0_i32_0 : i32, i32
  }
  func.func @transform_4(%arg0: i32) -> (i32, i32) {
    %c0_i32 = arith.constant 0 : i32
    %c0_i32_0 = arith.constant 0 : i32
    %c0_i32_1 = arith.constant 0 : i32
    return %c0_i32, %c0_i32_0 : i32, i32
  }
  func.func @transform_5(%arg0: i32) -> (i32, i32) {
    %c0_i32 = arith.constant 0 : i32
    %c0_i32_0 = arith.constant 0 : i32
    %c0_i32_1 = arith.constant 0 : i32
    return %c0_i32, %c0_i32_0 : i32, i32
  }
  func.func @transform_6(%arg0: i32) -> (i32, i32) {
    %c0_i32 = arith.constant 0 : i32
    %c0_i32_0 = arith.constant 0 : i32
    %c0_i32_1 = arith.constant 0 : i32
    return %c0_i32, %c0_i32_0 : i32, i32
  }
  func.func @transform_7(%arg0: i32) -> (i32, i32) {
    %c0_i32 = arith.constant 0 : i32
    %c0_i32_0 = arith.constant 0 : i32
    %c0_i32_1 = arith.constant 0 : i32
    return %c0_i32, %c0_i32_0 : i32, i32
  }
  func.func @transform_8(%arg0: i32) -> (i32, i32) {
    %c0_i32 = arith.constant 0 : i32
    %c0_i32_0 = arith.constant 0 : i32
    %c0_i32_1 = arith.constant 0 : i32
    return %c0_i32, %c0_i32_0 : i32, i32
  }
  func.func @transform_9(%arg0: i32) -> (i32, i32) {
    %c0_i32 = arith.constant 0 : i32
    %c0_i32_0 = arith.constant 0 : i32
    %c0_i32_1 = arith.constant 0 : i32
    return %c0_i32, %c0_i32_0 : i32, i32
  }
  func.func @transform_10(%arg0: i32) -> (i32, i32) {
    %c0_i32 = arith.constant 0 : i32
    %c0_i32_0 = arith.constant 0 : i32
    %c0_i32_1 = arith.constant 0 : i32
    return %c0_i32, %c0_i32_0 : i32, i32
  }
  func.func @transform_11(%arg0: i32) -> (i32, i32) {
    %c0_i32 = arith.constant 0 : i32
    %c0_i32_0 = arith.constant 0 : i32
    %c0_i32_1 = arith.constant 0 : i32
    return %c0_i32, %c0_i32_0 : i32, i32
  }
  func.func @transform_12(%arg0: i32) -> (i32, i32) {
    %c0_i32 = arith.constant 0 : i32
    %c0_i32_0 = arith.constant 0 : i32
    %c0_i32_1 = arith.constant 0 : i32
    return %c0_i32, %c0_i32_0 : i32, i32
  }
  func.func @transform_13(%arg0: i32) -> (i32, i32, i32, i32) {
    %c0_i32 = arith.constant 0 : i32
    %c0_i32_0 = arith.constant 0 : i32
    %c0_i32_1 = arith.constant 0 : i32
    %c0_i32_2 = arith.constant 0 : i32
    return %arg0, %c0_i32, %c0_i32_0, %c0_i32_1 : i32, i32, i32, i32
  }
}

</mosaic_0001>

<llo_original>
// kernel: tpu_custom_call.1
$region0: #{tpu_custom_call.1}
  #allocation0 [shape = 'u32[]', space=smem, size = 0x4, offset = 0x4, fixed_abs, tag = 'smem constant byte address 0x4 - core index']
  #allocation1 [shape = 'u32[144,128]{1,0:T(1,128)}', space=vmem, size = 0x12000, scoped, tag = 'internal scratch']
  #allocation2 [shape = 'f32[18,18,128]{2,1,0:T(8,128)}', space=vmem, size = 0x36000, scoped, tag = 'scratch operand']
  %s0 = inlined_call_operand.hbm [shape: f32[2,16,16,128], index: 0, kind: input, shape index: {}]
  %s1 = inlined_call_operand.hbm [shape: f32[128,128], index: 1, kind: input, shape index: {}]
  %s2 = inlined_call_operand.hbm [shape: f32[1152,128], index: 2, kind: input, shape index: {}]
  %s3 = inlined_call_operand.hbm [shape: f32[128,128], index: 3, kind: input, shape index: {}]
  %s4 = inlined_call_operand.vmem [shape: f32[1,128], index: 4, kind: input, shape index: {}]
  %s5 = inlined_call_operand.vmem [shape: f32[1,128], index: 5, kind: input, shape index: {}]
  %s6 = inlined_call_operand.vmem [shape: f32[1,128], index: 6, kind: input, shape index: {}]
  %s7 = inlined_call_operand.vmem [shape: f32[1,128], index: 7, kind: input, shape index: {}]
  %s8 = inlined_call_operand.vmem [shape: f32[1,128], index: 8, kind: input, shape index: {}]
  %s9 = inlined_call_operand.vmem [shape: f32[1,128], index: 9, kind: input, shape index: {}]
  %s10 = inlined_call_operand.hbm [shape: f32[128,128], index: 10, kind: input, shape index: {}]
  %s11 = inlined_call_operand.vmem [shape: f32[1,128], index: 11, kind: input, shape index: {}]
  %s12 = inlined_call_operand.vmem [shape: f32[1,128], index: 12, kind: input, shape index: {}]
  %s13 = inlined_call_operand.hbm [shape: f32[2,16,16,128], index: 13, kind: output, shape index: {}]
  %s14 = sld [smem:[#allocation0]]
  $region105: #{tpu_custom_call.1} parent=0
    _
  %s16 = ssub.s32 1, %s14
  %s17 = scalar_select 0, %s16, %s14
  $region1: #{tpu_custom_call.1} parent=0
    #allocation3 [shape = 'u8[262144]{0}', space=vmem, size = 0x40000, scoped, tag = 'input window, operand 0']
    #allocation4 [shape = 's32[2]{0}', space=sflag, size = 0x8, scoped, tag = 'scoped memory for tpu_custom_call.1']
    #allocation5 [shape = 's32[2]{0}', space=sflag, size = 0x8, scoped, tag = 'scoped memory for tpu_custom_call.1']
    #allocation6 [shape = 'u8[65536]{0}', space=vmem, size = 0x10000, scoped, tag = 'input window, operand 1, single buffered']
    #allocation7 [shape = 's32[1]{0}', space=sflag, size = 0x4, scoped, tag = 'scoped memory for tpu_custom_call.1']
    #allocation8 [shape = 'u8[589824]{0}', space=vmem, size = 0x90000, scoped, tag = 'input window, operand 2, single buffered']
    #allocation9 [shape = 'u8[65536]{0}', space=vmem, size = 0x10000, scoped, tag = 'input window, operand 3, single buffered']
    #allocation10 [shape = 's32[1]{0}', space=sflag, size = 0x4, scoped, tag = 'scoped memory for tpu_custom_call.1']
    #allocation11 [shape = 'u8[65536]{0}', space=vmem, size = 0x10000, scoped, tag = 'input window, operand 10, single buffered']
    #allocation12 [shape = 'u8[262144]{0}', space=vmem, size = 0x40000, scoped, tag = 'output window, operand 0']
    %18 = vsyncpa [#allocation4], 0
    %s19 = scalar_lea.sflag [#allocation4], 1
    %20 = vsyncpa %s19, 0
    %21 = vsyncpa [#allocation7], 0
    %22 = vsyncpa [#allocation10], 0
    %23 = vsyncpa [#allocation5], 0
    %s24 = scalar_lea.sflag [#allocation5], 1
    %25 = vsyncpa %s24, 0
    loop: start=0, step=1, limit=4
    $region2: #{tpu_custom_call.1} parent=1 // loop_pre_header
      _
    $region3: #{tpu_custom_call.1} parent=1 // loop_header
      %s27 = sphi 0, %s31
      %p28 = scmp.ge.s32.totalorder %s27, 4
      %s37 = sphi 0, %s39
      %s40 = sphi 0, %s37
      %s41 = sphi 0, %s40
      %s57 = sphi 0, %s41
      %s61 = sphi 0, %s61
      %s63 = sphi 0, %s61
      %s64 = sphi 0, %s63
      %s78 = sphi 0, %s64
      %s82 = sphi 0, %s82
      %s84 = sphi 0, %s82
      %s85 = sphi 0, %s84
      %s99 = sphi 0, %s85
      %s103 = sphi 0, %s103
      %s105 = sphi 0, %s103
      %s106 = sphi 0, %s105
      %s120 = sphi 0, %s106
      %s124 = sphi 0, %s124
      %s126 = sphi 0, %s124
      %s127 = sphi 0, %s126
      %s141 = sphi 0, %s127
      %s145 = sphi 0, %s145
      %s147 = sphi 0, %s145
      %s148 = sphi 0, %s147
      %s162 = sphi 0, %s148
      %s166 = sphi 0, %s166
      %s168 = sphi 0, %s166
      %s169 = sphi 0, %s168
      %s183 = sphi 0, %s169
      %s187 = sphi 0, %s187
      %s189 = sphi 0, %s187
      %s190 = sphi 0, %s189
      %s204 = sphi 0, %s190
      %s208 = sphi 0, %s208
      %s210 = sphi 0, %s208
      %s211 = sphi 0, %s210
      %s225 = sphi 0, %s211
      %s229 = sphi 0, %s229
      %s231 = sphi 0, %s229
      %s232 = sphi 0, %s231
      %s246 = sphi 0, %s232
      %s250 = sphi 0, %s250
      %s252 = sphi 0, %s250
      %s253 = sphi 0, %s252
      %s267 = sphi 0, %s253
      %s271 = sphi 0, %s271
      %s273 = sphi 0, %s271
      %s274 = sphi 0, %s273
      %s288 = sphi 0, %s274
      %s292 = sphi 0, %s292
      %s294 = sphi 0, %s292
      %s295 = sphi 0, %s294
      %s309 = sphi 0, %s295
      %s315 = sphi 0, %s317
      %s318 = sphi 0, %s315
      %s319 = sphi 0, %s318
      %s335 = sphi 0, %s319
    $region4: #{tpu_custom_call.1} parent=1 // loop_header_branch
      %30 = sbr.rel (%p28) target = $region8
    $region5: #{tpu_custom_call.1} parent=1 // loop_body
      %s32 = ssub.s32 %s27, 1
      %s33 = ssub.s32 %s27, 2
      %s34 = sadd.s32 %s27, 1
      %s35 = ssub.s32 %s27, %s34
      %p36 = scmp.eq.s32.totalorder %s35, 0
      %s38 = sadd.s32 %s37, 1
      %s39 = scalar_select %p36, %s37, %s38
      %p42 = pneg %p36
      %p43 = scmp.eq.s32.totalorder %s27, 1
      %p44 = por %p42, %p43
      %p45 = scmp.ne.s32.totalorder %s37, %s40
      %p46 = scmp.eq.s32.totalorder %s27, 0
      %p47 = por %p45, %p46
      %p48 = scmp.ne.s32.totalorder %s37, %s40
      %p49 = scmp.eq.s32.totalorder %s32, 1
      %p50 = por %p48, %p49
      %p51 = scmp.ne.s32.totalorder %s40, %s41
      %p52 = scmp.eq.s32.totalorder %s32, 0
      %p53 = por %p51, %p52
      %p54 = scmp.ne.s32.totalorder %s40, %s41
      %p55 = scmp.eq.s32.totalorder %s33, 1
      %p56 = por %p54, %p55
      %p58 = scmp.ne.s32.totalorder %s41, %s57
      %p59 = scmp.eq.s32.totalorder %s33, 0
      %p60 = por %p58, %p59
      %s62 = sadd.s32 %s61, 1
      %p65 = scmp.eq.s32.totalorder %s27, 1
      %p66 = scmp.ne.s32.totalorder %s61, %s63
      %p67 = scmp.eq.s32.totalorder %s27, 0
      %p68 = por %p66, %p67
      %p69 = scmp.ne.s32.totalorder %s61, %s63
      %p70 = scmp.eq.s32.totalorder %s32, 1
      %p71 = por %p69, %p70
      %p72 = scmp.ne.s32.totalorder %s63, %s64
      %p73 = scmp.eq.s32.totalorder %s32, 0
      %p74 = por %p72, %p73
      %p75 = scmp.ne.s32.totalorder %s63, %s64
      %p76 = scmp.eq.s32.totalorder %s33, 1
      %p77 = por %p75, %p76
      %p79 = scmp.ne.s32.totalorder %s64, %s78
      %p80 = scmp.eq.s32.totalorder %s33, 0
      %p81 = por %p79, %p80
      %s83 = sadd.s32 %s82, 1
      %p86 = scmp.eq.s32.totalorder %s27, 1
      %p87 = scmp.ne.s32.totalorder %s82, %s84
      %p88 = scmp.eq.s32.totalorder %s27, 0
      %p89 = por %p87, %p88
      %p90 = scmp.ne.s32.totalorder %s82, %s84
      %p91 = scmp.eq.s32.totalorder %s32, 1
      %p92 = por %p90, %p91
      %p93 = scmp.ne.s32.totalorder %s84, %s85
      %p94 = scmp.eq.s32.totalorder %s32, 0
      %p95 = por %p93, %p94
      %p96 = scmp.ne.s32.totalorder %s84, %s85
      %p97 = scmp.eq.s32.totalorder %s33, 1
      %p98 = por %p96, %p97
      %p100 = scmp.ne.s32.totalorder %s85, %s99
      %p101 = scmp.eq.s32.totalorder %s33, 0
      %p102 = por %p100, %p101
      %s104 = sadd.s32 %s103, 1
      %p107 = scmp.eq.s32.totalorder %s27, 1
      %p108 = scmp.ne.s32.totalorder %s103, %s105
      %p109 = scmp.eq.s32.totalorder %s27, 0
      %p110 = por %p108, %p109
      %p111 = scmp.ne.s32.totalorder %s103, %s105
      %p112 = scmp.eq.s32.totalorder %s32, 1
      %p113 = por %p111, %p112
      %p114 = scmp.ne.s32.totalorder %s105, %s106
      %p115 = scmp.eq.s32.totalorder %s32, 0
      %p116 = por %p114, %p115
      %p117 = scmp.ne.s32.totalorder %s105, %s106
      %p118 = scmp.eq.s32.totalorder %s33, 1
      %p119 = por %p117, %p118
      %p121 = scmp.ne.s32.totalorder %s106, %s120
      %p122 = scmp.eq.s32.totalorder %s33, 0
      %p123 = por %p121, %p122
      %s125 = sadd.s32 %s124, 1
      %p128 = scmp.eq.s32.totalorder %s27, 1
      %p129 = scmp.ne.s32.totalorder %s124, %s126
      %p130 = scmp.eq.s32.totalorder %s27, 0
      %p131 = por %p129, %p130
      %p132 = scmp.ne.s32.totalorder %s124, %s126
      %p133 = scmp.eq.s32.totalorder %s32, 1
      %p134 = por %p132, %p133
      %p135 = scmp.ne.s32.totalorder %s126, %s127
      %p136 = scmp.eq.s32.totalorder %s32, 0
      %p137 = por %p135, %p136
      %p138 = scmp.ne.s32.totalorder %s126, %s127
      %p139 = scmp.eq.s32.totalorder %s33, 1
      %p140 = por %p138, %p139
      %p142 = scmp.ne.s32.totalorder %s127, %s141
      %p143 = scmp.eq.s32.totalorder %s33, 0
      %p144 = por %p142, %p143
      %s146 = sadd.s32 %s145, 1
      %p149 = scmp.eq.s32.totalorder %s27, 1
      %p150 = scmp.ne.s32.totalorder %s145, %s147
      %p151 = scmp.eq.s32.totalorder %s27, 0
      %p152 = por %p150, %p151
      %p153 = scmp.ne.s32.totalorder %s145, %s147
      %p154 = scmp.eq.s32.totalorder %s32, 1
      %p155 = por %p153, %p154
      %p156 = scmp.ne.s32.totalorder %s147, %s148
      %p157 = scmp.eq.s32.totalorder %s32, 0
      %p158 = por %p156, %p157
      %p159 = scmp.ne.s32.totalorder %s147, %s148
      %p160 = scmp.eq.s32.totalorder %s33, 1
      %p161 = por %p159, %p160
      %p163 = scmp.ne.s32.totalorder %s148, %s162
      %p164 = scmp.eq.s32.totalorder %s33, 0
      %p165 = por %p163, %p164
      %s167 = sadd.s32 %s166, 1
      %p170 = scmp.eq.s32.totalorder %s27, 1
      %p171 = scmp.ne.s32.totalorder %s166, %s168
      %p172 = scmp.eq.s32.totalorder %s27, 0
      %p173 = por %p171, %p172
      %p174 = scmp.ne.s32.totalorder %s166, %s168
      %p175 = scmp.eq.s32.totalorder %s32, 1
      %p176 = por %p174, %p175
      %p177 = scmp.ne.s32.totalorder %s168, %s169
      %p178 = scmp.eq.s32.totalorder %s32, 0
      %p179 = por %p177, %p178
      %p180 = scmp.ne.s32.totalorder %s168, %s169
      %p181 = scmp.eq.s32.totalorder %s33, 1
      %p182 = por %p180, %p181
      %p184 = scmp.ne.s32.totalorder %s169, %s183
      %p185 = scmp.eq.s32.totalorder %s33, 0
      %p186 = por %p184, %p185
      %s188 = sadd.s32 %s187, 1
      %p191 = scmp.eq.s32.totalorder %s27, 1
      %p192 = scmp.ne.s32.totalorder %s187, %s189
      %p193 = scmp.eq.s32.totalorder %s27, 0
      %p194 = por %p192, %p193
      %p195 = scmp.ne.s32.totalorder %s187, %s189
      %p196 = scmp.eq.s32.totalorder %s32, 1
      %p197 = por %p195, %p196
      %p198 = scmp.ne.s32.totalorder %s189, %s190
      %p199 = scmp.eq.s32.totalorder %s32, 0
      %p200 = por %p198, %p199
      %p201 = scmp.ne.s32.totalorder %s189, %s190
      %p202 = scmp.eq.s32.totalorder %s33, 1
      %p203 = por %p201, %p202
      %p205 = scmp.ne.s32.totalorder %s190, %s204
      %p206 = scmp.eq.s32.totalorder %s33, 0
      %p207 = por %p205, %p206
      %s209 = sadd.s32 %s208, 1
      %p212 = scmp.eq.s32.totalorder %s27, 1
      %p213 = scmp.ne.s32.totalorder %s208, %s210
      %p214 = scmp.eq.s32.totalorder %s27, 0
      %p215 = por %p213, %p214
      %p216 = scmp.ne.s32.totalorder %s208, %s210
      %p217 = scmp.eq.s32.totalorder %s32, 1
      %p218 = por %p216, %p217
      %p219 = scmp.ne.s32.totalorder %s210, %s211
      %p220 = scmp.eq.s32.totalorder %s32, 0
      %p221 = por %p219, %p220
      %p222 = scmp.ne.s32.totalorder %s210, %s211
      %p223 = scmp.eq.s32.totalorder %s33, 1
      %p224 = por %p222, %p223
      %p226 = scmp.ne.s32.totalorder %s211, %s225
      %p227 = scmp.eq.s32.totalorder %s33, 0
      %p228 = por %p226, %p227
      %s230 = sadd.s32 %s229, 1
      %p233 = scmp.eq.s32.totalorder %s27, 1
      %p234 = scmp.ne.s32.totalorder %s229, %s231
      %p235 = scmp.eq.s32.totalorder %s27, 0
      %p236 = por %p234, %p235
      %p237 = scmp.ne.s32.totalorder %s229, %s231
      %p238 = scmp.eq.s32.totalorder %s32, 1
      %p239 = por %p237, %p238
      %p240 = scmp.ne.s32.totalorder %s231, %s232
      %p241 = scmp.eq.s32.totalorder %s32, 0
      %p242 = por %p240, %p241
      %p243 = scmp.ne.s32.totalorder %s231, %s232
      %p244 = scmp.eq.s32.totalorder %s33, 1
      %p245 = por %p243, %p244
      %p247 = scmp.ne.s32.totalorder %s232, %s246
      %p248 = scmp.eq.s32.totalorder %s33, 0
      %p249 = por %p247, %p248
      %s251 = sadd.s32 %s250, 1
      %p254 = scmp.eq.s32.totalorder %s27, 1
      %p255 = scmp.ne.s32.totalorder %s250, %s252
      %p256 = scmp.eq.s32.totalorder %s27, 0
      %p257 = por %p255, %p256
      %p258 = scmp.ne.s32.totalorder %s250, %s252
      %p259 = scmp.eq.s32.totalorder %s32, 1
      %p260 = por %p258, %p259
      %p261 = scmp.ne.s32.totalorder %s252, %s253
      %p262 = scmp.eq.s32.totalorder %s32, 0
      %p263 = por %p261, %p262
      %p264 = scmp.ne.s32.totalorder %s252, %s253
      %p265 = scmp.eq.s32.totalorder %s33, 1
      %p266 = por %p264, %p265
      %p268 = scmp.ne.s32.totalorder %s253, %s267
      %p269 = scmp.eq.s32.totalorder %s33, 0
      %p270 = por %p268, %p269
      %s272 = sadd.s32 %s271, 1
      %p275 = scmp.eq.s32.totalorder %s27, 1
      %p276 = scmp.ne.s32.totalorder %s271, %s273
      %p277 = scmp.eq.s32.totalorder %s27, 0
      %p278 = por %p276, %p277
      %p279 = scmp.ne.s32.totalorder %s271, %s273
      %p280 = scmp.eq.s32.totalorder %s32, 1
      %p281 = por %p279, %p280
      %p282 = scmp.ne.s32.totalorder %s273, %s274
      %p283 = scmp.eq.s32.totalorder %s32, 0
      %p284 = por %p282, %p283
      %p285 = scmp.ne.s32.totalorder %s273, %s274
      %p286 = scmp.eq.s32.totalorder %s33, 1
      %p287 = por %p285, %p286
      %p289 = scmp.ne.s32.totalorder %s274, %s288
      %p290 = scmp.eq.s32.totalorder %s33, 0
      %p291 = por %p289, %p290
      %s293 = sadd.s32 %s292, 1
      %p296 = scmp.eq.s32.totalorder %s27, 1
      %p297 = scmp.ne.s32.totalorder %s292, %s294
      %p298 = scmp.eq.s32.totalorder %s27, 0
      %p299 = por %p297, %p298
      %p300 = scmp.ne.s32.totalorder %s292, %s294
      %p301 = scmp.eq.s32.totalorder %s32, 1
      %p302 = por %p300, %p301
      %p303 = scmp.ne.s32.totalorder %s294, %s295
      %p304 = scmp.eq.s32.totalorder %s32, 0
      %p305 = por %p303, %p304
      %p306 = scmp.ne.s32.totalorder %s294, %s295
      %p307 = scmp.eq.s32.totalorder %s33, 1
      %p308 = por %p306, %p307
      %p310 = scmp.ne.s32.totalorder %s295, %s309
      %p311 = scmp.eq.s32.totalorder %s33, 0
      %p312 = por %p310, %p311
      %s313 = ssub.s32 %s27, %s34
      %p314 = scmp.eq.s32.totalorder %s313, 0
      %s316 = sadd.s32 %s315, 1
      %s317 = scalar_select %p314, %s315, %s316
      %p320 = pneg %p314
      %p321 = scmp.eq.s32.totalorder %s27, 1
      %p322 = por %p320, %p321
      %p323 = scmp.ne.s32.totalorder %s315, %s318
      %p324 = scmp.eq.s32.totalorder %s27, 0
      %p325 = por %p323, %p324
      %p326 = scmp.ne.s32.totalorder %s315, %s318
      %p327 = scmp.eq.s32.totalorder %s32, 1
      %p328 = por %p326, %p327
      %p329 = scmp.ne.s32.totalorder %s318, %s319
      %p330 = scmp.eq.s32.totalorder %s32, 0
      %p331 = por %p329, %p330
      %p332 = scmp.ne.s32.totalorder %s318, %s319
      %p333 = scmp.eq.s32.totalorder %s33, 1
      %p334 = por %p332, %p333
      %p336 = scmp.ne.s32.totalorder %s319, %s335
      %p337 = scmp.eq.s32.totalorder %s33, 0
      %p338 = por %p336, %p337
      %p339 = scmp.le.s32.totalorder 1, %s27
      %p340 = scmp.lt.s32.totalorder %s27, 3
      %p341 = pnand %p339, %p340
      %p342 = pneg %p341
      // Predicated region
      $region9: #{tpu_custom_call.1} parent=5 // pred_check
        _
      $region10: #{tpu_custom_call.1} parent=5 // pred_check_branch
        %344 = sbr.rel (%p341) target = $region12
      $region11: #{tpu_custom_call.1} parent=5 // pred_region
        %s345 = ssub.s32 %s27, 1
        // Predicated region
        $region13: #{tpu_custom_call.1} parent=11 // pred_check
          %p346 = pneg %p74
        $region14: #{tpu_custom_call.1} parent=11 // pred_check_branch
          %348 = sbr.rel (%p346) target = $region16
        $region15: #{tpu_custom_call.1} parent=11 // pred_region
          %s350 = ssub.s32 2048, 2048
          %351 = vsyncadd [#allocation7], %s350
          %s352 = sshll.u32 [#allocation6], 4
          %s353 = int_to_ptr.vmem [resolvable:$true] %s352
          %358 = dma.hbm_to_vmem [thread:$0]  %s1, 2048, %s353, [#allocation7], 128, 128, 8
        $region16: #{tpu_custom_call.1} parent=11 // pred_fallthru
          _
        // Predicated region
        $region17: #{tpu_custom_call.1} parent=11 // pred_check
          %p359 = pneg %p95
        $region18: #{tpu_custom_call.1} parent=11 // pred_check_branch
          %361 = sbr.rel (%p359) target = $region20
        $region19: #{tpu_custom_call.1} parent=11 // pred_region
          %s363 = ssub.s32 18432, 18432
          %364 = vsyncadd [#allocation7], %s363
          %s365 = sshll.u32 [#allocation8], 4
          %s366 = int_to_ptr.vmem [resolvable:$true] %s365
          %371 = dma.hbm_to_vmem [thread:$0]  %s2, 18432, %s366, [#allocation7], 128, 128, 8
        $region20: #{tpu_custom_call.1} parent=11 // pred_fallthru
          _
        // Predicated region
        $region21: #{tpu_custom_call.1} parent=11 // pred_check
          %p372 = pneg %p116
        $region22: #{tpu_custom_call.1} parent=11 // pred_check_branch
          %374 = sbr.rel (%p372) target = $region24
        $region23: #{tpu_custom_call.1} parent=11 // pred_region
          %s376 = ssub.s32 2048, 2048
          %377 = vsyncadd [#allocation10], %s376
          %s378 = sshll.u32 [#allocation9], 4
          %s379 = int_to_ptr.vmem [resolvable:$true] %s378
          %384 = dma.hbm_to_vmem [thread:$0]  %s3, 2048, %s379, [#allocation10], 128, 128, 8
        $region24: #{tpu_custom_call.1} parent=11 // pred_fallthru
          _
        // Predicated region
        $region25: #{tpu_custom_call.1} parent=11 // pred_check
          %p385 = pneg %p137
        $region26: #{tpu_custom_call.1} parent=11 // pred_check_branch
          %387 = sbr.rel (%p385) target = $region28
        $region27: #{tpu_custom_call.1} parent=11 // pred_region
          _
        $region28: #{tpu_custom_call.1} parent=11 // pred_fallthru
          _
        // Predicated region
        $region29: #{tpu_custom_call.1} parent=11 // pred_check
          %p388 = pneg %p158
        $region30: #{tpu_custom_call.1} parent=11 // pred_check_branch
          %390 = sbr.rel (%p388) target = $region32
        $region31: #{tpu_custom_call.1} parent=11 // pred_region
          _
        $region32: #{tpu_custom_call.1} parent=11 // pred_fallthru
          _
        // Predicated region
        $region33: #{tpu_custom_call.1} parent=11 // pred_check
          %p391 = pneg %p179
        $region34: #{tpu_custom_call.1} parent=11 // pred_check_branch
          %393 = sbr.rel (%p391) target = $region36
        $region35: #{tpu_custom_call.1} parent=11 // pred_region
          _
        $region36: #{tpu_custom_call.1} parent=11 // pred_fallthru
          _
        // Predicated region
        $region37: #{tpu_custom_call.1} parent=11 // pred_check
          %p394 = pneg %p200
        $region38: #{tpu_custom_call.1} parent=11 // pred_check_branch
          %396 = sbr.rel (%p394) target = $region40
        $region39: #{tpu_custom_call.1} parent=11 // pred_region
          _
        $region40: #{tpu_custom_call.1} parent=11 // pred_fallthru
          _
        // Predicated region
        $region41: #{tpu_custom_call.1} parent=11 // pred_check
          %p397 = pneg %p221
        $region42: #{tpu_custom_call.1} parent=11 // pred_check_branch
          %399 = sbr.rel (%p397) target = $region44
        $region43: #{tpu_custom_call.1} parent=11 // pred_region
          _
        $region44: #{tpu_custom_call.1} parent=11 // pred_fallthru
          _
        // Predicated region
        $region45: #{tpu_custom_call.1} parent=11 // pred_check
          %p400 = pneg %p242
        $region46: #{tpu_custom_call.1} parent=11 // pred_check_branch
          %402 = sbr.rel (%p400) target = $region48
        $region47: #{tpu_custom_call.1} parent=11 // pred_region
          _
        $region48: #{tpu_custom_call.1} parent=11 // pred_fallthru
          _
        // Predicated region
        $region49: #{tpu_custom_call.1} parent=11 // pred_check
          %p403 = pneg %p263
        $region50: #{tpu_custom_call.1} parent=11 // pred_check_branch
          %405 = sbr.rel (%p403) target = $region52
        $region51: #{tpu_custom_call.1} parent=11 // pred_region
          %s407 = ssub.s32 2048, 2048
          %408 = vsyncadd [#allocation10], %s407
          %s409 = sshll.u32 [#allocation11], 4
          %s410 = int_to_ptr.vmem [resolvable:$true] %s409
          %415 = dma.hbm_to_vmem [thread:$0]  %s10, 2048, %s410, [#allocation10], 128, 128, 8
        $region52: #{tpu_custom_call.1} parent=11 // pred_fallthru
          _
        // Predicated region
        $region53: #{tpu_custom_call.1} parent=11 // pred_check
          %p416 = pneg %p284
        $region54: #{tpu_custom_call.1} parent=11 // pred_check_branch
          %418 = sbr.rel (%p416) target = $region56
        $region55: #{tpu_custom_call.1} parent=11 // pred_region
          _
        $region56: #{tpu_custom_call.1} parent=11 // pred_fallthru
          _
        // Predicated region
        $region57: #{tpu_custom_call.1} parent=11 // pred_check
          %p419 = pneg %p305
        $region58: #{tpu_custom_call.1} parent=11 // pred_check_branch
          %421 = sbr.rel (%p419) target = $region60
        $region59: #{tpu_custom_call.1} parent=11 // pred_region
          _
        $region60: #{tpu_custom_call.1} parent=11 // pred_fallthru
          _
      $region12: #{tpu_custom_call.1} parent=5 // pred_fallthru
        _
      %p422 = scmp.lt.s32.totalorder %s27, 2
      // Predicated region
      $region61: #{tpu_custom_call.1} parent=5 // pred_check
        %p423 = pneg %p422
      $region62: #{tpu_custom_call.1} parent=5 // pred_check_branch
        %425 = sbr.rel (%p423) target = $region64
      $region63: #{tpu_custom_call.1} parent=5 // pred_region
        // Predicated region
        $region65: #{tpu_custom_call.1} parent=63 // pred_check
          %p426 = pneg %p47
        $region66: #{tpu_custom_call.1} parent=63 // pred_check_branch
          %428 = sbr.rel (%p426) target = $region68
        $region67: #{tpu_custom_call.1} parent=63 // pred_region
          %s429 = sand.u32 %s37, 1
          %s430 = scalar_lea.sflag [#allocation4], %s429
          %s431 = sand.u32 %s37, 1
          %s432 = smul.addr %s431, 256
          %s433 = scalar_lea.vmem [#allocation3], %s432
          %s435 = ssub.s32 4096, 4096
          %436 = vsyncadd %s430, %s435
          %s437 = smul.addr %s27, 32
          %s438 = smul.addr %s437, 128
          %s439 = scalar_lea.hbm %s0, %s438
          %s440 = sshll.u32 %s433, 4
          %s441 = int_to_ptr.vmem [resolvable:$true] %s440
          %446 = dma.hbm_to_vmem [thread:$0]  %s439, 4096, %s441, %s430, 128, 128, 8
        $region68: #{tpu_custom_call.1} parent=63 // pred_fallthru
          _
      $region64: #{tpu_custom_call.1} parent=5 // pred_fallthru
        _
      %p447 = scmp.le.s32.totalorder 1, %s27
      %p448 = scmp.lt.s32.totalorder %s27, 3
      %p449 = pnand %p447, %p448
      %p450 = pneg %p449
      // Predicated region
      $region69: #{tpu_custom_call.1} parent=5 // pred_check
        _
      $region70: #{tpu_custom_call.1} parent=5 // pred_check_branch
        %452 = sbr.rel (%p449) target = $region72
      $region71: #{tpu_custom_call.1} parent=5 // pred_region
        %s453 = ssub.s32 %s27, 1
        %s454 = sand.u32 %s40, 1
        %s455 = scalar_lea.sflag [#allocation4], %s454
        %s456 = sand.u32 %s40, 1
        %s457 = smul.addr %s456, 256
        %s458 = scalar_lea.vmem [#allocation3], %s457
        // Predicated region
        $region73: #{tpu_custom_call.1} parent=71 // pred_check
          %p459 = pneg %p53
        $region74: #{tpu_custom_call.1} parent=71 // pred_check_branch
          %461 = sbr.rel (%p459) target = $region76
        $region75: #{tpu_custom_call.1} parent=71 // pred_region
          %462 = dma.done %s455, 4096
        $region76: #{tpu_custom_call.1} parent=71 // pred_fallthru
          _
        // Predicated region
        $region77: #{tpu_custom_call.1} parent=71 // pred_check
          %p463 = pneg %p74
        $region78: #{tpu_custom_call.1} parent=71 // pred_check_branch
          %465 = sbr.rel (%p463) target = $region80
        $region79: #{tpu_custom_call.1} parent=71 // pred_region
          %466 = dma.done [#allocation7], 2048
        $region80: #{tpu_custom_call.1} parent=71 // pred_fallthru
          _
        // Predicated region
        $region81: #{tpu_custom_call.1} parent=71 // pred_check
          %p467 = pneg %p95
        $region82: #{tpu_custom_call.1} parent=71 // pred_check_branch
          %469 = sbr.rel (%p467) target = $region84
        $region83: #{tpu_custom_call.1} parent=71 // pred_region
          %470 = dma.done [#allocation7], 18432
        $region84: #{tpu_custom_call.1} parent=71 // pred_fallthru
          _
        // Predicated region
        $region85: #{tpu_custom_call.1} parent=71 // pred_check
          %p471 = pneg %p116
        $region86: #{tpu_custom_call.1} parent=71 // pred_check_branch
          %473 = sbr.rel (%p471) target = $region88
        $region87: #{tpu_custom_call.1} parent=71 // pred_region
          %474 = dma.done [#allocation10], 2048
        $region88: #{tpu_custom_call.1} parent=71 // pred_fallthru
          _
        // Predicated region
        $region89: #{tpu_custom_call.1} parent=71 // pred_check
          %p475 = pneg %p263
        $region90: #{tpu_custom_call.1} parent=71 // pred_check_branch
          %477 = sbr.rel (%p475) target = $region92
        $region91: #{tpu_custom_call.1} parent=71 // pred_region
          %478 = dma.done [#allocation10], 2048
        $region92: #{tpu_custom_call.1} parent=71 // pred_fallthru
          _
        %s479 = sand.u32 %s40, 1
        %s480 = scalar_lea.sflag [#allocation4], %s479
        %s481 = sand.u32 %s40, 1
        %s482 = smul.addr %s481, 256
        %s483 = scalar_lea.vmem [#allocation3], %s482
        %p484 = pneg %p53
        %p485 = pneg %p50
        %p486 = pneg %p74
        %p487 = pneg %p71
        %p488 = pneg %p95
        %p489 = pneg %p92
        %p490 = pneg %p116
        %p491 = pneg %p113
        %p492 = pneg %p137
        %p493 = pneg %p134
        %p494 = pneg %p158
        %p495 = pneg %p155
        %p496 = pneg %p179
        %p497 = pneg %p176
        %p498 = pneg %p200
        %p499 = pneg %p197
        %p500 = pneg %p221
        %p501 = pneg %p218
        %p502 = pneg %p242
        %p503 = pneg %p239
        %p504 = pneg %p263
        %p505 = pneg %p260
        %p506 = pneg %p284
        %p507 = pneg %p281
        %p508 = pneg %p305
        %p509 = pneg %p302
        %p510 = pneg %p331
        %p511 = pneg %p328
        %s512 = sand.u32 %s318, 1
        %s513 = scalar_lea.sflag [#allocation5], %s512
        %s514 = sand.u32 %s318, 1
        %s515 = smul.addr %s514, 256
        %s516 = scalar_lea.vmem [#allocation12], %s515
        %v517 = vld [vmem:[%s458] sm:$0xff]
        %v518 = vld [vmem:[%s458 + $0x8] sm:$0xff]
        %v519 = vld [vmem:[%s458 + $0x10] sm:$0xff]
        %v520 = vld [vmem:[%s458 + $0x18] sm:$0xff]
        %v521 = vld [vmem:[%s458 + $0x20] sm:$0xff]
        %v522 = vld [vmem:[%s458 + $0x28] sm:$0xff]
        %v523 = vld [vmem:[%s458 + $0x30] sm:$0xff]
        %v524 = vld [vmem:[%s458 + $0x38] sm:$0xff]
        %v525 = vld [vmem:[%s458 + $0x40] sm:$0xff]
        %v526 = vld [vmem:[%s458 + $0x48] sm:$0xff]
        %v527 = vld [vmem:[%s458 + $0x50] sm:$0xff]
        %v528 = vld [vmem:[%s458 + $0x58] sm:$0xff]
        %v529 = vld [vmem:[%s458 + $0x60] sm:$0xff]
        %v530 = vld [vmem:[%s458 + $0x68] sm:$0xff]
        %v531 = vld [vmem:[%s458 + $0x70] sm:$0xff]
        %v532 = vld [vmem:[%s458 + $0x78] sm:$0xff]
        %v533 = vld [vmem:[%s458 + $0x80] sm:$0xff]
        %v534 = vld [vmem:[%s458 + $0x88] sm:$0xff]
        %v535 = vld [vmem:[%s458 + $0x90] sm:$0xff]
        %v536 = vld [vmem:[%s458 + $0x98] sm:$0xff]
        %v537 = vld [vmem:[%s458 + $0xa0] sm:$0xff]
        %v538 = vld [vmem:[%s458 + $0xa8] sm:$0xff]
        %v539 = vld [vmem:[%s458 + $0xb0] sm:$0xff]
        %v540 = vld [vmem:[%s458 + $0xb8] sm:$0xff]
        %v541 = vld [vmem:[%s458 + $0xc0] sm:$0xff]
        %v542 = vld [vmem:[%s458 + $0xc8] sm:$0xff]
        %v543 = vld [vmem:[%s458 + $0xd0] sm:$0xff]
        %v544 = vld [vmem:[%s458 + $0xd8] sm:$0xff]
        %v545 = vld [vmem:[%s458 + $0xe0] sm:$0xff]
        %v546 = vld [vmem:[%s458 + $0xe8] sm:$0xff]
        %v547 = vld [vmem:[%s458 + $0xf0] sm:$0xff]
        %v548 = vld [vmem:[%s458 + $0xf8] sm:$0xff]
        %v549 = vld [vmem:[#allocation6] sm:$0xff]
        %v550 = vld [vmem:[#allocation6 + $0x8] sm:$0xff]
        %v551 = vld [vmem:[#allocation6 + $0x10] sm:$0xff]
        %v552 = vld [vmem:[#allocation6 + $0x18] sm:$0xff]
        %v553 = vld [vmem:[#allocation6 + $0x20] sm:$0xff]
        %v554 = vld [vmem:[#allocation6 + $0x28] sm:$0xff]
        %v555 = vld [vmem:[#allocation6 + $0x30] sm:$0xff]
        %v556 = vld [vmem:[#allocation6 + $0x38] sm:$0xff]
        %v557 = vld [vmem:[#allocation6 + $0x40] sm:$0xff]
        %v558 = vld [vmem:[#allocation6 + $0x48] sm:$0xff]
        %v559 = vld [vmem:[#allocation6 + $0x50] sm:$0xff]
        %v560 = vld [vmem:[#allocation6 + $0x58] sm:$0xff]
        %v561 = vld [vmem:[#allocation6 + $0x60] sm:$0xff]
        %v562 = vld [vmem:[#allocation6 + $0x68] sm:$0xff]
        %v563 = vld [vmem:[#allocation6 + $0x70] sm:$0xff]
        %v564 = vld [vmem:[#allocation6 + $0x78] sm:$0xff]
        %565 = vmatprep.subr.mxu0 0.0
        %566 = vmatpush1.msra.mxu0 %v549
        %567 = vmatprep.subr.mxu0 0.0
        %568 = vmatpush1.msra.mxu0 %v550
        %569 = vmatprep.subr.mxu0 0.0
        %570 = vmatpush1.msra.mxu0 %v551
        %571 = vmatprep.subr.mxu0 0.0
        %572 = vmatpush1.msra.mxu0 %v552
        %573 = vmatprep.subr.mxu0 0.0
        %574 = vmatpush1.msra.mxu0 %v553
        %575 = vmatprep.subr.mxu0 0.0
        %576 = vmatpush1.msra.mxu0 %v554
        %577 = vmatprep.subr.mxu0 0.0
        %578 = vmatpush1.msra.mxu0 %v555
        %579 = vmatprep.subr.mxu0 0.0
        %580 = vmatpush1.msra.mxu0 %v556
        %581 = vmatprep.subr.mxu0 0.0
        %582 = vmatpush1.msra.mxu0 %v557
        %583 = vmatprep.subr.mxu0 0.0
        %584 = vmatpush1.msra.mxu0 %v558
        %585 = vmatprep.subr.mxu0 0.0
        %586 = vmatpush1.msra.mxu0 %v559
        %587 = vmatprep.subr.mxu0 0.0
        %588 = vmatpush1.msra.mxu0 %v560
        %589 = vmatprep.subr.mxu0 0.0
        %590 = vmatpush1.msra.mxu0 %v561
        %591 = vmatprep.subr.mxu0 0.0
        %592 = vmatpush1.msra.mxu0 %v562
        %593 = vmatprep.subr.mxu0 0.0
        %594 = vmatpush1.msra.mxu0 %v563
        %595 = vmatprep.subr.mxu0 0.0
        %596 = vmatpush1.msra.mxu0 %v564
        %597 = vmatprep.subr.mxu0 0.0
        %598 = vmatpush1.msra.mxu0 0.0
        %599 = vmatprep.subr.mxu0 0.0
        %600 = vmatpush1.msra.mxu0 0.0
        %601 = vmatprep.subr.mxu0 0.0
        %602 = vmatpush1.msra.mxu0 0.0
        %603 = vmatprep.subr.mxu0 0.0
        %604 = vmatpush1.msra.mxu0 0.0
        %605 = vmatprep.subr.mxu0 0.0
        %606 = vmatpush1.msra.mxu0 0.0
        %607 = vmatprep.subr.mxu0 0.0
        %608 = vmatpush1.msra.mxu0 0.0
        %609 = vmatprep.subr.mxu0 0.0
        %610 = vmatpush1.msra.mxu0 0.0
        %611 = vmatprep.subr.mxu0 0.0
        %612 = vmatpush1.msra.mxu0 0.0
        %613 = vmatprep.subr.mxu0 0.0
        %614 = vmatpush1.msra.mxu0 0.0
        %615 = vmatprep.subr.mxu0 0.0
        %616 = vmatpush1.msra.mxu0 0.0
        %617 = vmatprep.subr.mxu0 0.0
        %618 = vmatpush1.msra.mxu0 0.0
        %619 = vmatprep.subr.mxu0 0.0
        %620 = vmatpush1.msra.mxu0 0.0
        %621 = vmatprep.subr.mxu0 0.0
        %622 = vmatpush1.msra.mxu0 0.0
        %623 = vmatprep.subr.mxu0 0.0
        %624 = vmatpush1.msra.mxu0 0.0
        %625 = vmatprep.subr.mxu0 0.0
        %626 = vmatpush1.msra.mxu0 0.0
        %627 = vmatprep.subr.mxu0 0.0
        %628 = vmatpush1.msra.mxu0 0.0
        %629 = vmatprep.mubr.f32.mxu0 0.0
        %630 = vmatmul.mubr.f32.gmra.mrb[0].mxu0 %v517
        %v631 = vpop.f32.mrb[0].mxu0
        %v632 = vadd.f32 0.0, %v631
        %v633 = vpop.f32.mrb[0].mxu0
        %634 = vmatprep.mubr.f32.mxu0 0.0
        %635 = vmatmul.mubr.f32.gmra.mrb[0].mxu0 %v518
        %v636 = vpop.f32.mrb[0].mxu0
        %v637 = vadd.f32 0.0, %v636
        %v638 = vpop.f32.mrb[0].mxu0
        %639 = vmatprep.mubr.f32.mxu0 0.0
        %640 = vmatmul.mubr.f32.gmra.mrb[0].mxu0 %v519
        %v641 = vpop.f32.mrb[0].mxu0
        %v642 = vadd.f32 0.0, %v641
        %v643 = vpop.f32.mrb[0].mxu0
        %644 = vmatprep.mubr.f32.mxu0 0.0
        %645 = vmatmul.mubr.f32.gmra.mrb[0].mxu0 %v520
        %v646 = vpop.f32.mrb[0].mxu0
        %v647 = vadd.f32 0.0, %v646
        %v648 = vpop.f32.mrb[0].mxu0
        %649 = vmatprep.mubr.f32.mxu0 0.0
        %650 = vmatmul.mubr.f32.gmra.mrb[0].mxu0 %v521
        %v651 = vpop.f32.mrb[0].mxu0
        %v652 = vadd.f32 0.0, %v651
        %v653 = vpop.f32.mrb[0].mxu0
        %654 = vmatprep.mubr.f32.mxu0 0.0
        %655 = vmatmul.mubr.f32.gmra.mrb[0].mxu0 %v522
        %v656 = vpop.f32.mrb[0].mxu0
        %v657 = vadd.f32 0.0, %v656
        %v658 = vpop.f32.mrb[0].mxu0
        %659 = vmatprep.mubr.f32.mxu0 0.0
        %660 = vmatmul.mubr.f32.gmra.mrb[0].mxu0 %v523
        %v661 = vpop.f32.mrb[0].mxu0
        %v662 = vadd.f32 0.0, %v661
        %v663 = vpop.f32.mrb[0].mxu0
        %664 = vmatprep.mubr.f32.mxu0 0.0
        %665 = vmatmul.mubr.f32.gmra.mrb[0].mxu0 %v524
        %v666 = vpop.f32.mrb[0].mxu0
        %v667 = vadd.f32 0.0, %v666
        %v668 = vpop.f32.mrb[0].mxu0
        %669 = vmatprep.mubr.f32.mxu0 0.0
        %670 = vmatmul.mubr.f32.gmra.mrb[0].mxu0 %v525
        %v671 = vpop.f32.mrb[0].mxu0
        %v672 = vadd.f32 0.0, %v671
        %v673 = vpop.f32.mrb[0].mxu0
        %674 = vmatprep.mubr.f32.mxu0 0.0
        %675 = vmatmul.mubr.f32.gmra.mrb[0].mxu0 %v526
        %v676 = vpop.f32.mrb[0].mxu0
        %v677 = vadd.f32 0.0, %v676
        %v678 = vpop.f32.mrb[0].mxu0
        %679 = vmatprep.mubr.f32.mxu0 0.0
        %680 = vmatmul.mubr.f32.gmra.mrb[0].mxu0 %v527
        %v681 = vpop.f32.mrb[0].mxu0
        %v682 = vadd.f32 0.0, %v681
        %v683 = vpop.f32.mrb[0].mxu0
        %684 = vmatprep.mubr.f32.mxu0 0.0
        %685 = vmatmul.mubr.f32.gmra.mrb[0].mxu0 %v528
        %v686 = vpop.f32.mrb[0].mxu0
        %v687 = vadd.f32 0.0, %v686
        %v688 = vpop.f32.mrb[0].mxu0
        %689 = vmatprep.mubr.f32.mxu0 0.0
        %690 = vmatmul.mubr.f32.gmra.mrb[0].mxu0 %v529
        %v691 = vpop.f32.mrb[0].mxu0
        %v692 = vadd.f32 0.0, %v691
        %v693 = vpop.f32.mrb[0].mxu0
        %694 = vmatprep.mubr.f32.mxu0 0.0
        %695 = vmatmul.mubr.f32.gmra.mrb[0].mxu0 %v530
        %v696 = vpop.f32.mrb[0].mxu0
        %v697 = vadd.f32 0.0, %v696
        %v698 = vpop.f32.mrb[0].mxu0
        %699 = vmatprep.mubr.f32.mxu0 0.0
        %700 = vmatmul.mubr.f32.gmra.mrb[0].mxu0 %v531
        %v701 = vpop.f32.mrb[0].mxu0
        %v702 = vadd.f32 0.0, %v701
        %v703 = vpop.f32.mrb[0].mxu0
        %704 = vmatprep.mubr.f32.mxu0 0.0
        %705 = vmatmul.mubr.f32.gmra.mrb[0].mxu0 %v532
        %v706 = vpop.f32.mrb[0].mxu0
        %v707 = vadd.f32 0.0, %v706
        %v708 = vpop.f32.mrb[0].mxu0
        %709 = vmatprep.mubr.f32.mxu0 0.0
        %710 = vmatmul.mubr.f32.gmra.mrb[0].mxu0 %v533
        %v711 = vpop.f32.mrb[0].mxu0
        %v712 = vadd.f32 0.0, %v711
        %v713 = vpop.f32.mrb[0].mxu0
        %714 = vmatprep.mubr.f32.mxu0 0.0
        %715 = vmatmul.mubr.f32.gmra.mrb[0].mxu0 %v534
        %v716 = vpop.f32.mrb[0].mxu0
        %v717 = vadd.f32 0.0, %v716
        %v718 = vpop.f32.mrb[0].mxu0
        %719 = vmatprep.mubr.f32.mxu0 0.0
        %720 = vmatmul.mubr.f32.gmra.mrb[0].mxu0 %v535
        %v721 = vpop.f32.mrb[0].mxu0
        %v722 = vadd.f32 0.0, %v721
        %v723 = vpop.f32.mrb[0].mxu0
        %724 = vmatprep.mubr.f32.mxu0 0.0
        %725 = vmatmul.mubr.f32.gmra.mrb[0].mxu0 %v536
        %v726 = vpop.f32.mrb[0].mxu0
        %v727 = vadd.f32 0.0, %v726
        %v728 = vpop.f32.mrb[0].mxu0
        %729 = vmatprep.mubr.f32.mxu0 0.0
        %730 = vmatmul.mubr.f32.gmra.mrb[0].mxu0 %v537
        %v731 = vpop.f32.mrb[0].mxu0
        %v732 = vadd.f32 0.0, %v731
        %v733 = vpop.f32.mrb[0].mxu0
        %734 = vmatprep.mubr.f32.mxu0 0.0
        %735 = vmatmul.mubr.f32.gmra.mrb[0].mxu0 %v538
        %v736 = vpop.f32.mrb[0].mxu0
        %v737 = vadd.f32 0.0, %v736
        %v738 = vpop.f32.mrb[0].mxu0
        %739 = vmatprep.mubr.f32.mxu0 0.0
        %740 = vmatmul.mubr.f32.gmra.mrb[0].mxu0 %v539
        %v741 = vpop.f32.mrb[0].mxu0
        %v742 = vadd.f32 0.0, %v741
        %v743 = vpop.f32.mrb[0].mxu0
        %744 = vmatprep.mubr.f32.mxu0 0.0
        %745 = vmatmul.mubr.f32.gmra.mrb[0].mxu0 %v540
        %v746 = vpop.f32.mrb[0].mxu0
        %v747 = vadd.f32 0.0, %v746
        %v748 = vpop.f32.mrb[0].mxu0
        %749 = vmatprep.mubr.f32.mxu0 0.0
        %750 = vmatmul.mubr.f32.gmra.mrb[0].mxu0 %v541
        %v751 = vpop.f32.mrb[0].mxu0
        %v752 = vadd.f32 0.0, %v751
        %v753 = vpop.f32.mrb[0].mxu0
        %754 = vmatprep.mubr.f32.mxu0 0.0
        %755 = vmatmul.mubr.f32.gmra.mrb[0].mxu0 %v542
        %v756 = vpop.f32.mrb[0].mxu0
        %v757 = vadd.f32 0.0, %v756
        %v758 = vpop.f32.mrb[0].mxu0
        %759 = vmatprep.mubr.f32.mxu0 0.0
        %760 = vmatmul.mubr.f32.gmra.mrb[0].mxu0 %v543
        %v761 = vpop.f32.mrb[0].mxu0
        %v762 = vadd.f32 0.0, %v761
        %v763 = vpop.f32.mrb[0].mxu0
        %764 = vmatprep.mubr.f32.mxu0 0.0
        %765 = vmatmul.mubr.f32.gmra.mrb[0].mxu0 %v544
        %v766 = vpop.f32.mrb[0].mxu0
        %v767 = vadd.f32 0.0, %v766
        %v768 = vpop.f32.mrb[0].mxu0
        %769 = vmatprep.mubr.f32.mxu0 0.0
        %770 = vmatmul.mubr.f32.gmra.mrb[0].mxu0 %v545
        %v771 = vpop.f32.mrb[0].mxu0
        %v772 = vadd.f32 0.0, %v771
        %v773 = vpop.f32.mrb[0].mxu0
        %774 = vmatprep.mubr.f32.mxu0 0.0
        %775 = vmatmul.mubr.f32.gmra.mrb[0].mxu0 %v546
        %v776 = vpop.f32.mrb[0].mxu0
        %v777 = vadd.f32 0.0, %v776
        %v778 = vpop.f32.mrb[0].mxu0
        %779 = vmatprep.mubr.f32.mxu0 0.0
        %780 = vmatmul.mubr.f32.gmra.mrb[0].mxu0 %v547
        %v781 = vpop.f32.mrb[0].mxu0
        %v782 = vadd.f32 0.0, %v781
        %v783 = vpop.f32.mrb[0].mxu0
        %784 = vmatprep.mubr.f32.mxu0 0.0
        %785 = vmatmul.mubr.f32.gmra.mrb[0].mxu0 %v548
        %v786 = vpop.f32.mrb[0].mxu0
        %v787 = vadd.f32 0.0, %v786
        %v788 = vpop.f32.mrb[0].mxu0
        %789 = vdwg.mxu0
        %v790 = vld [vmem:[%s4] sm:$0x1]
        %v791 = vld [vmem:[%s5] sm:$0x1]
        %v792 = vadd.f32 %v632, %v637
        %v793 = vadd.f32 %v792, %v642
        %v794 = vadd.f32 %v793, %v647
        %v795 = vadd.f32 %v794, %v652
        %v796 = vadd.f32 %v795, %v657
        %v797 = vadd.f32 %v796, %v662
        %v798 = vadd.f32 %v797, %v667
        %v799 = vadd.f32 %v798, %v672
        %v800 = vadd.f32 %v799, %v677
        %v801 = vadd.f32 %v800, %v682
        %v802 = vadd.f32 %v801, %v687
        %v803 = vadd.f32 %v802, %v692
        %v804 = vadd.f32 %v803, %v697
        %v805 = vadd.f32 %v804, %v702
        %v806 = vadd.f32 %v805, %v707
        %v807 = vadd.f32 %v806, %v712
        %v808 = vadd.f32 %v807, %v717
        %v809 = vadd.f32 %v808, %v722
        %v810 = vadd.f32 %v809, %v727
        %v811 = vadd.f32 %v810, %v732
        %v812 = vadd.f32 %v811, %v737
        %v813 = vadd.f32 %v812, %v742
        %v814 = vadd.f32 %v813, %v747
        %v815 = vadd.f32 %v814, %v752
        %v816 = vadd.f32 %v815, %v757
        %v817 = vadd.f32 %v816, %v762
        %v818 = vadd.f32 %v817, %v767
        %v819 = vadd.f32 %v818, %v772
        %v820 = vadd.f32 %v819, %v777
        %v821 = vadd.f32 %v820, %v782
        %v822 = vadd.f32 %v821, %v787
        %v823 = vrot.slane %v822, 4
        %v824 = vadd.f32 %v822, %v823
        %v825 = vrot.slane %v824, 2
        %v826 = vadd.f32 %v824, %v825
        %v827 = vrot.slane %v826, 1
        %v828 = vadd.f32 %v826, %v827
        %v829 = vmul.f32 %v632, %v632
        %v830 = vmul.f32 %v637, %v637
        %v831 = vmul.f32 %v642, %v642
        %v832 = vmul.f32 %v647, %v647
        %v833 = vmul.f32 %v652, %v652
        %v834 = vmul.f32 %v657, %v657
        %v835 = vmul.f32 %v662, %v662
        %v836 = vmul.f32 %v667, %v667
        %v837 = vmul.f32 %v672, %v672
        %v838 = vmul.f32 %v677, %v677
        %v839 = vmul.f32 %v682, %v682
        %v840 = vmul.f32 %v687, %v687
        %v841 = vmul.f32 %v692, %v692
        %v842 = vmul.f32 %v697, %v697
        %v843 = vmul.f32 %v702, %v702
        %v844 = vmul.f32 %v707, %v707
        %v845 = vmul.f32 %v712, %v712
        %v846 = vmul.f32 %v717, %v717
        %v847 = vmul.f32 %v722, %v722
        %v848 = vmul.f32 %v727, %v727
        %v849 = vmul.f32 %v732, %v732
        %v850 = vmul.f32 %v737, %v737
        %v851 = vmul.f32 %v742, %v742
        %v852 = vmul.f32 %v747, %v747
        %v853 = vmul.f32 %v752, %v752
        %v854 = vmul.f32 %v757, %v757
        %v855 = vmul.f32 %v762, %v762
        %v856 = vmul.f32 %v767, %v767
        %v857 = vmul.f32 %v772, %v772
        %v858 = vmul.f32 %v777, %v777
        %v859 = vmul.f32 %v782, %v782
        %v860 = vmul.f32 %v787, %v787
        %v861 = vadd.f32 %v829, %v830
        %v862 = vadd.f32 %v861, %v831
        %v863 = vadd.f32 %v862, %v832
        %v864 = vadd.f32 %v863, %v833
        %v865 = vadd.f32 %v864, %v834
        %v866 = vadd.f32 %v865, %v835
        %v867 = vadd.f32 %v866, %v836
        %v868 = vadd.f32 %v867, %v837
        %v869 = vadd.f32 %v868, %v838
        %v870 = vadd.f32 %v869, %v839
        %v871 = vadd.f32 %v870, %v840
        %v872 = vadd.f32 %v871, %v841
        %v873 = vadd.f32 %v872, %v842
        %v874 = vadd.f32 %v873, %v843
        %v875 = vadd.f32 %v874, %v844
        %v876 = vadd.f32 %v875, %v845
        %v877 = vadd.f32 %v876, %v846
        %v878 = vadd.f32 %v877, %v847
        %v879 = vadd.f32 %v878, %v848
        %v880 = vadd.f32 %v879, %v849
        %v881 = vadd.f32 %v880, %v850
        %v882 = vadd.f32 %v881, %v851
        %v883 = vadd.f32 %v882, %v852
        %v884 = vadd.f32 %v883, %v853
        %v885 = vadd.f32 %v884, %v854
        %v886 = vadd.f32 %v885, %v855
        %v887 = vadd.f32 %v886, %v856
        %v888 = vadd.f32 %v887, %v857
        %v889 = vadd.f32 %v888, %v858
        %v890 = vadd.f32 %v889, %v859
        %v891 = vadd.f32 %v890, %v860
        %v892 = vrot.slane %v891, 4
        %v893 = vadd.f32 %v891, %v892
        %v894 = vrot.slane %v893, 2
        %v895 = vadd.f32 %v893, %v894
        %v896 = vrot.slane %v895, 1
        %v897 = vadd.f32 %v895, %v896
        %v898 = vmul.f32 %v828, 0.00390625
        %v899 = vmul.f32 %v897, 0.00390625
        %v900 = vmul.f32 %v898, %v898
        %v901 = vsub.f32 %v899, %v900
        %v902 = vadd.f32 %v901, 1e-05
        %v903 = vrsqrt.pop %v902
        %v904 = vsub.f32 %v632, %v898
        %v905 = vsub.f32 %v637, %v898
        %v906 = vsub.f32 %v642, %v898
        %v907 = vsub.f32 %v647, %v898
        %v908 = vsub.f32 %v652, %v898
        %v909 = vsub.f32 %v657, %v898
        %v910 = vsub.f32 %v662, %v898
        %v911 = vsub.f32 %v667, %v898
        %v912 = vsub.f32 %v672, %v898
        %v913 = vsub.f32 %v677, %v898
        %v914 = vsub.f32 %v682, %v898
        %v915 = vsub.f32 %v687, %v898
        %v916 = vsub.f32 %v692, %v898
        %v917 = vsub.f32 %v697, %v898
        %v918 = vsub.f32 %v702, %v898
        %v919 = vsub.f32 %v707, %v898
        %v920 = vsub.f32 %v712, %v898
        %v921 = vsub.f32 %v717, %v898
        %v922 = vsub.f32 %v722, %v898
        %v923 = vsub.f32 %v727, %v898
        %v924 = vsub.f32 %v732, %v898
        %v925 = vsub.f32 %v737, %v898
        %v926 = vsub.f32 %v742, %v898
        %v927 = vsub.f32 %v747, %v898
        %v928 = vsub.f32 %v752, %v898
        %v929 = vsub.f32 %v757, %v898
        %v930 = vsub.f32 %v762, %v898
        %v931 = vsub.f32 %v767, %v898
        %v932 = vsub.f32 %v772, %v898
        %v933 = vsub.f32 %v777, %v898
        %v934 = vsub.f32 %v782, %v898
        %v935 = vsub.f32 %v787, %v898
        %v936 = vmul.f32 %v903, %v790
        %v937 = vlaneseq
        %v938 = vshrl.u32 %v937, 7
        %v939 = vsub.s32 0, %v938
        %v940 = vrot.slane %v936, %v939
        %v941 = vmul.f32 %v904, %v940
        %v942 = vmul.f32 %v905, %v940
        %v943 = vmul.f32 %v906, %v940
        %v944 = vmul.f32 %v907, %v940
        %v945 = vmul.f32 %v908, %v940
        %v946 = vmul.f32 %v909, %v940
        %v947 = vmul.f32 %v910, %v940
        %v948 = vmul.f32 %v911, %v940
        %v949 = vmul.f32 %v912, %v940
        %v950 = vmul.f32 %v913, %v940
        %v951 = vmul.f32 %v914, %v940
        %v952 = vmul.f32 %v915, %v940
        %v953 = vmul.f32 %v916, %v940
        %v954 = vmul.f32 %v917, %v940
        %v955 = vmul.f32 %v918, %v940
        %v956 = vmul.f32 %v919, %v940
        %v957 = vmul.f32 %v920, %v940
        %v958 = vmul.f32 %v921, %v940
        %v959 = vmul.f32 %v922, %v940
        %v960 = vmul.f32 %v923, %v940
        %v961 = vmul.f32 %v924, %v940
        %v962 = vmul.f32 %v925, %v940
        %v963 = vmul.f32 %v926, %v940
        %v964 = vmul.f32 %v927, %v940
        %v965 = vmul.f32 %v928, %v940
        %v966 = vmul.f32 %v929, %v940
        %v967 = vmul.f32 %v930, %v940
        %v968 = vmul.f32 %v931, %v940
        %v969 = vmul.f32 %v932, %v940
        %v970 = vmul.f32 %v933, %v940
        %v971 = vmul.f32 %v934, %v940
        %v972 = vmul.f32 %v935, %v940
        %v974 = vlaneseq
        %v975 = vshrl.u32 %v974, 7
        %v976 = vsub.s32 0, %v975
        %v977 = vrot.slane %v791, %v976
        %v979 = vadd.f32 %v941, %v977
        %v980 = vadd.f32 %v942, %v977
        %v981 = vadd.f32 %v943, %v977
        %v982 = vadd.f32 %v944, %v977
        %v983 = vadd.f32 %v945, %v977
        %v984 = vadd.f32 %v946, %v977
        %v985 = vadd.f32 %v947, %v977
        %v986 = vadd.f32 %v948, %v977
        %v987 = vadd.f32 %v949, %v977
        %v988 = vadd.f32 %v950, %v977
        %v989 = vadd.f32 %v951, %v977
        %v990 = vadd.f32 %v952, %v977
        %v991 = vadd.f32 %v953, %v977
        %v992 = vadd.f32 %v954, %v977
        %v993 = vadd.f32 %v955, %v977
        %v994 = vadd.f32 %v956, %v977
        %v995 = vadd.f32 %v957, %v977
        %v996 = vadd.f32 %v958, %v977
        %v997 = vadd.f32 %v959, %v977
        %v998 = vadd.f32 %v960, %v977
        %v999 = vadd.f32 %v961, %v977
        %v1000 = vadd.f32 %v962, %v977
        %v1001 = vadd.f32 %v963, %v977
        %v1002 = vadd.f32 %v964, %v977
        %v1003 = vadd.f32 %v965, %v977
        %v1004 = vadd.f32 %v966, %v977
        %v1005 = vadd.f32 %v967, %v977
        %v1006 = vadd.f32 %v968, %v977
        %v1007 = vadd.f32 %v969, %v977
        %v1008 = vadd.f32 %v970, %v977
        %v1009 = vadd.f32 %v971, %v977
        %v1010 = vadd.f32 %v972, %v977
        %v1011 = vmax.f32 %v979, 0.0
        %v1012 = vmax.f32 %v980, 0.0
        %v1013 = vmax.f32 %v981, 0.0
        %v1014 = vmax.f32 %v982, 0.0
        %v1015 = vmax.f32 %v983, 0.0
        %v1016 = vmax.f32 %v984, 0.0
        %v1017 = vmax.f32 %v985, 0.0
        %v1018 = vmax.f32 %v986, 0.0
        %v1019 = vmax.f32 %v987, 0.0
        %v1020 = vmax.f32 %v988, 0.0
        %v1021 = vmax.f32 %v989, 0.0
        %v1022 = vmax.f32 %v990, 0.0
        %v1023 = vmax.f32 %v991, 0.0
        %v1024 = vmax.f32 %v992, 0.0
        %v1025 = vmax.f32 %v993, 0.0
        %v1026 = vmax.f32 %v994, 0.0
        %v1027 = vmax.f32 %v995, 0.0
        %v1028 = vmax.f32 %v996, 0.0
        %v1029 = vmax.f32 %v997, 0.0
        %v1030 = vmax.f32 %v998, 0.0
        %v1031 = vmax.f32 %v999, 0.0
        %v1032 = vmax.f32 %v1000, 0.0
        %v1033 = vmax.f32 %v1001, 0.0
        %v1034 = vmax.f32 %v1002, 0.0
        %v1035 = vmax.f32 %v1003, 0.0
        %v1036 = vmax.f32 %v1004, 0.0
        %v1037 = vmax.f32 %v1005, 0.0
        %v1038 = vmax.f32 %v1006, 0.0
        %v1039 = vmax.f32 %v1007, 0.0
        %v1040 = vmax.f32 %v1008, 0.0
        %v1041 = vmax.f32 %v1009, 0.0
        %v1042 = vmax.f32 %v1010, 0.0
        %1043 = vst [vmem:[#allocation2] sm:$0xff] 0.0
        %1044 = vst [vmem:[#allocation2 + $0x8] sm:$0xff] 0.0
        %1045 = vst [vmem:[#allocation2 + $0x10] sm:$0x3] 0.0
        %s1046 = scalar_lea.vmem [#allocation2], 408
        %1047 = vst [vmem:[%s1046] sm:$0xff] 0.0
        %1048 = vst [vmem:[%s1046 + $0x8] sm:$0xff] 0.0
        %1049 = vst [vmem:[%s1046 + $0x10] sm:$0x3] 0.0
        %1050 = vst [vmem:[#allocation2] sm:$0x1] 0.0
        %1051 = vst [vmem:[#allocation2 + $0x18] sm:$0x1] 0.0
        %1052 = vst [vmem:[#allocation2 + $0x30] sm:$0x1] 0.0
        %1053 = vst [vmem:[#allocation2 + $0x48] sm:$0x1] 0.0
        %1054 = vst [vmem:[#allocation2 + $0x60] sm:$0x1] 0.0
        %1055 = vst [vmem:[#allocation2 + $0x78] sm:$0x1] 0.0
        %1056 = vst [vmem:[#allocation2 + $0x90] sm:$0x1] 0.0
        %1057 = vst [vmem:[#allocation2 + $0xa8] sm:$0x1] 0.0
        %1058 = vst [vmem:[#allocation2 + $0xc0] sm:$0x1] 0.0
        %1059 = vst [vmem:[#allocation2 + $0xd8] sm:$0x1] 0.0
        %1060 = vst [vmem:[#allocation2 + $0xf0] sm:$0x1] 0.0
        %1061 = vst [vmem:[#allocation2 + $0x108] sm:$0x1] 0.0
        %1062 = vst [vmem:[#allocation2 + $0x120] sm:$0x1] 0.0
        %1063 = vst [vmem:[#allocation2 + $0x138] sm:$0x1] 0.0
        %1064 = vst [vmem:[#allocation2 + $0x150] sm:$0x1] 0.0
        %1065 = vst [vmem:[#allocation2 + $0x168] sm:$0x1] 0.0
        %1066 = vst [vmem:[#allocation2 + $0x180] sm:$0x1] 0.0
        %1067 = vst [vmem:[#allocation2 + $0x198] sm:$0x1] 0.0
        %1068 = vst [vmem:[#allocation2 + $0x11] sm:$0x1] 0.0
        %1069 = vst [vmem:[#allocation2 + $0x29] sm:$0x1] 0.0
        %1070 = vst [vmem:[#allocation2 + $0x41] sm:$0x1] 0.0
        %1071 = vst [vmem:[#allocation2 + $0x59] sm:$0x1] 0.0
        %1072 = vst [vmem:[#allocation2 + $0x71] sm:$0x1] 0.0
        %1073 = vst [vmem:[#allocation2 + $0x89] sm:$0x1] 0.0
        %1074 = vst [vmem:[#allocation2 + $0xa1] sm:$0x1] 0.0
        %1075 = vst [vmem:[#allocation2 + $0xb9] sm:$0x1] 0.0
        %1076 = vst [vmem:[#allocation2 + $0xd1] sm:$0x1] 0.0
        %1077 = vst [vmem:[#allocation2 + $0xe9] sm:$0x1] 0.0
        %1078 = vst [vmem:[#allocation2 + $0x101] sm:$0x1] 0.0
        %1079 = vst [vmem:[#allocation2 + $0x119] sm:$0x1] 0.0
        %1080 = vst [vmem:[#allocation2 + $0x131] sm:$0x1] 0.0
        %1081 = vst [vmem:[#allocation2 + $0x149] sm:$0x1] 0.0
        %1082 = vst [vmem:[#allocation2 + $0x161] sm:$0x1] 0.0
        %1083 = vst [vmem:[#allocation2 + $0x179] sm:$0x1] 0.0
        %1084 = vst [vmem:[#allocation2 + $0x191] sm:$0x1] 0.0
        %1085 = vst [vmem:[#allocation2 + $0x1a9] sm:$0x1] 0.0
        %s1086 = scalar_lea.vmem [#allocation2], 24
        %1087 = vst [vmem:[%s1086 + $0x1] sm:$0xff] %v1011
        %1088 = vst [vmem:[%s1086 + $0x9] sm:$0xff] %v1012
        %1089 = vst [vmem:[%s1086 + $0x19] sm:$0xff] %v1013
        %1090 = vst [vmem:[%s1086 + $0x21] sm:$0xff] %v1014
        %1091 = vst [vmem:[%s1086 + $0x31] sm:$0xff] %v1015
        %1092 = vst [vmem:[%s1086 + $0x39] sm:$0xff] %v1016
        %1093 = vst [vmem:[%s1086 + $0x49] sm:$0xff] %v1017
        %1094 = vst [vmem:[%s1086 + $0x51] sm:$0xff] %v1018
        %1095 = vst [vmem:[%s1086 + $0x61] sm:$0xff] %v1019
        %1096 = vst [vmem:[%s1086 + $0x69] sm:$0xff] %v1020
        %1097 = vst [vmem:[%s1086 + $0x79] sm:$0xff] %v1021
        %1098 = vst [vmem:[%s1086 + $0x81] sm:$0xff] %v1022
        %1099 = vst [vmem:[%s1086 + $0x91] sm:$0xff] %v1023
        %1100 = vst [vmem:[%s1086 + $0x99] sm:$0xff] %v1024
        %1101 = vst [vmem:[%s1086 + $0xa9] sm:$0xff] %v1025
        %1102 = vst [vmem:[%s1086 + $0xb1] sm:$0xff] %v1026
        %1103 = vst [vmem:[%s1086 + $0xc1] sm:$0xff] %v1027
        %1104 = vst [vmem:[%s1086 + $0xc9] sm:$0xff] %v1028
        %1105 = vst [vmem:[%s1086 + $0xd9] sm:$0xff] %v1029
        %1106 = vst [vmem:[%s1086 + $0xe1] sm:$0xff] %v1030
        %1107 = vst [vmem:[%s1086 + $0xf1] sm:$0xff] %v1031
        %1108 = vst [vmem:[%s1086 + $0xf9] sm:$0xff] %v1032
        %1109 = vst [vmem:[%s1086 + $0x109] sm:$0xff] %v1033
        %1110 = vst [vmem:[%s1086 + $0x111] sm:$0xff] %v1034
        %1111 = vst [vmem:[%s1086 + $0x121] sm:$0xff] %v1035
        %1112 = vst [vmem:[%s1086 + $0x129] sm:$0xff] %v1036
        %1113 = vst [vmem:[%s1086 + $0x139] sm:$0xff] %v1037
        %1114 = vst [vmem:[%s1086 + $0x141] sm:$0xff] %v1038
        %1115 = vst [vmem:[%s1086 + $0x151] sm:$0xff] %v1039
        %1116 = vst [vmem:[%s1086 + $0x159] sm:$0xff] %v1040
        %1117 = vst [vmem:[%s1086 + $0x169] sm:$0xff] %v1041
        %1118 = vst [vmem:[%s1086 + $0x171] sm:$0xff] %v1042
        %v1119 = vld [vmem:[#allocation2] sm:$0xff]
        %v1120 = vld [vmem:[#allocation2 + $0x8] sm:$0xff]
        %v1121 = vld [vmem:[#allocation2 + $0x10] sm:$0x3]
        %v1122 = vld [vmem:[#allocation2 + $0x18] sm:$0xff]
        %v1123 = vld [vmem:[#allocation2 + $0x20] sm:$0xff]
        %v1124 = vld [vmem:[#allocation2 + $0x28] sm:$0x3]
        %v1125 = vld [vmem:[#allocation2 + $0x30] sm:$0xff]
        %v1126 = vld [vmem:[#allocation2 + $0x38] sm:$0xff]
        %v1127 = vld [vmem:[#allocation2 + $0x40] sm:$0x3]
        %v1128 = vld [vmem:[#allocation2 + $0x48] sm:$0xff]
        %v1129 = vld [vmem:[#allocation2 + $0x50] sm:$0xff]
        %v1130 = vld [vmem:[#allocation2 + $0x58] sm:$0x3]
        %v1131 = vld [vmem:[#allocation2 + $0x60] sm:$0xff]
        %v1132 = vld [vmem:[#allocation2 + $0x68] sm:$0xff]
        %v1133 = vld [vmem:[#allocation2 + $0x70] sm:$0x3]
        %v1134 = vld [vmem:[#allocation2 + $0x78] sm:$0xff]
        %v1135 = vld [vmem:[#allocation2 + $0x80] sm:$0xff]
        %v1136 = vld [vmem:[#allocation2 + $0x88] sm:$0x3]
        %v1137 = vld [vmem:[#allocation2 + $0x90] sm:$0xff]
        %v1138 = vld [vmem:[#allocation2 + $0x98] sm:$0xff]
        %v1139 = vld [vmem:[#allocation2 + $0xa0] sm:$0x3]
        %v1140 = vld [vmem:[#allocation2 + $0xa8] sm:$0xff]
        %v1141 = vld [vmem:[#allocation2 + $0xb0] sm:$0xff]
        %v1142 = vld [vmem:[#allocation2 + $0xb8] sm:$0x3]
        %v1143 = vld [vmem:[#allocation2 + $0xc0] sm:$0xff]
        %v1144 = vld [vmem:[#allocation2 + $0xc8] sm:$0xff]
        %v1145 = vld [vmem:[#allocation2 + $0xd0] sm:$0x3]
        %v1146 = vld [vmem:[#allocation2 + $0xd8] sm:$0xff]
        %v1147 = vld [vmem:[#allocation2 + $0xe0] sm:$0xff]
        %v1148 = vld [vmem:[#allocation2 + $0xe8] sm:$0x3]
        %v1149 = vld [vmem:[#allocation2 + $0xf0] sm:$0xff]
        %v1150 = vld [vmem:[#allocation2 + $0xf8] sm:$0xff]
        %v1151 = vld [vmem:[#allocation2 + $0x100] sm:$0x3]
        %v1152 = vld [vmem:[#allocation2 + $0x108] sm:$0xff]
        %v1153 = vld [vmem:[#allocation2 + $0x110] sm:$0xff]
        %v1154 = vld [vmem:[#allocation2 + $0x118] sm:$0x3]
        %v1155 = vld [vmem:[#allocation2 + $0x120] sm:$0xff]
        %v1156 = vld [vmem:[#allocation2 + $0x128] sm:$0xff]
        %v1157 = vld [vmem:[#allocation2 + $0x130] sm:$0x3]
        %v1158 = vld [vmem:[#allocation2 + $0x138] sm:$0xff]
        %v1159 = vld [vmem:[#allocation2 + $0x140] sm:$0xff]
        %v1160 = vld [vmem:[#allocation2 + $0x148] sm:$0x3]
        %v1161 = vld [vmem:[#allocation2 + $0x150] sm:$0xff]
        %v1162 = vld [vmem:[#allocation2 + $0x158] sm:$0xff]
        %v1163 = vld [vmem:[#allocation2 + $0x160] sm:$0x3]
        %v1164 = vld [vmem:[#allocation2 + $0x168] sm:$0xff]
        %v1165 = vld [vmem:[#allocation2 + $0x170] sm:$0xff]
        %v1166 = vld [vmem:[#allocation2 + $0x178] sm:$0x3]
        %v1167 = vld [vmem:[#allocation2 + $0x180] sm:$0xff]
        %v1168 = vld [vmem:[#allocation2 + $0x188] sm:$0xff]
        %v1169 = vld [vmem:[#allocation2 + $0x190] sm:$0x3]
        %v1170 = vld [vmem:[#allocation2 + $0x198] sm:$0xff]
        %v1171 = vld [vmem:[#allocation2 + $0x1a0] sm:$0xff]
        %v1172 = vld [vmem:[#allocation2 + $0x1a8] sm:$0x3]
        %vm1221 = vcmask 1046528
        %v1222 = vrot.slane %v1119, 1
        %v1223 = vrot.slane %v1120, 1
        %v1224 = vsel %vm1221, %v1222, %v1223
        %v1225 = vrot.slane %v1121, 1
        %v1226 = vsel %vm1221, %v1223, %v1225
        %v1227 = vrot.slane %v1122, 1
        %v1228 = vrot.slane %v1123, 1
        %v1229 = vsel %vm1221, %v1227, %v1228
        %v1230 = vrot.slane %v1124, 1
        %v1231 = vsel %vm1221, %v1228, %v1230
        %v1232 = vrot.slane %v1125, 1
        %v1233 = vrot.slane %v1126, 1
        %v1234 = vsel %vm1221, %v1232, %v1233
        %v1235 = vrot.slane %v1127, 1
        %v1236 = vsel %vm1221, %v1233, %v1235
        %v1237 = vrot.slane %v1128, 1
        %v1238 = vrot.slane %v1129, 1
        %v1239 = vsel %vm1221, %v1237, %v1238
        %v1240 = vrot.slane %v1130, 1
        %v1241 = vsel %vm1221, %v1238, %v1240
        %v1242 = vrot.slane %v1131, 1
        %v1243 = vrot.slane %v1132, 1
        %v1244 = vsel %vm1221, %v1242, %v1243
        %v1245 = vrot.slane %v1133, 1
        %v1246 = vsel %vm1221, %v1243, %v1245
        %v1247 = vrot.slane %v1134, 1
        %v1248 = vrot.slane %v1135, 1
        %v1249 = vsel %vm1221, %v1247, %v1248
        %v1250 = vrot.slane %v1136, 1
        %v1251 = vsel %vm1221, %v1248, %v1250
        %v1252 = vrot.slane %v1137, 1
        %v1253 = vrot.slane %v1138, 1
        %v1254 = vsel %vm1221, %v1252, %v1253
        %v1255 = vrot.slane %v1139, 1
        %v1256 = vsel %vm1221, %v1253, %v1255
        %v1257 = vrot.slane %v1140, 1
        %v1258 = vrot.slane %v1141, 1
        %v1259 = vsel %vm1221, %v1257, %v1258
        %v1260 = vrot.slane %v1142, 1
        %v1261 = vsel %vm1221, %v1258, %v1260
        %v1262 = vrot.slane %v1143, 1
        %v1263 = vrot.slane %v1144, 1
        %v1264 = vsel %vm1221, %v1262, %v1263
        %v1265 = vrot.slane %v1145, 1
        %v1266 = vsel %vm1221, %v1263, %v1265
        %v1267 = vrot.slane %v1146, 1
        %v1268 = vrot.slane %v1147, 1
        %v1269 = vsel %vm1221, %v1267, %v1268
        %v1270 = vrot.slane %v1148, 1
        %v1271 = vsel %vm1221, %v1268, %v1270
        %v1272 = vrot.slane %v1149, 1
        %v1273 = vrot.slane %v1150, 1
        %v1274 = vsel %vm1221, %v1272, %v1273
        %v1275 = vrot.slane %v1151, 1
        %v1276 = vsel %vm1221, %v1273, %v1275
        %v1277 = vrot.slane %v1152, 1
        %v1278 = vrot.slane %v1153, 1
        %v1279 = vsel %vm1221, %v1277, %v1278
        %v1280 = vrot.slane %v1154, 1
        %v1281 = vsel %vm1221, %v1278, %v1280
        %v1282 = vrot.slane %v1155, 1
        %v1283 = vrot.slane %v1156, 1
        %v1284 = vsel %vm1221, %v1282, %v1283
        %v1285 = vrot.slane %v1157, 1
        %v1286 = vsel %vm1221, %v1283, %v1285
        %v1287 = vrot.slane %v1158, 1
        %v1288 = vrot.slane %v1159, 1
        %v1289 = vsel %vm1221, %v1287, %v1288
        %v1290 = vrot.slane %v1160, 1
        %v1291 = vsel %vm1221, %v1288, %v1290
        %v1292 = vrot.slane %v1161, 1
        %v1293 = vrot.slane %v1162, 1
        %v1294 = vsel %vm1221, %v1292, %v1293
        %v1295 = vrot.slane %v1163, 1
        %v1296 = vsel %vm1221, %v1293, %v1295
        %v1297 = vrot.slane %v1164, 1
        %v1298 = vrot.slane %v1165, 1
        %v1299 = vsel %vm1221, %v1297, %v1298
        %v1300 = vrot.slane %v1166, 1
        %v1301 = vsel %vm1221, %v1298, %v1300
        %vm1334 = vcmask 1045504
        %v1335 = vrot.slane %v1119, 2
        %v1336 = vrot.slane %v1120, 2
        %v1337 = vsel %vm1334, %v1335, %v1336
        %v1338 = vrot.slane %v1121, 2
        %v1339 = vsel %vm1334, %v1336, %v1338
        %v1340 = vrot.slane %v1122, 2
        %v1341 = vrot.slane %v1123, 2
        %v1342 = vsel %vm1334, %v1340, %v1341
        %v1343 = vrot.slane %v1124, 2
        %v1344 = vsel %vm1334, %v1341, %v1343
        %v1345 = vrot.slane %v1125, 2
        %v1346 = vrot.slane %v1126, 2
        %v1347 = vsel %vm1334, %v1345, %v1346
        %v1348 = vrot.slane %v1127, 2
        %v1349 = vsel %vm1334, %v1346, %v1348
        %v1350 = vrot.slane %v1128, 2
        %v1351 = vrot.slane %v1129, 2
        %v1352 = vsel %vm1334, %v1350, %v1351
        %v1353 = vrot.slane %v1130, 2
        %v1354 = vsel %vm1334, %v1351, %v1353
        %v1355 = vrot.slane %v1131, 2
        %v1356 = vrot.slane %v1132, 2
        %v1357 = vsel %vm1334, %v1355, %v1356
        %v1358 = vrot.slane %v1133, 2
        %v1359 = vsel %vm1334, %v1356, %v1358
        %v1360 = vrot.slane %v1134, 2
        %v1361 = vrot.slane %v1135, 2
        %v1362 = vsel %vm1334, %v1360, %v1361
        %v1363 = vrot.slane %v1136, 2
        %v1364 = vsel %vm1334, %v1361, %v1363
        %v1365 = vrot.slane %v1137, 2
        %v1366 = vrot.slane %v1138, 2
        %v1367 = vsel %vm1334, %v1365, %v1366
        %v1368 = vrot.slane %v1139, 2
        %v1369 = vsel %vm1334, %v1366, %v1368
        %v1370 = vrot.slane %v1140, 2
        %v1371 = vrot.slane %v1141, 2
        %v1372 = vsel %vm1334, %v1370, %v1371
        %v1373 = vrot.slane %v1142, 2
        %v1374 = vsel %vm1334, %v1371, %v1373
        %v1375 = vrot.slane %v1143, 2
        %v1376 = vrot.slane %v1144, 2
        %v1377 = vsel %vm1334, %v1375, %v1376
        %v1378 = vrot.slane %v1145, 2
        %v1379 = vsel %vm1334, %v1376, %v1378
        %v1380 = vrot.slane %v1146, 2
        %v1381 = vrot.slane %v1147, 2
        %v1382 = vsel %vm1334, %v1380, %v1381
        %v1383 = vrot.slane %v1148, 2
        %v1384 = vsel %vm1334, %v1381, %v1383
        %v1385 = vrot.slane %v1149, 2
        %v1386 = vrot.slane %v1150, 2
        %v1387 = vsel %vm1334, %v1385, %v1386
        %v1388 = vrot.slane %v1151, 2
        %v1389 = vsel %vm1334, %v1386, %v1388
        %v1390 = vrot.slane %v1152, 2
        %v1391 = vrot.slane %v1153, 2
        %v1392 = vsel %vm1334, %v1390, %v1391
        %v1393 = vrot.slane %v1154, 2
        %v1394 = vsel %vm1334, %v1391, %v1393
        %v1395 = vrot.slane %v1155, 2
        %v1396 = vrot.slane %v1156, 2
        %v1397 = vsel %vm1334, %v1395, %v1396
        %v1398 = vrot.slane %v1157, 2
        %v1399 = vsel %vm1334, %v1396, %v1398
        %v1400 = vrot.slane %v1158, 2
        %v1401 = vrot.slane %v1159, 2
        %v1402 = vsel %vm1334, %v1400, %v1401
        %v1403 = vrot.slane %v1160, 2
        %v1404 = vsel %vm1334, %v1401, %v1403
        %v1405 = vrot.slane %v1161, 2
        %v1406 = vrot.slane %v1162, 2
        %v1407 = vsel %vm1334, %v1405, %v1406
        %v1408 = vrot.slane %v1163, 2
        %v1409 = vsel %vm1334, %v1406, %v1408
        %v1410 = vrot.slane %v1164, 2
        %v1411 = vrot.slane %v1165, 2
        %v1412 = vsel %vm1334, %v1410, %v1411
        %v1413 = vrot.slane %v1166, 2
        %v1414 = vsel %vm1334, %v1411, %v1413
        %v1450 = vrot.slane %v1167, 1
        %v1451 = vrot.slane %v1168, 1
        %v1452 = vsel %vm1221, %v1450, %v1451
        %v1453 = vrot.slane %v1169, 1
        %v1454 = vsel %vm1221, %v1451, %v1453
        %v1457 = vrot.slane %v1167, 2
        %v1458 = vrot.slane %v1168, 2
        %v1459 = vsel %vm1334, %v1457, %v1458
        %v1460 = vrot.slane %v1169, 2
        %v1461 = vsel %vm1334, %v1458, %v1460
        %v1467 = vrot.slane %v1170, 1
        %v1468 = vrot.slane %v1171, 1
        %v1469 = vsel %vm1221, %v1467, %v1468
        %v1470 = vrot.slane %v1172, 1
        %v1471 = vsel %vm1221, %v1468, %v1470
        %v1474 = vrot.slane %v1170, 2
        %v1475 = vrot.slane %v1171, 2
        %v1476 = vsel %vm1334, %v1474, %v1475
        %v1477 = vrot.slane %v1172, 2
        %v1478 = vsel %vm1334, %v1475, %v1477
        %v1481 = vld [vmem:[#allocation8] sm:$0xff]
        %v1482 = vld [vmem:[#allocation8 + $0x8] sm:$0xff]
        %v1483 = vld [vmem:[#allocation8 + $0x10] sm:$0xff]
        %v1484 = vld [vmem:[#allocation8 + $0x18] sm:$0xff]
        %v1485 = vld [vmem:[#allocation8 + $0x20] sm:$0xff]
        %v1486 = vld [vmem:[#allocation8 + $0x28] sm:$0xff]
        %v1487 = vld [vmem:[#allocation8 + $0x30] sm:$0xff]
        %v1488 = vld [vmem:[#allocation8 + $0x38] sm:$0xff]
        %v1489 = vld [vmem:[#allocation8 + $0x40] sm:$0xff]
        %v1490 = vld [vmem:[#allocation8 + $0x48] sm:$0xff]
        %v1491 = vld [vmem:[#allocation8 + $0x50] sm:$0xff]
        %v1492 = vld [vmem:[#allocation8 + $0x58] sm:$0xff]
        %v1493 = vld [vmem:[#allocation8 + $0x60] sm:$0xff]
        %v1494 = vld [vmem:[#allocation8 + $0x68] sm:$0xff]
        %v1495 = vld [vmem:[#allocation8 + $0x70] sm:$0xff]
        %v1496 = vld [vmem:[#allocation8 + $0x78] sm:$0xff]
        %v1497 = vld [vmem:[#allocation8 + $0x80] sm:$0xff]
        %v1498 = vld [vmem:[#allocation8 + $0x88] sm:$0xff]
        %v1499 = vld [vmem:[#allocation8 + $0x90] sm:$0xff]
        %v1500 = vld [vmem:[#allocation8 + $0x98] sm:$0xff]
        %v1501 = vld [vmem:[#allocation8 + $0xa0] sm:$0xff]
        %v1502 = vld [vmem:[#allocation8 + $0xa8] sm:$0xff]
        %v1503 = vld [vmem:[#allocation8 + $0xb0] sm:$0xff]
        %v1504 = vld [vmem:[#allocation8 + $0xb8] sm:$0xff]
        %v1505 = vld [vmem:[#allocation8 + $0xc0] sm:$0xff]
        %v1506 = vld [vmem:[#allocation8 + $0xc8] sm:$0xff]
        %v1507 = vld [vmem:[#allocation8 + $0xd0] sm:$0xff]
        %v1508 = vld [vmem:[#allocation8 + $0xd8] sm:$0xff]
        %v1509 = vld [vmem:[#allocation8 + $0xe0] sm:$0xff]
        %v1510 = vld [vmem:[#allocation8 + $0xe8] sm:$0xff]
        %v1511 = vld [vmem:[#allocation8 + $0xf0] sm:$0xff]
        %v1512 = vld [vmem:[#allocation8 + $0xf8] sm:$0xff]
        %v1513 = vld [vmem:[#allocation8 + $0x100] sm:$0xff]
        %v1514 = vld [vmem:[#allocation8 + $0x108] sm:$0xff]
        %v1515 = vld [vmem:[#allocation8 + $0x110] sm:$0xff]
        %v1516 = vld [vmem:[#allocation8 + $0x118] sm:$0xff]
        %v1517 = vld [vmem:[#allocation8 + $0x120] sm:$0xff]
        %v1518 = vld [vmem:[#allocation8 + $0x128] sm:$0xff]
        %v1519 = vld [vmem:[#allocation8 + $0x130] sm:$0xff]
        %v1520 = vld [vmem:[#allocation8 + $0x138] sm:$0xff]
        %v1521 = vld [vmem:[#allocation8 + $0x140] sm:$0xff]
        %v1522 = vld [vmem:[#allocation8 + $0x148] sm:$0xff]
        %v1523 = vld [vmem:[#allocation8 + $0x150] sm:$0xff]
        %v1524 = vld [vmem:[#allocation8 + $0x158] sm:$0xff]
        %v1525 = vld [vmem:[#allocation8 + $0x160] sm:$0xff]
        %v1526 = vld [vmem:[#allocation8 + $0x168] sm:$0xff]
        %v1527 = vld [vmem:[#allocation8 + $0x170] sm:$0xff]
        %v1528 = vld [vmem:[#allocation8 + $0x178] sm:$0xff]
        %v1529 = vld [vmem:[#allocation8 + $0x180] sm:$0xff]
        %v1530 = vld [vmem:[#allocation8 + $0x188] sm:$0xff]
        %v1531 = vld [vmem:[#allocation8 + $0x190] sm:$0xff]
        %v1532 = vld [vmem:[#allocation8 + $0x198] sm:$0xff]
        %v1533 = vld [vmem:[#allocation8 + $0x1a0] sm:$0xff]
        %v1534 = vld [vmem:[#allocation8 + $0x1a8] sm:$0xff]
        %v1535 = vld [vmem:[#allocation8 + $0x1b0] sm:$0xff]
        %v1536 = vld [vmem:[#allocation8 + $0x1b8] sm:$0xff]
        %v1537 = vld [vmem:[#allocation8 + $0x1c0] sm:$0xff]
        %v1538 = vld [vmem:[#allocation8 + $0x1c8] sm:$0xff]
        %v1539 = vld [vmem:[#allocation8 + $0x1d0] sm:$0xff]
        %v1540 = vld [vmem:[#allocation8 + $0x1d8] sm:$0xff]
        %v1541 = vld [vmem:[#allocation8 + $0x1e0] sm:$0xff]
        %v1542 = vld [vmem:[#allocation8 + $0x1e8] sm:$0xff]
        %v1543 = vld [vmem:[#allocation8 + $0x1f0] sm:$0xff]
        %v1544 = vld [vmem:[#allocation8 + $0x1f8] sm:$0xff]
        %v1545 = vld [vmem:[#allocation8 + $0x200] sm:$0xff]
        %v1546 = vld [vmem:[#allocation8 + $0x208] sm:$0xff]
        %v1547 = vld [vmem:[#allocation8 + $0x210] sm:$0xff]
        %v1548 = vld [vmem:[#allocation8 + $0x218] sm:$0xff]
        %v1549 = vld [vmem:[#allocation8 + $0x220] sm:$0xff]
        %v1550 = vld [vmem:[#allocation8 + $0x228] sm:$0xff]
        %v1551 = vld [vmem:[#allocation8 + $0x230] sm:$0xff]
        %v1552 = vld [vmem:[#allocation8 + $0x238] sm:$0xff]
        %v1553 = vld [vmem:[#allocation8 + $0x240] sm:$0xff]
        %v1554 = vld [vmem:[#allocation8 + $0x248] sm:$0xff]
        %v1555 = vld [vmem:[#allocation8 + $0x250] sm:$0xff]
        %v1556 = vld [vmem:[#allocation8 + $0x258] sm:$0xff]
        %v1557 = vld [vmem:[#allocation8 + $0x260] sm:$0xff]
        %v1558 = vld [vmem:[#allocation8 + $0x268] sm:$0xff]
        %v1559 = vld [vmem:[#allocation8 + $0x270] sm:$0xff]
        %v1560 = vld [vmem:[#allocation8 + $0x278] sm:$0xff]
        %v1561 = vld [vmem:[#allocation8 + $0x280] sm:$0xff]
        %v1562 = vld [vmem:[#allocation8 + $0x288] sm:$0xff]
        %v1563 = vld [vmem:[#allocation8 + $0x290] sm:$0xff]
        %v1564 = vld [vmem:[#allocation8 + $0x298] sm:$0xff]
        %v1565 = vld [vmem:[#allocation8 + $0x2a0] sm:$0xff]
        %v1566 = vld [vmem:[#allocation8 + $0x2a8] sm:$0xff]
        %v1567 = vld [vmem:[#allocation8 + $0x2b0] sm:$0xff]
        %v1568 = vld [vmem:[#allocation8 + $0x2b8] sm:$0xff]
        %v1569 = vld [vmem:[#allocation8 + $0x2c0] sm:$0xff]
        %v1570 = vld [vmem:[#allocation8 + $0x2c8] sm:$0xff]
        %v1571 = vld [vmem:[#allocation8 + $0x2d0] sm:$0xff]
        %v1572 = vld [vmem:[#allocation8 + $0x2d8] sm:$0xff]
        %v1573 = vld [vmem:[#allocation8 + $0x2e0] sm:$0xff]
        %v1574 = vld [vmem:[#allocation8 + $0x2e8] sm:$0xff]
        %v1575 = vld [vmem:[#allocation8 + $0x2f0] sm:$0xff]
        %v1576 = vld [vmem:[#allocation8 + $0x2f8] sm:$0xff]
        %v1577 = vld [vmem:[#allocation8 + $0x300] sm:$0xff]
        %v1578 = vld [vmem:[#allocation8 + $0x308] sm:$0xff]
        %v1579 = vld [vmem:[#allocation8 + $0x310] sm:$0xff]
        %v1580 = vld [vmem:[#allocation8 + $0x318] sm:$0xff]
        %v1581 = vld [vmem:[#allocation8 + $0x320] sm:$0xff]
        %v1582 = vld [vmem:[#allocation8 + $0x328] sm:$0xff]
        %v1583 = vld [vmem:[#allocation8 + $0x330] sm:$0xff]
        %v1584 = vld [vmem:[#allocation8 + $0x338] sm:$0xff]
        %v1585 = vld [vmem:[#allocation8 + $0x340] sm:$0xff]
        %v1586 = vld [vmem:[#allocation8 + $0x348] sm:$0xff]
        %v1587 = vld [vmem:[#allocation8 + $0x350] sm:$0xff]
        %v1588 = vld [vmem:[#allocation8 + $0x358] sm:$0xff]
        %v1589 = vld [vmem:[#allocation8 + $0x360] sm:$0xff]
        %v1590 = vld [vmem:[#allocation8 + $0x368] sm:$0xff]
        %v1591 = vld [vmem:[#allocation8 + $0x370] sm:$0xff]
        %v1592 = vld [vmem:[#allocation8 + $0x378] sm:$0xff]
        %v1593 = vld [vmem:[#allocation8 + $0x380] sm:$0xff]
        %v1594 = vld [vmem:[#allocation8 + $0x388] sm:$0xff]
        %v1595 = vld [vmem:[#allocation8 + $0x390] sm:$0xff]
        %v1596 = vld [vmem:[#allocation8 + $0x398] sm:$0xff]
        %v1597 = vld [vmem:[#allocation8 + $0x3a0] sm:$0xff]
        %v1598 = vld [vmem:[#allocation8 + $0x3a8] sm:$0xff]
        %v1599 = vld [vmem:[#allocation8 + $0x3b0] sm:$0xff]
        %v1600 = vld [vmem:[#allocation8 + $0x3b8] sm:$0xff]
        %v1601 = vld [vmem:[#allocation8 + $0x3c0] sm:$0xff]
        %v1602 = vld [vmem:[#allocation8 + $0x3c8] sm:$0xff]
        %v1603 = vld [vmem:[#allocation8 + $0x3d0] sm:$0xff]
        %v1604 = vld [vmem:[#allocation8 + $0x3d8] sm:$0xff]
        %v1605 = vld [vmem:[#allocation8 + $0x3e0] sm:$0xff]
        %v1606 = vld [vmem:[#allocation8 + $0x3e8] sm:$0xff]
        %v1607 = vld [vmem:[#allocation8 + $0x3f0] sm:$0xff]
        %v1608 = vld [vmem:[#allocation8 + $0x3f8] sm:$0xff]
        %v1609 = vld [vmem:[#allocation8 + $0x400] sm:$0xff]
        %v1610 = vld [vmem:[#allocation8 + $0x408] sm:$0xff]
        %v1611 = vld [vmem:[#allocation8 + $0x410] sm:$0xff]
        %v1612 = vld [vmem:[#allocation8 + $0x418] sm:$0xff]
        %v1613 = vld [vmem:[#allocation8 + $0x420] sm:$0xff]
        %v1614 = vld [vmem:[#allocation8 + $0x428] sm:$0xff]
        %v1615 = vld [vmem:[#allocation8 + $0x430] sm:$0xff]
        %v1616 = vld [vmem:[#allocation8 + $0x438] sm:$0xff]
        %v1617 = vld [vmem:[#allocation8 + $0x440] sm:$0xff]
        %v1618 = vld [vmem:[#allocation8 + $0x448] sm:$0xff]
        %v1619 = vld [vmem:[#allocation8 + $0x450] sm:$0xff]
        %v1620 = vld [vmem:[#allocation8 + $0x458] sm:$0xff]
        %v1621 = vld [vmem:[#allocation8 + $0x460] sm:$0xff]
        %v1622 = vld [vmem:[#allocation8 + $0x468] sm:$0xff]
        %v1623 = vld [vmem:[#allocation8 + $0x470] sm:$0xff]
        %v1624 = vld [vmem:[#allocation8 + $0x478] sm:$0xff]
        %1625 = vmatprep.subr.mxu0 0.0
        %1626 = vmatpush1.msra.mxu0 %v1481
        %1627 = vmatprep.subr.mxu0 0.0
        %1628 = vmatpush1.msra.mxu0 %v1482
        %1629 = vmatprep.subr.mxu0 0.0
        %1630 = vmatpush1.msra.mxu0 %v1483
        %1631 = vmatprep.subr.mxu0 0.0
        %1632 = vmatpush1.msra.mxu0 %v1484
        %1633 = vmatprep.subr.mxu0 0.0
        %1634 = vmatpush1.msra.mxu0 %v1485
        %1635 = vmatprep.subr.mxu0 0.0
        %1636 = vmatpush1.msra.mxu0 %v1486
        %1637 = vmatprep.subr.mxu0 0.0
        %1638 = vmatpush1.msra.mxu0 %v1487
        %1639 = vmatprep.subr.mxu0 0.0
        %1640 = vmatpush1.msra.mxu0 %v1488
        %1641 = vmatprep.subr.mxu0 0.0
        %1642 = vmatpush1.msra.mxu0 %v1489
        %1643 = vmatprep.subr.mxu0 0.0
        %1644 = vmatpush1.msra.mxu0 %v1490
        %1645 = vmatprep.subr.mxu0 0.0
        %1646 = vmatpush1.msra.mxu0 %v1491
        %1647 = vmatprep.subr.mxu0 0.0
        %1648 = vmatpush1.msra.mxu0 %v1492
        %1649 = vmatprep.subr.mxu0 0.0
        %1650 = vmatpush1.msra.mxu0 %v1493
        %1651 = vmatprep.subr.mxu0 0.0
        %1652 = vmatpush1.msra.mxu0 %v1494
        %1653 = vmatprep.subr.mxu0 0.0
        %1654 = vmatpush1.msra.mxu0 %v1495
        %1655 = vmatprep.subr.mxu0 0.0
        %1656 = vmatpush1.msra.mxu0 %v1496
        %1657 = vmatprep.subr.mxu0 0.0
        %1658 = vmatpush1.msra.mxu0 %v1497
        %1659 = vmatprep.subr.mxu0 0.0
        %1660 = vmatpush1.msra.mxu0 %v1498
        %1661 = vmatprep.subr.mxu0 0.0
        %1662 = vmatpush1.msra.mxu0 %v1499
        %1663 = vmatprep.subr.mxu0 0.0
        %1664 = vmatpush1.msra.mxu0 %v1500
        %1665 = vmatprep.subr.mxu0 0.0
        %1666 = vmatpush1.msra.mxu0 %v1501
        %1667 = vmatprep.subr.mxu0 0.0
        %1668 = vmatpush1.msra.mxu0 %v1502
        %1669 = vmatprep.subr.mxu0 0.0
        %1670 = vmatpush1.msra.mxu0 %v1503
        %1671 = vmatprep.subr.mxu0 0.0
        %1672 = vmatpush1.msra.mxu0 %v1504
        %1673 = vmatprep.subr.mxu0 0.0
        %1674 = vmatpush1.msra.mxu0 %v1505
        %1675 = vmatprep.subr.mxu0 0.0
        %1676 = vmatpush1.msra.mxu0 %v1506
        %1677 = vmatprep.subr.mxu0 0.0
        %1678 = vmatpush1.msra.mxu0 %v1507
        %1679 = vmatprep.subr.mxu0 0.0
        %1680 = vmatpush1.msra.mxu0 %v1508
        %1681 = vmatprep.subr.mxu0 0.0
        %1682 = vmatpush1.msra.mxu0 %v1509
        %1683 = vmatprep.subr.mxu0 0.0
        %1684 = vmatpush1.msra.mxu0 %v1510
        %1685 = vmatprep.subr.mxu0 0.0
        %1686 = vmatpush1.msra.mxu0 %v1511
        %1687 = vmatprep.subr.mxu0 0.0
        %1688 = vmatpush1.msra.mxu0 %v1512
        %1689 = vmatprep.mubr.f32.mxu0 %v1224
        %1690 = vmatmul.mubr.f32.gmra.mrb[0].mxu0 %v1119
        %v1691 = vpop.f32.mrb[0].mxu0
        %v1692 = vadd.f32 0.0, %v1691
        %v1693 = vpop.f32.mrb[0].mxu0
        %1694 = vmatprep.mubr.f32.mxu0 %v1226
        %1695 = vmatmul.mubr.f32.gmra.mrb[0].mxu0 %v1120
        %v1696 = vpop.f32.mrb[0].mxu0
        %v1697 = vadd.f32 0.0, %v1696
        %v1698 = vpop.f32.mrb[0].mxu0
        %1699 = vmatprep.mubr.f32.mxu0 %v1229
        %1700 = vmatmul.mubr.f32.gmra.mrb[0].mxu0 %v1122
        %v1701 = vpop.f32.mrb[0].mxu0
        %v1702 = vadd.f32 0.0, %v1701
        %v1703 = vpop.f32.mrb[0].mxu0
        %1704 = vmatprep.mubr.f32.mxu0 %v1231
        %1705 = vmatmul.mubr.f32.gmra.mrb[0].mxu0 %v1123
        %v1706 = vpop.f32.mrb[0].mxu0
        %v1707 = vadd.f32 0.0, %v1706
        %v1708 = vpop.f32.mrb[0].mxu0
        %1709 = vmatprep.mubr.f32.mxu0 %v1234
        %1710 = vmatmul.mubr.f32.gmra.mrb[0].mxu0 %v1125
        %v1711 = vpop.f32.mrb[0].mxu0
        %v1712 = vadd.f32 0.0, %v1711
        %v1713 = vpop.f32.mrb[0].mxu0
        %1714 = vmatprep.mubr.f32.mxu0 %v1236
        %1715 = vmatmul.mubr.f32.gmra.mrb[0].mxu0 %v1126
        %v1716 = vpop.f32.mrb[0].mxu0
        %v1717 = vadd.f32 0.0, %v1716
        %v1718 = vpop.f32.mrb[0].mxu0
        %1719 = vmatprep.mubr.f32.mxu0 %v1239
        %1720 = vmatmul.mubr.f32.gmra.mrb[0].mxu0 %v1128
        %v1721 = vpop.f32.mrb[0].mxu0
        %v1722 = vadd.f32 0.0, %v1721
        %v1723 = vpop.f32.mrb[0].mxu0
        %1724 = vmatprep.mubr.f32.mxu0 %v1241
        %1725 = vmatmul.mubr.f32.gmra.mrb[0].mxu0 %v1129
        %v1726 = vpop.f32.mrb[0].mxu0
        %v1727 = vadd.f32 0.0, %v1726
        %v1728 = vpop.f32.mrb[0].mxu0
        %1729 = vmatprep.mubr.f32.mxu0 %v1244
        %1730 = vmatmul.mubr.f32.gmra.mrb[0].mxu0 %v1131
        %v1731 = vpop.f32.mrb[0].mxu0
        %v1732 = vadd.f32 0.0, %v1731
        %v1733 = vpop.f32.mrb[0].mxu0
        %1734 = vmatprep.mubr.f32.mxu0 %v1246
        %1735 = vmatmul.mubr.f32.gmra.mrb[0].mxu0 %v1132
        %v1736 = vpop.f32.mrb[0].mxu0
        %v1737 = vadd.f32 0.0, %v1736
        %v1738 = vpop.f32.mrb[0].mxu0
        %1739 = vmatprep.mubr.f32.mxu0 %v1249
        %1740 = vmatmul.mubr.f32.gmra.mrb[0].mxu0 %v1134
        %v1741 = vpop.f32.mrb[0].mxu0
        %v1742 = vadd.f32 0.0, %v1741
        %v1743 = vpop.f32.mrb[0].mxu0
        %1744 = vmatprep.mubr.f32.mxu0 %v1251
        %1745 = vmatmul.mubr.f32.gmra.mrb[0].mxu0 %v1135
        %v1746 = vpop.f32.mrb[0].mxu0
        %v1747 = vadd.f32 0.0, %v1746
        %v1748 = vpop.f32.mrb[0].mxu0
        %1749 = vmatprep.mubr.f32.mxu0 %v1254
        %1750 = vmatmul.mubr.f32.gmra.mrb[0].mxu0 %v1137
        %v1751 = vpop.f32.mrb[0].mxu0
        %v1752 = vadd.f32 0.0, %v1751
        %v1753 = vpop.f32.mrb[0].mxu0
        %1754 = vmatprep.mubr.f32.mxu0 %v1256
        %1755 = vmatmul.mubr.f32.gmra.mrb[0].mxu0 %v1138
        %v1756 = vpop.f32.mrb[0].mxu0
        %v1757 = vadd.f32 0.0, %v1756
        %v1758 = vpop.f32.mrb[0].mxu0
        %1759 = vmatprep.mubr.f32.mxu0 %v1259
        %1760 = vmatmul.mubr.f32.gmra.mrb[0].mxu0 %v1140
        %v1761 = vpop.f32.mrb[0].mxu0
        %v1762 = vadd.f32 0.0, %v1761
        %v1763 = vpop.f32.mrb[0].mxu0
        %1764 = vmatprep.mubr.f32.mxu0 %v1261
        %1765 = vmatmul.mubr.f32.gmra.mrb[0].mxu0 %v1141
        %v1766 = vpop.f32.mrb[0].mxu0
        %v1767 = vadd.f32 0.0, %v1766
        %v1768 = vpop.f32.mrb[0].mxu0
        %1769 = vmatprep.mubr.f32.mxu0 %v1264
        %1770 = vmatmul.mubr.f32.gmra.mrb[0].mxu0 %v1143
        %v1771 = vpop.f32.mrb[0].mxu0
        %v1772 = vadd.f32 0.0, %v1771
        %v1773 = vpop.f32.mrb[0].mxu0
        %1774 = vmatprep.mubr.f32.mxu0 %v1266
        %1775 = vmatmul.mubr.f32.gmra.mrb[0].mxu0 %v1144
        %v1776 = vpop.f32.mrb[0].mxu0
        %v1777 = vadd.f32 0.0, %v1776
        %v1778 = vpop.f32.mrb[0].mxu0
        %1779 = vmatprep.mubr.f32.mxu0 %v1269
        %1780 = vmatmul.mubr.f32.gmra.mrb[0].mxu0 %v1146
        %v1781 = vpop.f32.mrb[0].mxu0
        %v1782 = vadd.f32 0.0, %v1781
        %v1783 = vpop.f32.mrb[0].mxu0
        %1784 = vmatprep.mubr.f32.mxu0 %v1271
        %1785 = vmatmul.mubr.f32.gmra.mrb[0].mxu0 %v1147
        %v1786 = vpop.f32.mrb[0].mxu0
        %v1787 = vadd.f32 0.0, %v1786
        %v1788 = vpop.f32.mrb[0].mxu0
        %1789 = vmatprep.mubr.f32.mxu0 %v1274
        %1790 = vmatmul.mubr.f32.gmra.mrb[0].mxu0 %v1149
        %v1791 = vpop.f32.mrb[0].mxu0
        %v1792 = vadd.f32 0.0, %v1791
        %v1793 = vpop.f32.mrb[0].mxu0
        %1794 = vmatprep.mubr.f32.mxu0 %v1276
        %1795 = vmatmul.mubr.f32.gmra.mrb[0].mxu0 %v1150
        %v1796 = vpop.f32.mrb[0].mxu0
        %v1797 = vadd.f32 0.0, %v1796
        %v1798 = vpop.f32.mrb[0].mxu0
        %1799 = vmatprep.mubr.f32.mxu0 %v1279
        %1800 = vmatmul.mubr.f32.gmra.mrb[0].mxu0 %v1152
        %v1801 = vpop.f32.mrb[0].mxu0
        %v1802 = vadd.f32 0.0, %v1801
        %v1803 = vpop.f32.mrb[0].mxu0
        %1804 = vmatprep.mubr.f32.mxu0 %v1281
        %1805 = vmatmul.mubr.f32.gmra.mrb[0].mxu0 %v1153
        %v1806 = vpop.f32.mrb[0].mxu0
        %v1807 = vadd.f32 0.0, %v1806
        %v1808 = vpop.f32.mrb[0].mxu0
        %1809 = vmatprep.mubr.f32.mxu0 %v1284
        %1810 = vmatmul.mubr.f32.gmra.mrb[0].mxu0 %v1155
        %v1811 = vpop.f32.mrb[0].mxu0
        %v1812 = vadd.f32 0.0, %v1811
        %v1813 = vpop.f32.mrb[0].mxu0
        %1814 = vmatprep.mubr.f32.mxu0 %v1286
        %1815 = vmatmul.mubr.f32.gmra.mrb[0].mxu0 %v1156
        %v1816 = vpop.f32.mrb[0].mxu0
        %v1817 = vadd.f32 0.0, %v1816
        %v1818 = vpop.f32.mrb[0].mxu0
        %1819 = vmatprep.mubr.f32.mxu0 %v1289
        %1820 = vmatmul.mubr.f32.gmra.mrb[0].mxu0 %v1158
        %v1821 = vpop.f32.mrb[0].mxu0
        %v1822 = vadd.f32 0.0, %v1821
        %v1823 = vpop.f32.mrb[0].mxu0
        %1824 = vmatprep.mubr.f32.mxu0 %v1291
        %1825 = vmatmul.mubr.f32.gmra.mrb[0].mxu0 %v1159
        %v1826 = vpop.f32.mrb[0].mxu0
        %v1827 = vadd.f32 0.0, %v1826
        %v1828 = vpop.f32.mrb[0].mxu0
        %1829 = vmatprep.mubr.f32.mxu0 %v1294
        %1830 = vmatmul.mubr.f32.gmra.mrb[0].mxu0 %v1161
        %v1831 = vpop.f32.mrb[0].mxu0
        %v1832 = vadd.f32 0.0, %v1831
        %v1833 = vpop.f32.mrb[0].mxu0
        %1834 = vmatprep.mubr.f32.mxu0 %v1296
        %1835 = vmatmul.mubr.f32.gmra.mrb[0].mxu0 %v1162
        %v1836 = vpop.f32.mrb[0].mxu0
        %v1837 = vadd.f32 0.0, %v1836
        %v1838 = vpop.f32.mrb[0].mxu0
        %1839 = vmatprep.mubr.f32.mxu0 %v1299
        %1840 = vmatmul.mubr.f32.gmra.mrb[0].mxu0 %v1164
        %v1841 = vpop.f32.mrb[0].mxu0
        %v1842 = vadd.f32 0.0, %v1841
        %v1843 = vpop.f32.mrb[0].mxu0
        %1844 = vmatprep.mubr.f32.mxu0 %v1301
        %1845 = vmatmul.mubr.f32.gmra.mrb[0].mxu0 %v1165
        %v1846 = vpop.f32.mrb[0].mxu0
        %v1847 = vadd.f32 0.0, %v1846
        %v1848 = vpop.f32.mrb[0].mxu0
        %1849 = vdwg.mxu0
        %1850 = vmatprep.subr.mxu0 0.0
        %1851 = vmatpush1.msra.mxu0 %v1513
        %1852 = vmatprep.subr.mxu0 0.0
        %1853 = vmatpush1.msra.mxu0 %v1514
        %1854 = vmatprep.subr.mxu0 0.0
        %1855 = vmatpush1.msra.mxu0 %v1515
        %1856 = vmatprep.subr.mxu0 0.0
        %1857 = vmatpush1.msra.mxu0 %v1516
        %1858 = vmatprep.subr.mxu0 0.0
        %1859 = vmatpush1.msra.mxu0 %v1517
        %1860 = vmatprep.subr.mxu0 0.0
        %1861 = vmatpush1.msra.mxu0 %v1518
        %1862 = vmatprep.subr.mxu0 0.0
        %1863 = vmatpush1.msra.mxu0 %v1519
        %1864 = vmatprep.subr.mxu0 0.0
        %1865 = vmatpush1.msra.mxu0 %v1520
        %1866 = vmatprep.subr.mxu0 0.0
        %1867 = vmatpush1.msra.mxu0 %v1521
        %1868 = vmatprep.subr.mxu0 0.0
        %1869 = vmatpush1.msra.mxu0 %v1522
        %1870 = vmatprep.subr.mxu0 0.0
        %1871 = vmatpush1.msra.mxu0 %v1523
        %1872 = vmatprep.subr.mxu0 0.0
        %1873 = vmatpush1.msra.mxu0 %v1524
        %1874 = vmatprep.subr.mxu0 0.0
        %1875 = vmatpush1.msra.mxu0 %v1525
        %1876 = vmatprep.subr.mxu0 0.0
        %1877 = vmatpush1.msra.mxu0 %v1526
        %1878 = vmatprep.subr.mxu0 0.0
        %1879 = vmatpush1.msra.mxu0 %v1527
        %1880 = vmatprep.subr.mxu0 0.0
        %1881 = vmatpush1.msra.mxu0 %v1528
        %1882 = vmatprep.subr.mxu0 0.0
        %1883 = vmatpush1.msra.mxu0 %v1529
        %1884 = vmatprep.subr.mxu0 0.0
        %1885 = vmatpush1.msra.mxu0 %v1530
        %1886 = vmatprep.subr.mxu0 0.0
        %1887 = vmatpush1.msra.mxu0 %v1531
        %1888 = vmatprep.subr.mxu0 0.0
        %1889 = vmatpush1.msra.mxu0 %v1532
        %1890 = vmatprep.subr.mxu0 0.0
        %1891 = vmatpush1.msra.mxu0 %v1533
        %1892 = vmatprep.subr.mxu0 0.0
        %1893 = vmatpush1.msra.mxu0 %v1534
        %1894 = vmatprep.subr.mxu0 0.0
        %1895 = vmatpush1.msra.mxu0 %v1535
        %1896 = vmatprep.subr.mxu0 0.0
        %1897 = vmatpush1.msra.mxu0 %v1536
        %1898 = vmatprep.subr.mxu0 0.0
        %1899 = vmatpush1.msra.mxu0 %v1537
        %1900 = vmatprep.subr.mxu0 0.0
        %1901 = vmatpush1.msra.mxu0 %v1538
        %1902 = vmatprep.subr.mxu0 0.0
        %1903 = vmatpush1.msra.mxu0 %v1539
        %1904 = vmatprep.subr.mxu0 0.0
        %1905 = vmatpush1.msra.mxu0 %v1540
        %1906 = vmatprep.subr.mxu0 0.0
        %1907 = vmatpush1.msra.mxu0 %v1541
        %1908 = vmatprep.subr.mxu0 0.0
        %1909 = vmatpush1.msra.mxu0 %v1542
        %1910 = vmatprep.subr.mxu0 0.0
        %1911 = vmatpush1.msra.mxu0 %v1543
        %1912 = vmatprep.subr.mxu0 0.0
        %1913 = vmatpush1.msra.mxu0 %v1544
        %1914 = vmatprep.mubr.f32.mxu0 %v1122
        %1915 = vmatmul.mubr.f32.gmra.mrb[0].mxu0 %v1337
        %v1916 = vpop.f32.mrb[0].mxu0
        %v1917 = vadd.f32 %v1692, %v1916
        %v1918 = vpop.f32.mrb[0].mxu0
        %1919 = vmatprep.mubr.f32.mxu0 %v1123
        %1920 = vmatmul.mubr.f32.gmra.mrb[0].mxu0 %v1339
        %v1921 = vpop.f32.mrb[0].mxu0
        %v1922 = vadd.f32 %v1697, %v1921
        %v1923 = vpop.f32.mrb[0].mxu0
        %1924 = vmatprep.mubr.f32.mxu0 %v1125
        %1925 = vmatmul.mubr.f32.gmra.mrb[0].mxu0 %v1342
        %v1926 = vpop.f32.mrb[0].mxu0
        %v1927 = vadd.f32 %v1702, %v1926
        %v1928 = vpop.f32.mrb[0].mxu0
        %1929 = vmatprep.mubr.f32.mxu0 %v1126
        %1930 = vmatmul.mubr.f32.gmra.mrb[0].mxu0 %v1344
        %v1931 = vpop.f32.mrb[0].mxu0
        %v1932 = vadd.f32 %v1707, %v1931
        %v1933 = vpop.f32.mrb[0].mxu0
        %1934 = vmatprep.mubr.f32.mxu0 %v1128
        %1935 = vmatmul.mubr.f32.gmra.mrb[0].mxu0 %v1347
        %v1936 = vpop.f32.mrb[0].mxu0
        %v1937 = vadd.f32 %v1712, %v1936
        %v1938 = vpop.f32.mrb[0].mxu0
        %1939 = vmatprep.mubr.f32.mxu0 %v1129
        %1940 = vmatmul.mubr.f32.gmra.mrb[0].mxu0 %v1349
        %v1941 = vpop.f32.mrb[0].mxu0
        %v1942 = vadd.f32 %v1717, %v1941
        %v1943 = vpop.f32.mrb[0].mxu0
        %1944 = vmatprep.mubr.f32.mxu0 %v1131
        %1945 = vmatmul.mubr.f32.gmra.mrb[0].mxu0 %v1352
        %v1946 = vpop.f32.mrb[0].mxu0
        %v1947 = vadd.f32 %v1722, %v1946
        %v1948 = vpop.f32.mrb[0].mxu0
        %1949 = vmatprep.mubr.f32.mxu0 %v1132
        %1950 = vmatmul.mubr.f32.gmra.mrb[0].mxu0 %v1354
        %v1951 = vpop.f32.mrb[0].mxu0
        %v1952 = vadd.f32 %v1727, %v1951
        %v1953 = vpop.f32.mrb[0].mxu0
        %1954 = vmatprep.mubr.f32.mxu0 %v1134
        %1955 = vmatmul.mubr.f32.gmra.mrb[0].mxu0 %v1357
        %v1956 = vpop.f32.mrb[0].mxu0
        %v1957 = vadd.f32 %v1732, %v1956
        %v1958 = vpop.f32.mrb[0].mxu0
        %1959 = vmatprep.mubr.f32.mxu0 %v1135
        %1960 = vmatmul.mubr.f32.gmra.mrb[0].mxu0 %v1359
        %v1961 = vpop.f32.mrb[0].mxu0
        %v1962 = vadd.f32 %v1737, %v1961
        %v1963 = vpop.f32.mrb[0].mxu0
        %1964 = vmatprep.mubr.f32.mxu0 %v1137
        %1965 = vmatmul.mubr.f32.gmra.mrb[0].mxu0 %v1362
        %v1966 = vpop.f32.mrb[0].mxu0
        %v1967 = vadd.f32 %v1742, %v1966
        %v1968 = vpop.f32.mrb[0].mxu0
        %1969 = vmatprep.mubr.f32.mxu0 %v1138
        %1970 = vmatmul.mubr.f32.gmra.mrb[0].mxu0 %v1364
        %v1971 = vpop.f32.mrb[0].mxu0
        %v1972 = vadd.f32 %v1747, %v1971
        %v1973 = vpop.f32.mrb[0].mxu0
        %1974 = vmatprep.mubr.f32.mxu0 %v1140
        %1975 = vmatmul.mubr.f32.gmra.mrb[0].mxu0 %v1367
        %v1976 = vpop.f32.mrb[0].mxu0
        %v1977 = vadd.f32 %v1752, %v1976
        %v1978 = vpop.f32.mrb[0].mxu0
        %1979 = vmatprep.mubr.f32.mxu0 %v1141
        %1980 = vmatmul.mubr.f32.gmra.mrb[0].mxu0 %v1369
        %v1981 = vpop.f32.mrb[0].mxu0
        %v1982 = vadd.f32 %v1757, %v1981
        %v1983 = vpop.f32.mrb[0].mxu0
        %1984 = vmatprep.mubr.f32.mxu0 %v1143
        %1985 = vmatmul.mubr.f32.gmra.mrb[0].mxu0 %v1372
        %v1986 = vpop.f32.mrb[0].mxu0
        %v1987 = vadd.f32 %v1762, %v1986
        %v1988 = vpop.f32.mrb[0].mxu0
        %1989 = vmatprep.mubr.f32.mxu0 %v1144
        %1990 = vmatmul.mubr.f32.gmra.mrb[0].mxu0 %v1374
        %v1991 = vpop.f32.mrb[0].mxu0
        %v1992 = vadd.f32 %v1767, %v1991
        %v1993 = vpop.f32.mrb[0].mxu0
        %1994 = vmatprep.mubr.f32.mxu0 %v1146
        %1995 = vmatmul.mubr.f32.gmra.mrb[0].mxu0 %v1377
        %v1996 = vpop.f32.mrb[0].mxu0
        %v1997 = vadd.f32 %v1772, %v1996
        %v1998 = vpop.f32.mrb[0].mxu0
        %1999 = vmatprep.mubr.f32.mxu0 %v1147
        %2000 = vmatmul.mubr.f32.gmra.mrb[0].mxu0 %v1379
        %v2001 = vpop.f32.mrb[0].mxu0
        %v2002 = vadd.f32 %v1777, %v2001
        %v2003 = vpop.f32.mrb[0].mxu0
        %2004 = vmatprep.mubr.f32.mxu0 %v1149
        %2005 = vmatmul.mubr.f32.gmra.mrb[0].mxu0 %v1382
        %v2006 = vpop.f32.mrb[0].mxu0
        %v2007 = vadd.f32 %v1782, %v2006
        %v2008 = vpop.f32.mrb[0].mxu0
        %2009 = vmatprep.mubr.f32.mxu0 %v1150
        %2010 = vmatmul.mubr.f32.gmra.mrb[0].mxu0 %v1384
        %v2011 = vpop.f32.mrb[0].mxu0
        %v2012 = vadd.f32 %v1787, %v2011
        %v2013 = vpop.f32.mrb[0].mxu0
        %2014 = vmatprep.mubr.f32.mxu0 %v1152
        %2015 = vmatmul.mubr.f32.gmra.mrb[0].mxu0 %v1387
        %v2016 = vpop.f32.mrb[0].mxu0
        %v2017 = vadd.f32 %v1792, %v2016
        %v2018 = vpop.f32.mrb[0].mxu0
        %2019 = vmatprep.mubr.f32.mxu0 %v1153
        %2020 = vmatmul.mubr.f32.gmra.mrb[0].mxu0 %v1389
        %v2021 = vpop.f32.mrb[0].mxu0
        %v2022 = vadd.f32 %v1797, %v2021
        %v2023 = vpop.f32.mrb[0].mxu0
        %2024 = vmatprep.mubr.f32.mxu0 %v1155
        %2025 = vmatmul.mubr.f32.gmra.mrb[0].mxu0 %v1392
        %v2026 = vpop.f32.mrb[0].mxu0
        %v2027 = vadd.f32 %v1802, %v2026
        %v2028 = vpop.f32.mrb[0].mxu0
        %2029 = vmatprep.mubr.f32.mxu0 %v1156
        %2030 = vmatmul.mubr.f32.gmra.mrb[0].mxu0 %v1394
        %v2031 = vpop.f32.mrb[0].mxu0
        %v2032 = vadd.f32 %v1807, %v2031
        %v2033 = vpop.f32.mrb[0].mxu0
        %2034 = vmatprep.mubr.f32.mxu0 %v1158
        %2035 = vmatmul.mubr.f32.gmra.mrb[0].mxu0 %v1397
        %v2036 = vpop.f32.mrb[0].mxu0
        %v2037 = vadd.f32 %v1812, %v2036
        %v2038 = vpop.f32.mrb[0].mxu0
        %2039 = vmatprep.mubr.f32.mxu0 %v1159
        %2040 = vmatmul.mubr.f32.gmra.mrb[0].mxu0 %v1399
        %v2041 = vpop.f32.mrb[0].mxu0
        %v2042 = vadd.f32 %v1817, %v2041
        %v2043 = vpop.f32.mrb[0].mxu0
        %2044 = vmatprep.mubr.f32.mxu0 %v1161
        %2045 = vmatmul.mubr.f32.gmra.mrb[0].mxu0 %v1402
        %v2046 = vpop.f32.mrb[0].mxu0
        %v2047 = vadd.f32 %v1822, %v2046
        %v2048 = vpop.f32.mrb[0].mxu0
        %2049 = vmatprep.mubr.f32.mxu0 %v1162
        %2050 = vmatmul.mubr.f32.gmra.mrb[0].mxu0 %v1404
        %v2051 = vpop.f32.mrb[0].mxu0
        %v2052 = vadd.f32 %v1827, %v2051
        %v2053 = vpop.f32.mrb[0].mxu0
        %2054 = vmatprep.mubr.f32.mxu0 %v1164
        %2055 = vmatmul.mubr.f32.gmra.mrb[0].mxu0 %v1407
        %v2056 = vpop.f32.mrb[0].mxu0
        %v2057 = vadd.f32 %v1832, %v2056
        %v2058 = vpop.f32.mrb[0].mxu0
        %2059 = vmatprep.mubr.f32.mxu0 %v1165
        %2060 = vmatmul.mubr.f32.gmra.mrb[0].mxu0 %v1409
        %v2061 = vpop.f32.mrb[0].mxu0
        %v2062 = vadd.f32 %v1837, %v2061
        %v2063 = vpop.f32.mrb[0].mxu0
        %2064 = vmatprep.mubr.f32.mxu0 %v1167
        %2065 = vmatmul.mubr.f32.gmra.mrb[0].mxu0 %v1412
        %v2066 = vpop.f32.mrb[0].mxu0
        %v2067 = vadd.f32 %v1842, %v2066
        %v2068 = vpop.f32.mrb[0].mxu0
        %2069 = vmatprep.mubr.f32.mxu0 %v1168
        %2070 = vmatmul.mubr.f32.gmra.mrb[0].mxu0 %v1414
        %v2071 = vpop.f32.mrb[0].mxu0
        %v2072 = vadd.f32 %v1847, %v2071
        %v2073 = vpop.f32.mrb[0].mxu0
        %2074 = vdwg.mxu0
        %2075 = vmatprep.subr.mxu0 0.0
        %2076 = vmatpush1.msra.mxu0 %v1545
        %2077 = vmatprep.subr.mxu0 0.0
        %2078 = vmatpush1.msra.mxu0 %v1546
        %2079 = vmatprep.subr.mxu0 0.0
        %2080 = vmatpush1.msra.mxu0 %v1547
        %2081 = vmatprep.subr.mxu0 0.0
        %2082 = vmatpush1.msra.mxu0 %v1548
        %2083 = vmatprep.subr.mxu0 0.0
        %2084 = vmatpush1.msra.mxu0 %v1549
        %2085 = vmatprep.subr.mxu0 0.0
        %2086 = vmatpush1.msra.mxu0 %v1550
        %2087 = vmatprep.subr.mxu0 0.0
        %2088 = vmatpush1.msra.mxu0 %v1551
        %2089 = vmatprep.subr.mxu0 0.0
        %2090 = vmatpush1.msra.mxu0 %v1552
        %2091 = vmatprep.subr.mxu0 0.0
        %2092 = vmatpush1.msra.mxu0 %v1553
        %2093 = vmatprep.subr.mxu0 0.0
        %2094 = vmatpush1.msra.mxu0 %v1554
        %2095 = vmatprep.subr.mxu0 0.0
        %2096 = vmatpush1.msra.mxu0 %v1555
        %2097 = vmatprep.subr.mxu0 0.0
        %2098 = vmatpush1.msra.mxu0 %v1556
        %2099 = vmatprep.subr.mxu0 0.0
        %2100 = vmatpush1.msra.mxu0 %v1557
        %2101 = vmatprep.subr.mxu0 0.0
        %2102 = vmatpush1.msra.mxu0 %v1558
        %2103 = vmatprep.subr.mxu0 0.0
        %2104 = vmatpush1.msra.mxu0 %v1559
        %2105 = vmatprep.subr.mxu0 0.0
        %2106 = vmatpush1.msra.mxu0 %v1560
        %2107 = vmatprep.subr.mxu0 0.0
        %2108 = vmatpush1.msra.mxu0 %v1561
        %2109 = vmatprep.subr.mxu0 0.0
        %2110 = vmatpush1.msra.mxu0 %v1562
        %2111 = vmatprep.subr.mxu0 0.0
        %2112 = vmatpush1.msra.mxu0 %v1563
        %2113 = vmatprep.subr.mxu0 0.0
        %2114 = vmatpush1.msra.mxu0 %v1564
        %2115 = vmatprep.subr.mxu0 0.0
        %2116 = vmatpush1.msra.mxu0 %v1565
        %2117 = vmatprep.subr.mxu0 0.0
        %2118 = vmatpush1.msra.mxu0 %v1566
        %2119 = vmatprep.subr.mxu0 0.0
        %2120 = vmatpush1.msra.mxu0 %v1567
        %2121 = vmatprep.subr.mxu0 0.0
        %2122 = vmatpush1.msra.mxu0 %v1568
        %2123 = vmatprep.subr.mxu0 0.0
        %2124 = vmatpush1.msra.mxu0 %v1569
        %2125 = vmatprep.subr.mxu0 0.0
        %2126 = vmatpush1.msra.mxu0 %v1570
        %2127 = vmatprep.subr.mxu0 0.0
        %2128 = vmatpush1.msra.mxu0 %v1571
        %2129 = vmatprep.subr.mxu0 0.0
        %2130 = vmatpush1.msra.mxu0 %v1572
        %2131 = vmatprep.subr.mxu0 0.0
        %2132 = vmatpush1.msra.mxu0 %v1573
        %2133 = vmatprep.subr.mxu0 0.0
        %2134 = vmatpush1.msra.mxu0 %v1574
        %2135 = vmatprep.subr.mxu0 0.0
        %2136 = vmatpush1.msra.mxu0 %v1575
        %2137 = vmatprep.subr.mxu0 0.0
        %2138 = vmatpush1.msra.mxu0 %v1576
        %2139 = vmatprep.mubr.f32.mxu0 %v1342
        %2140 = vmatmul.mubr.f32.gmra.mrb[0].mxu0 %v1229
        %v2141 = vpop.f32.mrb[0].mxu0
        %v2142 = vadd.f32 %v1917, %v2141
        %v2143 = vpop.f32.mrb[0].mxu0
        %2144 = vmatprep.mubr.f32.mxu0 %v1344
        %2145 = vmatmul.mubr.f32.gmra.mrb[0].mxu0 %v1231
        %v2146 = vpop.f32.mrb[0].mxu0
        %v2147 = vadd.f32 %v1922, %v2146
        %v2148 = vpop.f32.mrb[0].mxu0
        %2149 = vmatprep.mubr.f32.mxu0 %v1347
        %2150 = vmatmul.mubr.f32.gmra.mrb[0].mxu0 %v1234
        %v2151 = vpop.f32.mrb[0].mxu0
        %v2152 = vadd.f32 %v1927, %v2151
        %v2153 = vpop.f32.mrb[0].mxu0
        %2154 = vmatprep.mubr.f32.mxu0 %v1349
        %2155 = vmatmul.mubr.f32.gmra.mrb[0].mxu0 %v1236
        %v2156 = vpop.f32.mrb[0].mxu0
        %v2157 = vadd.f32 %v1932, %v2156
        %v2158 = vpop.f32.mrb[0].mxu0
        %2159 = vmatprep.mubr.f32.mxu0 %v1352
        %2160 = vmatmul.mubr.f32.gmra.mrb[0].mxu0 %v1239
        %v2161 = vpop.f32.mrb[0].mxu0
        %v2162 = vadd.f32 %v1937, %v2161
        %v2163 = vpop.f32.mrb[0].mxu0
        %2164 = vmatprep.mubr.f32.mxu0 %v1354
        %2165 = vmatmul.mubr.f32.gmra.mrb[0].mxu0 %v1241
        %v2166 = vpop.f32.mrb[0].mxu0
        %v2167 = vadd.f32 %v1942, %v2166
        %v2168 = vpop.f32.mrb[0].mxu0
        %2169 = vmatprep.mubr.f32.mxu0 %v1357
        %2170 = vmatmul.mubr.f32.gmra.mrb[0].mxu0 %v1244
        %v2171 = vpop.f32.mrb[0].mxu0
        %v2172 = vadd.f32 %v1947, %v2171
        %v2173 = vpop.f32.mrb[0].mxu0
        %2174 = vmatprep.mubr.f32.mxu0 %v1359
        %2175 = vmatmul.mubr.f32.gmra.mrb[0].mxu0 %v1246
        %v2176 = vpop.f32.mrb[0].mxu0
        %v2177 = vadd.f32 %v1952, %v2176
        %v2178 = vpop.f32.mrb[0].mxu0
        %2179 = vmatprep.mubr.f32.mxu0 %v1362
        %2180 = vmatmul.mubr.f32.gmra.mrb[0].mxu0 %v1249
        %v2181 = vpop.f32.mrb[0].mxu0
        %v2182 = vadd.f32 %v1957, %v2181
        %v2183 = vpop.f32.mrb[0].mxu0
        %2184 = vmatprep.mubr.f32.mxu0 %v1364
        %2185 = vmatmul.mubr.f32.gmra.mrb[0].mxu0 %v1251
        %v2186 = vpop.f32.mrb[0].mxu0
        %v2187 = vadd.f32 %v1962, %v2186
        %v2188 = vpop.f32.mrb[0].mxu0
        %2189 = vmatprep.mubr.f32.mxu0 %v1367
        %2190 = vmatmul.mubr.f32.gmra.mrb[0].mxu0 %v1254
        %v2191 = vpop.f32.mrb[0].mxu0
        %v2192 = vadd.f32 %v1967, %v2191
        %v2193 = vpop.f32.mrb[0].mxu0
        %2194 = vmatprep.mubr.f32.mxu0 %v1369
        %2195 = vmatmul.mubr.f32.gmra.mrb[0].mxu0 %v1256
        %v2196 = vpop.f32.mrb[0].mxu0
        %v2197 = vadd.f32 %v1972, %v2196
        %v2198 = vpop.f32.mrb[0].mxu0
        %2199 = vmatprep.mubr.f32.mxu0 %v1372
        %2200 = vmatmul.mubr.f32.gmra.mrb[0].mxu0 %v1259
        %v2201 = vpop.f32.mrb[0].mxu0
        %v2202 = vadd.f32 %v1977, %v2201
        %v2203 = vpop.f32.mrb[0].mxu0
        %2204 = vmatprep.mubr.f32.mxu0 %v1374
        %2205 = vmatmul.mubr.f32.gmra.mrb[0].mxu0 %v1261
        %v2206 = vpop.f32.mrb[0].mxu0
        %v2207 = vadd.f32 %v1982, %v2206
        %v2208 = vpop.f32.mrb[0].mxu0
        %2209 = vmatprep.mubr.f32.mxu0 %v1377
        %2210 = vmatmul.mubr.f32.gmra.mrb[0].mxu0 %v1264
        %v2211 = vpop.f32.mrb[0].mxu0
        %v2212 = vadd.f32 %v1987, %v2211
        %v2213 = vpop.f32.mrb[0].mxu0
        %2214 = vmatprep.mubr.f32.mxu0 %v1379
        %2215 = vmatmul.mubr.f32.gmra.mrb[0].mxu0 %v1266
        %v2216 = vpop.f32.mrb[0].mxu0
        %v2217 = vadd.f32 %v1992, %v2216
        %v2218 = vpop.f32.mrb[0].mxu0
        %2219 = vmatprep.mubr.f32.mxu0 %v1382
        %2220 = vmatmul.mubr.f32.gmra.mrb[0].mxu0 %v1269
        %v2221 = vpop.f32.mrb[0].mxu0
        %v2222 = vadd.f32 %v1997, %v2221
        %v2223 = vpop.f32.mrb[0].mxu0
        %2224 = vmatprep.mubr.f32.mxu0 %v1384
        %2225 = vmatmul.mubr.f32.gmra.mrb[0].mxu0 %v1271
        %v2226 = vpop.f32.mrb[0].mxu0
        %v2227 = vadd.f32 %v2002, %v2226
        %v2228 = vpop.f32.mrb[0].mxu0
        %2229 = vmatprep.mubr.f32.mxu0 %v1387
        %2230 = vmatmul.mubr.f32.gmra.mrb[0].mxu0 %v1274
        %v2231 = vpop.f32.mrb[0].mxu0
        %v2232 = vadd.f32 %v2007, %v2231
        %v2233 = vpop.f32.mrb[0].mxu0
        %2234 = vmatprep.mubr.f32.mxu0 %v1389
        %2235 = vmatmul.mubr.f32.gmra.mrb[0].mxu0 %v1276
        %v2236 = vpop.f32.mrb[0].mxu0
        %v2237 = vadd.f32 %v2012, %v2236
        %v2238 = vpop.f32.mrb[0].mxu0
        %2239 = vmatprep.mubr.f32.mxu0 %v1392
        %2240 = vmatmul.mubr.f32.gmra.mrb[0].mxu0 %v1279
        %v2241 = vpop.f32.mrb[0].mxu0
        %v2242 = vadd.f32 %v2017, %v2241
        %v2243 = vpop.f32.mrb[0].mxu0
        %2244 = vmatprep.mubr.f32.mxu0 %v1394
        %2245 = vmatmul.mubr.f32.gmra.mrb[0].mxu0 %v1281
        %v2246 = vpop.f32.mrb[0].mxu0
        %v2247 = vadd.f32 %v2022, %v2246
        %v2248 = vpop.f32.mrb[0].mxu0
        %2249 = vmatprep.mubr.f32.mxu0 %v1397
        %2250 = vmatmul.mubr.f32.gmra.mrb[0].mxu0 %v1284
        %v2251 = vpop.f32.mrb[0].mxu0
        %v2252 = vadd.f32 %v2027, %v2251
        %v2253 = vpop.f32.mrb[0].mxu0
        %2254 = vmatprep.mubr.f32.mxu0 %v1399
        %2255 = vmatmul.mubr.f32.gmra.mrb[0].mxu0 %v1286
        %v2256 = vpop.f32.mrb[0].mxu0
        %v2257 = vadd.f32 %v2032, %v2256
        %v2258 = vpop.f32.mrb[0].mxu0
        %2259 = vmatprep.mubr.f32.mxu0 %v1402
        %2260 = vmatmul.mubr.f32.gmra.mrb[0].mxu0 %v1289
        %v2261 = vpop.f32.mrb[0].mxu0
        %v2262 = vadd.f32 %v2037, %v2261
        %v2263 = vpop.f32.mrb[0].mxu0
        %2264 = vmatprep.mubr.f32.mxu0 %v1404
        %2265 = vmatmul.mubr.f32.gmra.mrb[0].mxu0 %v1291
        %v2266 = vpop.f32.mrb[0].mxu0
        %v2267 = vadd.f32 %v2042, %v2266
        %v2268 = vpop.f32.mrb[0].mxu0
        %2269 = vmatprep.mubr.f32.mxu0 %v1407
        %2270 = vmatmul.mubr.f32.gmra.mrb[0].mxu0 %v1294
        %v2271 = vpop.f32.mrb[0].mxu0
        %v2272 = vadd.f32 %v2047, %v2271
        %v2273 = vpop.f32.mrb[0].mxu0
        %2274 = vmatprep.mubr.f32.mxu0 %v1409
        %2275 = vmatmul.mubr.f32.gmra.mrb[0].mxu0 %v1296
        %v2276 = vpop.f32.mrb[0].mxu0
        %v2277 = vadd.f32 %v2052, %v2276
        %v2278 = vpop.f32.mrb[0].mxu0
        %2279 = vmatprep.mubr.f32.mxu0 %v1412
        %2280 = vmatmul.mubr.f32.gmra.mrb[0].mxu0 %v1299
        %v2281 = vpop.f32.mrb[0].mxu0
        %v2282 = vadd.f32 %v2057, %v2281
        %v2283 = vpop.f32.mrb[0].mxu0
        %2284 = vmatprep.mubr.f32.mxu0 %v1414
        %2285 = vmatmul.mubr.f32.gmra.mrb[0].mxu0 %v1301
        %v2286 = vpop.f32.mrb[0].mxu0
        %v2287 = vadd.f32 %v2062, %v2286
        %v2288 = vpop.f32.mrb[0].mxu0
        %2289 = vmatprep.mubr.f32.mxu0 %v1459
        %2290 = vmatmul.mubr.f32.gmra.mrb[0].mxu0 %v1452
        %v2291 = vpop.f32.mrb[0].mxu0
        %v2292 = vadd.f32 %v2067, %v2291
        %v2293 = vpop.f32.mrb[0].mxu0
        %2294 = vmatprep.mubr.f32.mxu0 %v1461
        %2295 = vmatmul.mubr.f32.gmra.mrb[0].mxu0 %v1454
        %v2296 = vpop.f32.mrb[0].mxu0
        %v2297 = vadd.f32 %v2072, %v2296
        %v2298 = vpop.f32.mrb[0].mxu0
        %2299 = vdwg.mxu0
        %2300 = vmatprep.subr.mxu0 0.0
        %2301 = vmatpush1.msra.mxu0 %v1577
        %2302 = vmatprep.subr.mxu0 0.0
        %2303 = vmatpush1.msra.mxu0 %v1578
        %2304 = vmatprep.subr.mxu0 0.0
        %2305 = vmatpush1.msra.mxu0 %v1579
        %2306 = vmatprep.subr.mxu0 0.0
        %2307 = vmatpush1.msra.mxu0 %v1580
        %2308 = vmatprep.subr.mxu0 0.0
        %2309 = vmatpush1.msra.mxu0 %v1581
        %2310 = vmatprep.subr.mxu0 0.0
        %2311 = vmatpush1.msra.mxu0 %v1582
        %2312 = vmatprep.subr.mxu0 0.0
        %2313 = vmatpush1.msra.mxu0 %v1583
        %2314 = vmatprep.subr.mxu0 0.0
        %2315 = vmatpush1.msra.mxu0 %v1584
        %2316 = vmatprep.subr.mxu0 0.0
        %2317 = vmatpush1.msra.mxu0 %v1585
        %2318 = vmatprep.subr.mxu0 0.0
        %2319 = vmatpush1.msra.mxu0 %v1586
        %2320 = vmatprep.subr.mxu0 0.0
        %2321 = vmatpush1.msra.mxu0 %v1587
        %2322 = vmatprep.subr.mxu0 0.0
        %2323 = vmatpush1.msra.mxu0 %v1588
        %2324 = vmatprep.subr.mxu0 0.0
        %2325 = vmatpush1.msra.mxu0 %v1589
        %2326 = vmatprep.subr.mxu0 0.0
        %2327 = vmatpush1.msra.mxu0 %v1590
        %2328 = vmatprep.subr.mxu0 0.0
        %2329 = vmatpush1.msra.mxu0 %v1591
        %2330 = vmatprep.subr.mxu0 0.0
        %2331 = vmatpush1.msra.mxu0 %v1592
        %2332 = vmatprep.subr.mxu0 0.0
        %2333 = vmatpush1.msra.mxu0 %v1593
        %2334 = vmatprep.subr.mxu0 0.0
        %2335 = vmatpush1.msra.mxu0 %v1594
        %2336 = vmatprep.subr.mxu0 0.0
        %2337 = vmatpush1.msra.mxu0 %v1595
        %2338 = vmatprep.subr.mxu0 0.0
        %2339 = vmatpush1.msra.mxu0 %v1596
        %2340 = vmatprep.subr.mxu0 0.0
        %2341 = vmatpush1.msra.mxu0 %v1597
        %2342 = vmatprep.subr.mxu0 0.0
        %2343 = vmatpush1.msra.mxu0 %v1598
        %2344 = vmatprep.subr.mxu0 0.0
        %2345 = vmatpush1.msra.mxu0 %v1599
        %2346 = vmatprep.subr.mxu0 0.0
        %2347 = vmatpush1.msra.mxu0 %v1600
        %2348 = vmatprep.subr.mxu0 0.0
        %2349 = vmatpush1.msra.mxu0 %v1601
        %2350 = vmatprep.subr.mxu0 0.0
        %2351 = vmatpush1.msra.mxu0 %v1602
        %2352 = vmatprep.subr.mxu0 0.0
        %2353 = vmatpush1.msra.mxu0 %v1603
        %2354 = vmatprep.subr.mxu0 0.0
        %2355 = vmatpush1.msra.mxu0 %v1604
        %2356 = vmatprep.subr.mxu0 0.0
        %2357 = vmatpush1.msra.mxu0 %v1605
        %2358 = vmatprep.subr.mxu0 0.0
        %2359 = vmatpush1.msra.mxu0 %v1606
        %2360 = vmatprep.subr.mxu0 0.0
        %2361 = vmatpush1.msra.mxu0 %v1607
        %2362 = vmatprep.subr.mxu0 0.0
        %2363 = vmatpush1.msra.mxu0 %v1608
        %2364 = vmatprep.mubr.f32.mxu0 %v1234
        %2365 = vmatmul.mubr.f32.gmra.mrb[0].mxu0 %v1125
        %v2366 = vpop.f32.mrb[0].mxu0
        %v2367 = vadd.f32 %v2142, %v2366
        %v2368 = vpop.f32.mrb[0].mxu0
        %2369 = vmatprep.mubr.f32.mxu0 %v1236
        %2370 = vmatmul.mubr.f32.gmra.mrb[0].mxu0 %v1126
        %v2371 = vpop.f32.mrb[0].mxu0
        %v2372 = vadd.f32 %v2147, %v2371
        %v2373 = vpop.f32.mrb[0].mxu0
        %2374 = vmatprep.mubr.f32.mxu0 %v1239
        %2375 = vmatmul.mubr.f32.gmra.mrb[0].mxu0 %v1128
        %v2376 = vpop.f32.mrb[0].mxu0
        %v2377 = vadd.f32 %v2152, %v2376
        %v2378 = vpop.f32.mrb[0].mxu0
        %2379 = vmatprep.mubr.f32.mxu0 %v1241
        %2380 = vmatmul.mubr.f32.gmra.mrb[0].mxu0 %v1129
        %v2381 = vpop.f32.mrb[0].mxu0
        %v2382 = vadd.f32 %v2157, %v2381
        %v2383 = vpop.f32.mrb[0].mxu0
        %2384 = vmatprep.mubr.f32.mxu0 %v1244
        %2385 = vmatmul.mubr.f32.gmra.mrb[0].mxu0 %v1131
        %v2386 = vpop.f32.mrb[0].mxu0
        %v2387 = vadd.f32 %v2162, %v2386
        %v2388 = vpop.f32.mrb[0].mxu0
        %2389 = vmatprep.mubr.f32.mxu0 %v1246
        %2390 = vmatmul.mubr.f32.gmra.mrb[0].mxu0 %v1132
        %v2391 = vpop.f32.mrb[0].mxu0
        %v2392 = vadd.f32 %v2167, %v2391
        %v2393 = vpop.f32.mrb[0].mxu0
        %2394 = vmatprep.mubr.f32.mxu0 %v1249
        %2395 = vmatmul.mubr.f32.gmra.mrb[0].mxu0 %v1134
        %v2396 = vpop.f32.mrb[0].mxu0
        %v2397 = vadd.f32 %v2172, %v2396
        %v2398 = vpop.f32.mrb[0].mxu0
        %2399 = vmatprep.mubr.f32.mxu0 %v1251
        %2400 = vmatmul.mubr.f32.gmra.mrb[0].mxu0 %v1135
        %v2401 = vpop.f32.mrb[0].mxu0
        %v2402 = vadd.f32 %v2177, %v2401
        %v2403 = vpop.f32.mrb[0].mxu0
        %2404 = vmatprep.mubr.f32.mxu0 %v1254
        %2405 = vmatmul.mubr.f32.gmra.mrb[0].mxu0 %v1137
        %v2406 = vpop.f32.mrb[0].mxu0
        %v2407 = vadd.f32 %v2182, %v2406
        %v2408 = vpop.f32.mrb[0].mxu0
        %2409 = vmatprep.mubr.f32.mxu0 %v1256
        %2410 = vmatmul.mubr.f32.gmra.mrb[0].mxu0 %v1138
        %v2411 = vpop.f32.mrb[0].mxu0
        %v2412 = vadd.f32 %v2187, %v2411
        %v2413 = vpop.f32.mrb[0].mxu0
        %2414 = vmatprep.mubr.f32.mxu0 %v1259
        %2415 = vmatmul.mubr.f32.gmra.mrb[0].mxu0 %v1140
        %v2416 = vpop.f32.mrb[0].mxu0
        %v2417 = vadd.f32 %v2192, %v2416
        %v2418 = vpop.f32.mrb[0].mxu0
        %2419 = vmatprep.mubr.f32.mxu0 %v1261
        %2420 = vmatmul.mubr.f32.gmra.mrb[0].mxu0 %v1141
        %v2421 = vpop.f32.mrb[0].mxu0
        %v2422 = vadd.f32 %v2197, %v2421
        %v2423 = vpop.f32.mrb[0].mxu0
        %2424 = vmatprep.mubr.f32.mxu0 %v1264
        %2425 = vmatmul.mubr.f32.gmra.mrb[0].mxu0 %v1143
        %v2426 = vpop.f32.mrb[0].mxu0
        %v2427 = vadd.f32 %v2202, %v2426
        %v2428 = vpop.f32.mrb[0].mxu0
        %2429 = vmatprep.mubr.f32.mxu0 %v1266
        %2430 = vmatmul.mubr.f32.gmra.mrb[0].mxu0 %v1144
        %v2431 = vpop.f32.mrb[0].mxu0
        %v2432 = vadd.f32 %v2207, %v2431
        %v2433 = vpop.f32.mrb[0].mxu0
        %2434 = vmatprep.mubr.f32.mxu0 %v1269
        %2435 = vmatmul.mubr.f32.gmra.mrb[0].mxu0 %v1146
        %v2436 = vpop.f32.mrb[0].mxu0
        %v2437 = vadd.f32 %v2212, %v2436
        %v2438 = vpop.f32.mrb[0].mxu0
        %2439 = vmatprep.mubr.f32.mxu0 %v1271
        %2440 = vmatmul.mubr.f32.gmra.mrb[0].mxu0 %v1147
        %v2441 = vpop.f32.mrb[0].mxu0
        %v2442 = vadd.f32 %v2217, %v2441
        %v2443 = vpop.f32.mrb[0].mxu0
        %2444 = vmatprep.mubr.f32.mxu0 %v1274
        %2445 = vmatmul.mubr.f32.gmra.mrb[0].mxu0 %v1149
        %v2446 = vpop.f32.mrb[0].mxu0
        %v2447 = vadd.f32 %v2222, %v2446
        %v2448 = vpop.f32.mrb[0].mxu0
        %2449 = vmatprep.mubr.f32.mxu0 %v1276
        %2450 = vmatmul.mubr.f32.gmra.mrb[0].mxu0 %v1150
        %v2451 = vpop.f32.mrb[0].mxu0
        %v2452 = vadd.f32 %v2227, %v2451
        %v2453 = vpop.f32.mrb[0].mxu0
        %2454 = vmatprep.mubr.f32.mxu0 %v1279
        %2455 = vmatmul.mubr.f32.gmra.mrb[0].mxu0 %v1152
        %v2456 = vpop.f32.mrb[0].mxu0
        %v2457 = vadd.f32 %v2232, %v2456
        %v2458 = vpop.f32.mrb[0].mxu0
        %2459 = vmatprep.mubr.f32.mxu0 %v1281
        %2460 = vmatmul.mubr.f32.gmra.mrb[0].mxu0 %v1153
        %v2461 = vpop.f32.mrb[0].mxu0
        %v2462 = vadd.f32 %v2237, %v2461
        %v2463 = vpop.f32.mrb[0].mxu0
        %2464 = vmatprep.mubr.f32.mxu0 %v1284
        %2465 = vmatmul.mubr.f32.gmra.mrb[0].mxu0 %v1155
        %v2466 = vpop.f32.mrb[0].mxu0
        %v2467 = vadd.f32 %v2242, %v2466
        %v2468 = vpop.f32.mrb[0].mxu0
        %2469 = vmatprep.mubr.f32.mxu0 %v1286
        %2470 = vmatmul.mubr.f32.gmra.mrb[0].mxu0 %v1156
        %v2471 = vpop.f32.mrb[0].mxu0
        %v2472 = vadd.f32 %v2247, %v2471
        %v2473 = vpop.f32.mrb[0].mxu0
        %2474 = vmatprep.mubr.f32.mxu0 %v1289
        %2475 = vmatmul.mubr.f32.gmra.mrb[0].mxu0 %v1158
        %v2476 = vpop.f32.mrb[0].mxu0
        %v2477 = vadd.f32 %v2252, %v2476
        %v2478 = vpop.f32.mrb[0].mxu0
        %2479 = vmatprep.mubr.f32.mxu0 %v1291
        %2480 = vmatmul.mubr.f32.gmra.mrb[0].mxu0 %v1159
        %v2481 = vpop.f32.mrb[0].mxu0
        %v2482 = vadd.f32 %v2257, %v2481
        %v2483 = vpop.f32.mrb[0].mxu0
        %2484 = vmatprep.mubr.f32.mxu0 %v1294
        %2485 = vmatmul.mubr.f32.gmra.mrb[0].mxu0 %v1161
        %v2486 = vpop.f32.mrb[0].mxu0
        %v2487 = vadd.f32 %v2262, %v2486
        %v2488 = vpop.f32.mrb[0].mxu0
        %2489 = vmatprep.mubr.f32.mxu0 %v1296
        %2490 = vmatmul.mubr.f32.gmra.mrb[0].mxu0 %v1162
        %v2491 = vpop.f32.mrb[0].mxu0
        %v2492 = vadd.f32 %v2267, %v2491
        %v2493 = vpop.f32.mrb[0].mxu0
        %2494 = vmatprep.mubr.f32.mxu0 %v1299
        %2495 = vmatmul.mubr.f32.gmra.mrb[0].mxu0 %v1164
        %v2496 = vpop.f32.mrb[0].mxu0
        %v2497 = vadd.f32 %v2272, %v2496
        %v2498 = vpop.f32.mrb[0].mxu0
        %2499 = vmatprep.mubr.f32.mxu0 %v1301
        %2500 = vmatmul.mubr.f32.gmra.mrb[0].mxu0 %v1165
        %v2501 = vpop.f32.mrb[0].mxu0
        %v2502 = vadd.f32 %v2277, %v2501
        %v2503 = vpop.f32.mrb[0].mxu0
        %2504 = vmatprep.mubr.f32.mxu0 %v1452
        %2505 = vmatmul.mubr.f32.gmra.mrb[0].mxu0 %v1167
        %v2506 = vpop.f32.mrb[0].mxu0
        %v2507 = vadd.f32 %v2282, %v2506
        %v2508 = vpop.f32.mrb[0].mxu0
        %2509 = vmatprep.mubr.f32.mxu0 %v1454
        %2510 = vmatmul.mubr.f32.gmra.mrb[0].mxu0 %v1168
        %v2511 = vpop.f32.mrb[0].mxu0
        %v2512 = vadd.f32 %v2287, %v2511
        %v2513 = vpop.f32.mrb[0].mxu0
        %2514 = vmatprep.mubr.f32.mxu0 %v1469
        %2515 = vmatmul.mubr.f32.gmra.mrb[0].mxu0 %v1170
        %v2516 = vpop.f32.mrb[0].mxu0
        %v2517 = vadd.f32 %v2292, %v2516
        %v2518 = vpop.f32.mrb[0].mxu0
        %2519 = vmatprep.mubr.f32.mxu0 %v1471
        %2520 = vmatmul.mubr.f32.gmra.mrb[0].mxu0 %v1171
        %v2521 = vpop.f32.mrb[0].mxu0
        %v2522 = vadd.f32 %v2297, %v2521
        %v2523 = vpop.f32.mrb[0].mxu0
        %2524 = vdwg.mxu0
        %2525 = vmatprep.subr.mxu0 0.0
        %2526 = vmatpush1.msra.mxu0 %v1609
        %2527 = vmatprep.subr.mxu0 0.0
        %2528 = vmatpush1.msra.mxu0 %v1610
        %2529 = vmatprep.subr.mxu0 0.0
        %2530 = vmatpush1.msra.mxu0 %v1611
        %2531 = vmatprep.subr.mxu0 0.0
        %2532 = vmatpush1.msra.mxu0 %v1612
        %2533 = vmatprep.subr.mxu0 0.0
        %2534 = vmatpush1.msra.mxu0 %v1613
        %2535 = vmatprep.subr.mxu0 0.0
        %2536 = vmatpush1.msra.mxu0 %v1614
        %2537 = vmatprep.subr.mxu0 0.0
        %2538 = vmatpush1.msra.mxu0 %v1615
        %2539 = vmatprep.subr.mxu0 0.0
        %2540 = vmatpush1.msra.mxu0 %v1616
        %2541 = vmatprep.subr.mxu0 0.0
        %2542 = vmatpush1.msra.mxu0 %v1617
        %2543 = vmatprep.subr.mxu0 0.0
        %2544 = vmatpush1.msra.mxu0 %v1618
        %2545 = vmatprep.subr.mxu0 0.0
        %2546 = vmatpush1.msra.mxu0 %v1619
        %2547 = vmatprep.subr.mxu0 0.0
        %2548 = vmatpush1.msra.mxu0 %v1620
        %2549 = vmatprep.subr.mxu0 0.0
        %2550 = vmatpush1.msra.mxu0 %v1621
        %2551 = vmatprep.subr.mxu0 0.0
        %2552 = vmatpush1.msra.mxu0 %v1622
        %2553 = vmatprep.subr.mxu0 0.0
        %2554 = vmatpush1.msra.mxu0 %v1623
        %2555 = vmatprep.subr.mxu0 0.0
        %2556 = vmatpush1.msra.mxu0 %v1624
        %2557 = vmatprep.subr.mxu0 0.0
        %2558 = vmatpush1.msra.mxu0 0.0
        %2559 = vmatprep.subr.mxu0 0.0
        %2560 = vmatpush1.msra.mxu0 0.0
        %2561 = vmatprep.subr.mxu0 0.0
        %2562 = vmatpush1.msra.mxu0 0.0
        %2563 = vmatprep.subr.mxu0 0.0
        %2564 = vmatpush1.msra.mxu0 0.0
        %2565 = vmatprep.subr.mxu0 0.0
        %2566 = vmatpush1.msra.mxu0 0.0
        %2567 = vmatprep.subr.mxu0 0.0
        %2568 = vmatpush1.msra.mxu0 0.0
        %2569 = vmatprep.subr.mxu0 0.0
        %2570 = vmatpush1.msra.mxu0 0.0
        %2571 = vmatprep.subr.mxu0 0.0
        %2572 = vmatpush1.msra.mxu0 0.0
        %2573 = vmatprep.subr.mxu0 0.0
        %2574 = vmatpush1.msra.mxu0 0.0
        %2575 = vmatprep.subr.mxu0 0.0
        %2576 = vmatpush1.msra.mxu0 0.0
        %2577 = vmatprep.subr.mxu0 0.0
        %2578 = vmatpush1.msra.mxu0 0.0
        %2579 = vmatprep.subr.mxu0 0.0
        %2580 = vmatpush1.msra.mxu0 0.0
        %2581 = vmatprep.subr.mxu0 0.0
        %2582 = vmatpush1.msra.mxu0 0.0
        %2583 = vmatprep.subr.mxu0 0.0
        %2584 = vmatpush1.msra.mxu0 0.0
        %2585 = vmatprep.subr.mxu0 0.0
        %2586 = vmatpush1.msra.mxu0 0.0
        %2587 = vmatprep.subr.mxu0 0.0
        %2588 = vmatpush1.msra.mxu0 0.0
        %2589 = vmatprep.mubr.f32.mxu0 0.0
        %2590 = vmatmul.mubr.f32.gmra.mrb[0].mxu0 %v1347
        %v2591 = vpop.f32.mrb[0].mxu0
        %v2592 = vadd.f32 %v2367, %v2591
        %v2593 = vpop.f32.mrb[0].mxu0
        %2594 = vmatprep.mubr.f32.mxu0 0.0
        %2595 = vmatmul.mubr.f32.gmra.mrb[0].mxu0 %v1349
        %v2596 = vpop.f32.mrb[0].mxu0
        %v2597 = vadd.f32 %v2372, %v2596
        %v2598 = vpop.f32.mrb[0].mxu0
        %2599 = vmatprep.mubr.f32.mxu0 0.0
        %2600 = vmatmul.mubr.f32.gmra.mrb[0].mxu0 %v1352
        %v2601 = vpop.f32.mrb[0].mxu0
        %v2602 = vadd.f32 %v2377, %v2601
        %v2603 = vpop.f32.mrb[0].mxu0
        %2604 = vmatprep.mubr.f32.mxu0 0.0
        %2605 = vmatmul.mubr.f32.gmra.mrb[0].mxu0 %v1354
        %v2606 = vpop.f32.mrb[0].mxu0
        %v2607 = vadd.f32 %v2382, %v2606
        %v2608 = vpop.f32.mrb[0].mxu0
        %2609 = vmatprep.mubr.f32.mxu0 0.0
        %2610 = vmatmul.mubr.f32.gmra.mrb[0].mxu0 %v1357
        %v2611 = vpop.f32.mrb[0].mxu0
        %v2612 = vadd.f32 %v2387, %v2611
        %v2613 = vpop.f32.mrb[0].mxu0
        %2614 = vmatprep.mubr.f32.mxu0 0.0
        %2615 = vmatmul.mubr.f32.gmra.mrb[0].mxu0 %v1359
        %v2616 = vpop.f32.mrb[0].mxu0
        %v2617 = vadd.f32 %v2392, %v2616
        %v2618 = vpop.f32.mrb[0].mxu0
        %2619 = vmatprep.mubr.f32.mxu0 0.0
        %2620 = vmatmul.mubr.f32.gmra.mrb[0].mxu0 %v1362
        %v2621 = vpop.f32.mrb[0].mxu0
        %v2622 = vadd.f32 %v2397, %v2621
        %v2623 = vpop.f32.mrb[0].mxu0
        %2624 = vmatprep.mubr.f32.mxu0 0.0
        %2625 = vmatmul.mubr.f32.gmra.mrb[0].mxu0 %v1364
        %v2626 = vpop.f32.mrb[0].mxu0
        %v2627 = vadd.f32 %v2402, %v2626
        %v2628 = vpop.f32.mrb[0].mxu0
        %2629 = vmatprep.mubr.f32.mxu0 0.0
        %2630 = vmatmul.mubr.f32.gmra.mrb[0].mxu0 %v1367
        %v2631 = vpop.f32.mrb[0].mxu0
        %v2632 = vadd.f32 %v2407, %v2631
        %v2633 = vpop.f32.mrb[0].mxu0
        %2634 = vmatprep.mubr.f32.mxu0 0.0
        %2635 = vmatmul.mubr.f32.gmra.mrb[0].mxu0 %v1369
        %v2636 = vpop.f32.mrb[0].mxu0
        %v2637 = vadd.f32 %v2412, %v2636
        %v2638 = vpop.f32.mrb[0].mxu0
        %2639 = vmatprep.mubr.f32.mxu0 0.0
        %2640 = vmatmul.mubr.f32.gmra.mrb[0].mxu0 %v1372
        %v2641 = vpop.f32.mrb[0].mxu0
        %v2642 = vadd.f32 %v2417, %v2641
        %v2643 = vpop.f32.mrb[0].mxu0
        %2644 = vmatprep.mubr.f32.mxu0 0.0
        %2645 = vmatmul.mubr.f32.gmra.mrb[0].mxu0 %v1374
        %v2646 = vpop.f32.mrb[0].mxu0
        %v2647 = vadd.f32 %v2422, %v2646
        %v2648 = vpop.f32.mrb[0].mxu0
        %2649 = vmatprep.mubr.f32.mxu0 0.0
        %2650 = vmatmul.mubr.f32.gmra.mrb[0].mxu0 %v1377
        %v2651 = vpop.f32.mrb[0].mxu0
        %v2652 = vadd.f32 %v2427, %v2651
        %v2653 = vpop.f32.mrb[0].mxu0
        %2654 = vmatprep.mubr.f32.mxu0 0.0
        %2655 = vmatmul.mubr.f32.gmra.mrb[0].mxu0 %v1379
        %v2656 = vpop.f32.mrb[0].mxu0
        %v2657 = vadd.f32 %v2432, %v2656
        %v2658 = vpop.f32.mrb[0].mxu0
        %2659 = vmatprep.mubr.f32.mxu0 0.0
        %2660 = vmatmul.mubr.f32.gmra.mrb[0].mxu0 %v1382
        %v2661 = vpop.f32.mrb[0].mxu0
        %v2662 = vadd.f32 %v2437, %v2661
        %v2663 = vpop.f32.mrb[0].mxu0
        %2664 = vmatprep.mubr.f32.mxu0 0.0
        %2665 = vmatmul.mubr.f32.gmra.mrb[0].mxu0 %v1384
        %v2666 = vpop.f32.mrb[0].mxu0
        %v2667 = vadd.f32 %v2442, %v2666
        %v2668 = vpop.f32.mrb[0].mxu0
        %2669 = vmatprep.mubr.f32.mxu0 0.0
        %2670 = vmatmul.mubr.f32.gmra.mrb[0].mxu0 %v1387
        %v2671 = vpop.f32.mrb[0].mxu0
        %v2672 = vadd.f32 %v2447, %v2671
        %v2673 = vpop.f32.mrb[0].mxu0
        %2674 = vmatprep.mubr.f32.mxu0 0.0
        %2675 = vmatmul.mubr.f32.gmra.mrb[0].mxu0 %v1389
        %v2676 = vpop.f32.mrb[0].mxu0
        %v2677 = vadd.f32 %v2452, %v2676
        %v2678 = vpop.f32.mrb[0].mxu0
        %2679 = vmatprep.mubr.f32.mxu0 0.0
        %2680 = vmatmul.mubr.f32.gmra.mrb[0].mxu0 %v1392
        %v2681 = vpop.f32.mrb[0].mxu0
        %v2682 = vadd.f32 %v2457, %v2681
        %v2683 = vpop.f32.mrb[0].mxu0
        %2684 = vmatprep.mubr.f32.mxu0 0.0
        %2685 = vmatmul.mubr.f32.gmra.mrb[0].mxu0 %v1394
        %v2686 = vpop.f32.mrb[0].mxu0
        %v2687 = vadd.f32 %v2462, %v2686
        %v2688 = vpop.f32.mrb[0].mxu0
        %2689 = vmatprep.mubr.f32.mxu0 0.0
        %2690 = vmatmul.mubr.f32.gmra.mrb[0].mxu0 %v1397
        %v2691 = vpop.f32.mrb[0].mxu0
        %v2692 = vadd.f32 %v2467, %v2691
        %v2693 = vpop.f32.mrb[0].mxu0
        %2694 = vmatprep.mubr.f32.mxu0 0.0
        %2695 = vmatmul.mubr.f32.gmra.mrb[0].mxu0 %v1399
        %v2696 = vpop.f32.mrb[0].mxu0
        %v2697 = vadd.f32 %v2472, %v2696
        %v2698 = vpop.f32.mrb[0].mxu0
        %2699 = vmatprep.mubr.f32.mxu0 0.0
        %2700 = vmatmul.mubr.f32.gmra.mrb[0].mxu0 %v1402
        %v2701 = vpop.f32.mrb[0].mxu0
        %v2702 = vadd.f32 %v2477, %v2701
        %v2703 = vpop.f32.mrb[0].mxu0
        %2704 = vmatprep.mubr.f32.mxu0 0.0
        %2705 = vmatmul.mubr.f32.gmra.mrb[0].mxu0 %v1404
        %v2706 = vpop.f32.mrb[0].mxu0
        %v2707 = vadd.f32 %v2482, %v2706
        %v2708 = vpop.f32.mrb[0].mxu0
        %2709 = vmatprep.mubr.f32.mxu0 0.0
        %2710 = vmatmul.mubr.f32.gmra.mrb[0].mxu0 %v1407
        %v2711 = vpop.f32.mrb[0].mxu0
        %v2712 = vadd.f32 %v2487, %v2711
        %v2713 = vpop.f32.mrb[0].mxu0
        %2714 = vmatprep.mubr.f32.mxu0 0.0
        %2715 = vmatmul.mubr.f32.gmra.mrb[0].mxu0 %v1409
        %v2716 = vpop.f32.mrb[0].mxu0
        %v2717 = vadd.f32 %v2492, %v2716
        %v2718 = vpop.f32.mrb[0].mxu0
        %2719 = vmatprep.mubr.f32.mxu0 0.0
        %2720 = vmatmul.mubr.f32.gmra.mrb[0].mxu0 %v1412
        %v2721 = vpop.f32.mrb[0].mxu0
        %v2722 = vadd.f32 %v2497, %v2721
        %v2723 = vpop.f32.mrb[0].mxu0
        %2724 = vmatprep.mubr.f32.mxu0 0.0
        %2725 = vmatmul.mubr.f32.gmra.mrb[0].mxu0 %v1414
        %v2726 = vpop.f32.mrb[0].mxu0
        %v2727 = vadd.f32 %v2502, %v2726
        %v2728 = vpop.f32.mrb[0].mxu0
        %2729 = vmatprep.mubr.f32.mxu0 0.0
        %2730 = vmatmul.mubr.f32.gmra.mrb[0].mxu0 %v1459
        %v2731 = vpop.f32.mrb[0].mxu0
        %v2732 = vadd.f32 %v2507, %v2731
        %v2733 = vpop.f32.mrb[0].mxu0
        %2734 = vmatprep.mubr.f32.mxu0 0.0
        %2735 = vmatmul.mubr.f32.gmra.mrb[0].mxu0 %v1461
        %v2736 = vpop.f32.mrb[0].mxu0
        %v2737 = vadd.f32 %v2512, %v2736
        %v2738 = vpop.f32.mrb[0].mxu0
        %2739 = vmatprep.mubr.f32.mxu0 0.0
        %2740 = vmatmul.mubr.f32.gmra.mrb[0].mxu0 %v1476
        %v2741 = vpop.f32.mrb[0].mxu0
        %v2742 = vadd.f32 %v2517, %v2741
        %v2743 = vpop.f32.mrb[0].mxu0
        %2744 = vmatprep.mubr.f32.mxu0 0.0
        %2745 = vmatmul.mubr.f32.gmra.mrb[0].mxu0 %v1478
        %v2746 = vpop.f32.mrb[0].mxu0
        %v2747 = vadd.f32 %v2522, %v2746
        %v2748 = vpop.f32.mrb[0].mxu0
        %2749 = vdwg.mxu0
        %v2750 = vld [vmem:[%s6] sm:$0x1]
        %v2751 = vld [vmem:[%s7] sm:$0x1]
        %v2752 = vadd.f32 %v2592, %v2597
        %v2753 = vadd.f32 %v2752, %v2602
        %v2754 = vadd.f32 %v2753, %v2607
        %v2755 = vadd.f32 %v2754, %v2612
        %v2756 = vadd.f32 %v2755, %v2617
        %v2757 = vadd.f32 %v2756, %v2622
        %v2758 = vadd.f32 %v2757, %v2627
        %v2759 = vadd.f32 %v2758, %v2632
        %v2760 = vadd.f32 %v2759, %v2637
        %v2761 = vadd.f32 %v2760, %v2642
        %v2762 = vadd.f32 %v2761, %v2647
        %v2763 = vadd.f32 %v2762, %v2652
        %v2764 = vadd.f32 %v2763, %v2657
        %v2765 = vadd.f32 %v2764, %v2662
        %v2766 = vadd.f32 %v2765, %v2667
        %v2767 = vadd.f32 %v2766, %v2672
        %v2768 = vadd.f32 %v2767, %v2677
        %v2769 = vadd.f32 %v2768, %v2682
        %v2770 = vadd.f32 %v2769, %v2687
        %v2771 = vadd.f32 %v2770, %v2692
        %v2772 = vadd.f32 %v2771, %v2697
        %v2773 = vadd.f32 %v2772, %v2702
        %v2774 = vadd.f32 %v2773, %v2707
        %v2775 = vadd.f32 %v2774, %v2712
        %v2776 = vadd.f32 %v2775, %v2717
        %v2777 = vadd.f32 %v2776, %v2722
        %v2778 = vadd.f32 %v2777, %v2727
        %v2779 = vadd.f32 %v2778, %v2732
        %v2780 = vadd.f32 %v2779, %v2737
        %v2781 = vadd.f32 %v2780, %v2742
        %v2782 = vadd.f32 %v2781, %v2747
        %v2783 = vrot.slane %v2782, 4
        %v2784 = vadd.f32 %v2782, %v2783
        %v2785 = vrot.slane %v2784, 2
        %v2786 = vadd.f32 %v2784, %v2785
        %v2787 = vrot.slane %v2786, 1
        %v2788 = vadd.f32 %v2786, %v2787
        %v2789 = vmul.f32 %v2592, %v2592
        %v2790 = vmul.f32 %v2597, %v2597
        %v2791 = vmul.f32 %v2602, %v2602
        %v2792 = vmul.f32 %v2607, %v2607
        %v2793 = vmul.f32 %v2612, %v2612
        %v2794 = vmul.f32 %v2617, %v2617
        %v2795 = vmul.f32 %v2622, %v2622
        %v2796 = vmul.f32 %v2627, %v2627
        %v2797 = vmul.f32 %v2632, %v2632
        %v2798 = vmul.f32 %v2637, %v2637
        %v2799 = vmul.f32 %v2642, %v2642
        %v2800 = vmul.f32 %v2647, %v2647
        %v2801 = vmul.f32 %v2652, %v2652
        %v2802 = vmul.f32 %v2657, %v2657
        %v2803 = vmul.f32 %v2662, %v2662
        %v2804 = vmul.f32 %v2667, %v2667
        %v2805 = vmul.f32 %v2672, %v2672
        %v2806 = vmul.f32 %v2677, %v2677
        %v2807 = vmul.f32 %v2682, %v2682
        %v2808 = vmul.f32 %v2687, %v2687
        %v2809 = vmul.f32 %v2692, %v2692
        %v2810 = vmul.f32 %v2697, %v2697
        %v2811 = vmul.f32 %v2702, %v2702
        %v2812 = vmul.f32 %v2707, %v2707
        %v2813 = vmul.f32 %v2712, %v2712
        %v2814 = vmul.f32 %v2717, %v2717
        %v2815 = vmul.f32 %v2722, %v2722
        %v2816 = vmul.f32 %v2727, %v2727
        %v2817 = vmul.f32 %v2732, %v2732
        %v2818 = vmul.f32 %v2737, %v2737
        %v2819 = vmul.f32 %v2742, %v2742
        %v2820 = vmul.f32 %v2747, %v2747
        %v2821 = vadd.f32 %v2789, %v2790
        %v2822 = vadd.f32 %v2821, %v2791
        %v2823 = vadd.f32 %v2822, %v2792
        %v2824 = vadd.f32 %v2823, %v2793
        %v2825 = vadd.f32 %v2824, %v2794
        %v2826 = vadd.f32 %v2825, %v2795
        %v2827 = vadd.f32 %v2826, %v2796
        %v2828 = vadd.f32 %v2827, %v2797
        %v2829 = vadd.f32 %v2828, %v2798
        %v2830 = vadd.f32 %v2829, %v2799
        %v2831 = vadd.f32 %v2830, %v2800
        %v2832 = vadd.f32 %v2831, %v2801
        %v2833 = vadd.f32 %v2832, %v2802
        %v2834 = vadd.f32 %v2833, %v2803
        %v2835 = vadd.f32 %v2834, %v2804
        %v2836 = vadd.f32 %v2835, %v2805
        %v2837 = vadd.f32 %v2836, %v2806
        %v2838 = vadd.f32 %v2837, %v2807
        %v2839 = vadd.f32 %v2838, %v2808
        %v2840 = vadd.f32 %v2839, %v2809
        %v2841 = vadd.f32 %v2840, %v2810
        %v2842 = vadd.f32 %v2841, %v2811
        %v2843 = vadd.f32 %v2842, %v2812
        %v2844 = vadd.f32 %v2843, %v2813
        %v2845 = vadd.f32 %v2844, %v2814
        %v2846 = vadd.f32 %v2845, %v2815
        %v2847 = vadd.f32 %v2846, %v2816
        %v2848 = vadd.f32 %v2847, %v2817
        %v2849 = vadd.f32 %v2848, %v2818
        %v2850 = vadd.f32 %v2849, %v2819
        %v2851 = vadd.f32 %v2850, %v2820
        %v2852 = vrot.slane %v2851, 4
        %v2853 = vadd.f32 %v2851, %v2852
        %v2854 = vrot.slane %v2853, 2
        %v2855 = vadd.f32 %v2853, %v2854
        %v2856 = vrot.slane %v2855, 1
        %v2857 = vadd.f32 %v2855, %v2856
        %v2858 = vmul.f32 %v2788, 0.00390625
        %v2859 = vmul.f32 %v2857, 0.00390625
        %v2860 = vmul.f32 %v2858, %v2858
        %v2861 = vsub.f32 %v2859, %v2860
        %v2862 = vadd.f32 %v2861, 1e-05
        %v2863 = vrsqrt.pop %v2862
        %v2864 = vsub.f32 %v2592, %v2858
        %v2865 = vsub.f32 %v2597, %v2858
        %v2866 = vsub.f32 %v2602, %v2858
        %v2867 = vsub.f32 %v2607, %v2858
        %v2868 = vsub.f32 %v2612, %v2858
        %v2869 = vsub.f32 %v2617, %v2858
        %v2870 = vsub.f32 %v2622, %v2858
        %v2871 = vsub.f32 %v2627, %v2858
        %v2872 = vsub.f32 %v2632, %v2858
        %v2873 = vsub.f32 %v2637, %v2858
        %v2874 = vsub.f32 %v2642, %v2858
        %v2875 = vsub.f32 %v2647, %v2858
        %v2876 = vsub.f32 %v2652, %v2858
        %v2877 = vsub.f32 %v2657, %v2858
        %v2878 = vsub.f32 %v2662, %v2858
        %v2879 = vsub.f32 %v2667, %v2858
        %v2880 = vsub.f32 %v2672, %v2858
        %v2881 = vsub.f32 %v2677, %v2858
        %v2882 = vsub.f32 %v2682, %v2858
        %v2883 = vsub.f32 %v2687, %v2858
        %v2884 = vsub.f32 %v2692, %v2858
        %v2885 = vsub.f32 %v2697, %v2858
        %v2886 = vsub.f32 %v2702, %v2858
        %v2887 = vsub.f32 %v2707, %v2858
        %v2888 = vsub.f32 %v2712, %v2858
        %v2889 = vsub.f32 %v2717, %v2858
        %v2890 = vsub.f32 %v2722, %v2858
        %v2891 = vsub.f32 %v2727, %v2858
        %v2892 = vsub.f32 %v2732, %v2858
        %v2893 = vsub.f32 %v2737, %v2858
        %v2894 = vsub.f32 %v2742, %v2858
        %v2895 = vsub.f32 %v2747, %v2858
        %v2896 = vmul.f32 %v2863, %v2750
        %v2897 = vlaneseq
        %v2898 = vshrl.u32 %v2897, 7
        %v2899 = vsub.s32 0, %v2898
        %v2900 = vrot.slane %v2896, %v2899
        %v2901 = vmul.f32 %v2864, %v2900
        %v2902 = vmul.f32 %v2865, %v2900
        %v2903 = vmul.f32 %v2866, %v2900
        %v2904 = vmul.f32 %v2867, %v2900
        %v2905 = vmul.f32 %v2868, %v2900
        %v2906 = vmul.f32 %v2869, %v2900
        %v2907 = vmul.f32 %v2870, %v2900
        %v2908 = vmul.f32 %v2871, %v2900
        %v2909 = vmul.f32 %v2872, %v2900
        %v2910 = vmul.f32 %v2873, %v2900
        %v2911 = vmul.f32 %v2874, %v2900
        %v2912 = vmul.f32 %v2875, %v2900
        %v2913 = vmul.f32 %v2876, %v2900
        %v2914 = vmul.f32 %v2877, %v2900
        %v2915 = vmul.f32 %v2878, %v2900
        %v2916 = vmul.f32 %v2879, %v2900
        %v2917 = vmul.f32 %v2880, %v2900
        %v2918 = vmul.f32 %v2881, %v2900
        %v2919 = vmul.f32 %v2882, %v2900
        %v2920 = vmul.f32 %v2883, %v2900
        %v2921 = vmul.f32 %v2884, %v2900
        %v2922 = vmul.f32 %v2885, %v2900
        %v2923 = vmul.f32 %v2886, %v2900
        %v2924 = vmul.f32 %v2887, %v2900
        %v2925 = vmul.f32 %v2888, %v2900
        %v2926 = vmul.f32 %v2889, %v2900
        %v2927 = vmul.f32 %v2890, %v2900
        %v2928 = vmul.f32 %v2891, %v2900
        %v2929 = vmul.f32 %v2892, %v2900
        %v2930 = vmul.f32 %v2893, %v2900
        %v2931 = vmul.f32 %v2894, %v2900
        %v2932 = vmul.f32 %v2895, %v2900
        %v2934 = vlaneseq
        %v2935 = vshrl.u32 %v2934, 7
        %v2936 = vsub.s32 0, %v2935
        %v2937 = vrot.slane %v2751, %v2936
        %v2939 = vadd.f32 %v2901, %v2937
        %v2940 = vadd.f32 %v2902, %v2937
        %v2941 = vadd.f32 %v2903, %v2937
        %v2942 = vadd.f32 %v2904, %v2937
        %v2943 = vadd.f32 %v2905, %v2937
        %v2944 = vadd.f32 %v2906, %v2937
        %v2945 = vadd.f32 %v2907, %v2937
        %v2946 = vadd.f32 %v2908, %v2937
        %v2947 = vadd.f32 %v2909, %v2937
        %v2948 = vadd.f32 %v2910, %v2937
        %v2949 = vadd.f32 %v2911, %v2937
        %v2950 = vadd.f32 %v2912, %v2937
        %v2951 = vadd.f32 %v2913, %v2937
        %v2952 = vadd.f32 %v2914, %v2937
        %v2953 = vadd.f32 %v2915, %v2937
        %v2954 = vadd.f32 %v2916, %v2937
        %v2955 = vadd.f32 %v2917, %v2937
        %v2956 = vadd.f32 %v2918, %v2937
        %v2957 = vadd.f32 %v2919, %v2937
        %v2958 = vadd.f32 %v2920, %v2937
        %v2959 = vadd.f32 %v2921, %v2937
        %v2960 = vadd.f32 %v2922, %v2937
        %v2961 = vadd.f32 %v2923, %v2937
        %v2962 = vadd.f32 %v2924, %v2937
        %v2963 = vadd.f32 %v2925, %v2937
        %v2964 = vadd.f32 %v2926, %v2937
        %v2965 = vadd.f32 %v2927, %v2937
        %v2966 = vadd.f32 %v2928, %v2937
        %v2967 = vadd.f32 %v2929, %v2937
        %v2968 = vadd.f32 %v2930, %v2937
        %v2969 = vadd.f32 %v2931, %v2937
        %v2970 = vadd.f32 %v2932, %v2937
        %v2971 = vmax.f32 %v2939, 0.0
        %v2972 = vmax.f32 %v2940, 0.0
        %v2973 = vmax.f32 %v2941, 0.0
        %v2974 = vmax.f32 %v2942, 0.0
        %v2975 = vmax.f32 %v2943, 0.0
        %v2976 = vmax.f32 %v2944, 0.0
        %v2977 = vmax.f32 %v2945, 0.0
        %v2978 = vmax.f32 %v2946, 0.0
        %v2979 = vmax.f32 %v2947, 0.0
        %v2980 = vmax.f32 %v2948, 0.0
        %v2981 = vmax.f32 %v2949, 0.0
        %v2982 = vmax.f32 %v2950, 0.0
        %v2983 = vmax.f32 %v2951, 0.0
        %v2984 = vmax.f32 %v2952, 0.0
        %v2985 = vmax.f32 %v2953, 0.0
        %v2986 = vmax.f32 %v2954, 0.0
        %v2987 = vmax.f32 %v2955, 0.0
        %v2988 = vmax.f32 %v2956, 0.0
        %v2989 = vmax.f32 %v2957, 0.0
        %v2990 = vmax.f32 %v2958, 0.0
        %v2991 = vmax.f32 %v2959, 0.0
        %v2992 = vmax.f32 %v2960, 0.0
        %v2993 = vmax.f32 %v2961, 0.0
        %v2994 = vmax.f32 %v2962, 0.0
        %v2995 = vmax.f32 %v2963, 0.0
        %v2996 = vmax.f32 %v2964, 0.0
        %v2997 = vmax.f32 %v2965, 0.0
        %v2998 = vmax.f32 %v2966, 0.0
        %v2999 = vmax.f32 %v2967, 0.0
        %v3000 = vmax.f32 %v2968, 0.0
        %v3001 = vmax.f32 %v2969, 0.0
        %v3002 = vmax.f32 %v2970, 0.0
        %v3003 = vld [vmem:[#allocation9] sm:$0xff]
        %v3004 = vld [vmem:[#allocation9 + $0x8] sm:$0xff]
        %v3005 = vld [vmem:[#allocation9 + $0x10] sm:$0xff]
        %v3006 = vld [vmem:[#allocation9 + $0x18] sm:$0xff]
        %v3007 = vld [vmem:[#allocation9 + $0x20] sm:$0xff]
        %v3008 = vld [vmem:[#allocation9 + $0x28] sm:$0xff]
        %v3009 = vld [vmem:[#allocation9 + $0x30] sm:$0xff]
        %v3010 = vld [vmem:[#allocation9 + $0x38] sm:$0xff]
        %v3011 = vld [vmem:[#allocation9 + $0x40] sm:$0xff]
        %v3012 = vld [vmem:[#allocation9 + $0x48] sm:$0xff]
        %v3013 = vld [vmem:[#allocation9 + $0x50] sm:$0xff]
        %v3014 = vld [vmem:[#allocation9 + $0x58] sm:$0xff]
        %v3015 = vld [vmem:[#allocation9 + $0x60] sm:$0xff]
        %v3016 = vld [vmem:[#allocation9 + $0x68] sm:$0xff]
        %v3017 = vld [vmem:[#allocation9 + $0x70] sm:$0xff]
        %v3018 = vld [vmem:[#allocation9 + $0x78] sm:$0xff]
        %3019 = vmatprep.subr.mxu0 0.0
        %3020 = vmatpush1.msra.mxu0 %v3003
        %3021 = vmatprep.subr.mxu0 0.0
        %3022 = vmatpush1.msra.mxu0 %v3004
        %3023 = vmatprep.subr.mxu0 0.0
        %3024 = vmatpush1.msra.mxu0 %v3005
        %3025 = vmatprep.subr.mxu0 0.0
        %3026 = vmatpush1.msra.mxu0 %v3006
        %3027 = vmatprep.subr.mxu0 0.0
        %3028 = vmatpush1.msra.mxu0 %v3007
        %3029 = vmatprep.subr.mxu0 0.0
        %3030 = vmatpush1.msra.mxu0 %v3008
        %3031 = vmatprep.subr.mxu0 0.0
        %3032 = vmatpush1.msra.mxu0 %v3009
        %3033 = vmatprep.subr.mxu0 0.0
        %3034 = vmatpush1.msra.mxu0 %v3010
        %3035 = vmatprep.subr.mxu0 0.0
        %3036 = vmatpush1.msra.mxu0 %v3011
        %3037 = vmatprep.subr.mxu0 0.0
        %3038 = vmatpush1.msra.mxu0 %v3012
        %3039 = vmatprep.subr.mxu0 0.0
        %3040 = vmatpush1.msra.mxu0 %v3013
        %3041 = vmatprep.subr.mxu0 0.0
        %3042 = vmatpush1.msra.mxu0 %v3014
        %3043 = vmatprep.subr.mxu0 0.0
        %3044 = vmatpush1.msra.mxu0 %v3015
        %3045 = vmatprep.subr.mxu0 0.0
        %3046 = vmatpush1.msra.mxu0 %v3016
        %3047 = vmatprep.subr.mxu0 0.0
        %3048 = vmatpush1.msra.mxu0 %v3017
        %3049 = vmatprep.subr.mxu0 0.0
        %3050 = vmatpush1.msra.mxu0 %v3018
        %3051 = vmatprep.subr.mxu0 0.0
        %3052 = vmatpush1.msra.mxu0 0.0
        %3053 = vmatprep.subr.mxu0 0.0
        %3054 = vmatpush1.msra.mxu0 0.0
        %3055 = vmatprep.subr.mxu0 0.0
        %3056 = vmatpush1.msra.mxu0 0.0
        %3057 = vmatprep.subr.mxu0 0.0
        %3058 = vmatpush1.msra.mxu0 0.0
        %3059 = vmatprep.subr.mxu0 0.0
        %3060 = vmatpush1.msra.mxu0 0.0
        %3061 = vmatprep.subr.mxu0 0.0
        %3062 = vmatpush1.msra.mxu0 0.0
        %3063 = vmatprep.subr.mxu0 0.0
        %3064 = vmatpush1.msra.mxu0 0.0
        %3065 = vmatprep.subr.mxu0 0.0
        %3066 = vmatpush1.msra.mxu0 0.0
        %3067 = vmatprep.subr.mxu0 0.0
        %3068 = vmatpush1.msra.mxu0 0.0
        %3069 = vmatprep.subr.mxu0 0.0
        %3070 = vmatpush1.msra.mxu0 0.0
        %3071 = vmatprep.subr.mxu0 0.0
        %3072 = vmatpush1.msra.mxu0 0.0
        %3073 = vmatprep.subr.mxu0 0.0
        %3074 = vmatpush1.msra.mxu0 0.0
        %3075 = vmatprep.subr.mxu0 0.0
        %3076 = vmatpush1.msra.mxu0 0.0
        %3077 = vmatprep.subr.mxu0 0.0
        %3078 = vmatpush1.msra.mxu0 0.0
        %3079 = vmatprep.subr.mxu0 0.0
        %3080 = vmatpush1.msra.mxu0 0.0
        %3081 = vmatprep.subr.mxu0 0.0
        %3082 = vmatpush1.msra.mxu0 0.0
        %3083 = vmatprep.mubr.f32.mxu0 0.0
        %3084 = vmatmul.mubr.f32.gmra.mrb[0].mxu0 %v2971
        %v3085 = vpop.f32.mrb[0].mxu0
        %v3086 = vadd.f32 0.0, %v3085
        %v3087 = vpop.f32.mrb[0].mxu0
        %3088 = vmatprep.mubr.f32.mxu0 0.0
        %3089 = vmatmul.mubr.f32.gmra.mrb[0].mxu0 %v2972
        %v3090 = vpop.f32.mrb[0].mxu0
        %v3091 = vadd.f32 0.0, %v3090
        %v3092 = vpop.f32.mrb[0].mxu0
        %3093 = vmatprep.mubr.f32.mxu0 0.0
        %3094 = vmatmul.mubr.f32.gmra.mrb[0].mxu0 %v2973
        %v3095 = vpop.f32.mrb[0].mxu0
        %v3096 = vadd.f32 0.0, %v3095
        %v3097 = vpop.f32.mrb[0].mxu0
        %3098 = vmatprep.mubr.f32.mxu0 0.0
        %3099 = vmatmul.mubr.f32.gmra.mrb[0].mxu0 %v2974
        %v3100 = vpop.f32.mrb[0].mxu0
        %v3101 = vadd.f32 0.0, %v3100
        %v3102 = vpop.f32.mrb[0].mxu0
        %3103 = vmatprep.mubr.f32.mxu0 0.0
        %3104 = vmatmul.mubr.f32.gmra.mrb[0].mxu0 %v2975
        %v3105 = vpop.f32.mrb[0].mxu0
        %v3106 = vadd.f32 0.0, %v3105
        %v3107 = vpop.f32.mrb[0].mxu0
        %3108 = vmatprep.mubr.f32.mxu0 0.0
        %3109 = vmatmul.mubr.f32.gmra.mrb[0].mxu0 %v2976
        %v3110 = vpop.f32.mrb[0].mxu0
        %v3111 = vadd.f32 0.0, %v3110
        %v3112 = vpop.f32.mrb[0].mxu0
        %3113 = vmatprep.mubr.f32.mxu0 0.0
        %3114 = vmatmul.mubr.f32.gmra.mrb[0].mxu0 %v2977
        %v3115 = vpop.f32.mrb[0].mxu0
        %v3116 = vadd.f32 0.0, %v3115
        %v3117 = vpop.f32.mrb[0].mxu0
        %3118 = vmatprep.mubr.f32.mxu0 0.0
        %3119 = vmatmul.mubr.f32.gmra.mrb[0].mxu0 %v2978
        %v3120 = vpop.f32.mrb[0].mxu0
        %v3121 = vadd.f32 0.0, %v3120
        %v3122 = vpop.f32.mrb[0].mxu0
        %3123 = vmatprep.mubr.f32.mxu0 0.0
        %3124 = vmatmul.mubr.f32.gmra.mrb[0].mxu0 %v2979
        %v3125 = vpop.f32.mrb[0].mxu0
        %v3126 = vadd.f32 0.0, %v3125
        %v3127 = vpop.f32.mrb[0].mxu0
        %3128 = vmatprep.mubr.f32.mxu0 0.0
        %3129 = vmatmul.mubr.f32.gmra.mrb[0].mxu0 %v2980
        %v3130 = vpop.f32.mrb[0].mxu0
        %v3131 = vadd.f32 0.0, %v3130
        %v3132 = vpop.f32.mrb[0].mxu0
        %3133 = vmatprep.mubr.f32.mxu0 0.0
        %3134 = vmatmul.mubr.f32.gmra.mrb[0].mxu0 %v2981
        %v3135 = vpop.f32.mrb[0].mxu0
        %v3136 = vadd.f32 0.0, %v3135
        %v3137 = vpop.f32.mrb[0].mxu0
        %3138 = vmatprep.mubr.f32.mxu0 0.0
        %3139 = vmatmul.mubr.f32.gmra.mrb[0].mxu0 %v2982
        %v3140 = vpop.f32.mrb[0].mxu0
        %v3141 = vadd.f32 0.0, %v3140
        %v3142 = vpop.f32.mrb[0].mxu0
        %3143 = vmatprep.mubr.f32.mxu0 0.0
        %3144 = vmatmul.mubr.f32.gmra.mrb[0].mxu0 %v2983
        %v3145 = vpop.f32.mrb[0].mxu0
        %v3146 = vadd.f32 0.0, %v3145
        %v3147 = vpop.f32.mrb[0].mxu0
        %3148 = vmatprep.mubr.f32.mxu0 0.0
        %3149 = vmatmul.mubr.f32.gmra.mrb[0].mxu0 %v2984
        %v3150 = vpop.f32.mrb[0].mxu0
        %v3151 = vadd.f32 0.0, %v3150
        %v3152 = vpop.f32.mrb[0].mxu0
        %3153 = vmatprep.mubr.f32.mxu0 0.0
        %3154 = vmatmul.mubr.f32.gmra.mrb[0].mxu0 %v2985
        %v3155 = vpop.f32.mrb[0].mxu0
        %v3156 = vadd.f32 0.0, %v3155
        %v3157 = vpop.f32.mrb[0].mxu0
        %3158 = vmatprep.mubr.f32.mxu0 0.0
        %3159 = vmatmul.mubr.f32.gmra.mrb[0].mxu0 %v2986
        %v3160 = vpop.f32.mrb[0].mxu0
        %v3161 = vadd.f32 0.0, %v3160
        %v3162 = vpop.f32.mrb[0].mxu0
        %3163 = vmatprep.mubr.f32.mxu0 0.0
        %3164 = vmatmul.mubr.f32.gmra.mrb[0].mxu0 %v2987
        %v3165 = vpop.f32.mrb[0].mxu0
        %v3166 = vadd.f32 0.0, %v3165
        %v3167 = vpop.f32.mrb[0].mxu0
        %3168 = vmatprep.mubr.f32.mxu0 0.0
        %3169 = vmatmul.mubr.f32.gmra.mrb[0].mxu0 %v2988
        %v3170 = vpop.f32.mrb[0].mxu0
        %v3171 = vadd.f32 0.0, %v3170
        %v3172 = vpop.f32.mrb[0].mxu0
        %3173 = vmatprep.mubr.f32.mxu0 0.0
        %3174 = vmatmul.mubr.f32.gmra.mrb[0].mxu0 %v2989
        %v3175 = vpop.f32.mrb[0].mxu0
        %v3176 = vadd.f32 0.0, %v3175
        %v3177 = vpop.f32.mrb[0].mxu0
        %3178 = vmatprep.mubr.f32.mxu0 0.0
        %3179 = vmatmul.mubr.f32.gmra.mrb[0].mxu0 %v2990
        %v3180 = vpop.f32.mrb[0].mxu0
        %v3181 = vadd.f32 0.0, %v3180
        %v3182 = vpop.f32.mrb[0].mxu0
        %3183 = vmatprep.mubr.f32.mxu0 0.0
        %3184 = vmatmul.mubr.f32.gmra.mrb[0].mxu0 %v2991
        %v3185 = vpop.f32.mrb[0].mxu0
        %v3186 = vadd.f32 0.0, %v3185
        %v3187 = vpop.f32.mrb[0].mxu0
        %3188 = vmatprep.mubr.f32.mxu0 0.0
        %3189 = vmatmul.mubr.f32.gmra.mrb[0].mxu0 %v2992
        %v3190 = vpop.f32.mrb[0].mxu0
        %v3191 = vadd.f32 0.0, %v3190
        %v3192 = vpop.f32.mrb[0].mxu0
        %3193 = vmatprep.mubr.f32.mxu0 0.0
        %3194 = vmatmul.mubr.f32.gmra.mrb[0].mxu0 %v2993
        %v3195 = vpop.f32.mrb[0].mxu0
        %v3196 = vadd.f32 0.0, %v3195
        %v3197 = vpop.f32.mrb[0].mxu0
        %3198 = vmatprep.mubr.f32.mxu0 0.0
        %3199 = vmatmul.mubr.f32.gmra.mrb[0].mxu0 %v2994
        %v3200 = vpop.f32.mrb[0].mxu0
        %v3201 = vadd.f32 0.0, %v3200
        %v3202 = vpop.f32.mrb[0].mxu0
        %3203 = vmatprep.mubr.f32.mxu0 0.0
        %3204 = vmatmul.mubr.f32.gmra.mrb[0].mxu0 %v2995
        %v3205 = vpop.f32.mrb[0].mxu0
        %v3206 = vadd.f32 0.0, %v3205
        %v3207 = vpop.f32.mrb[0].mxu0
        %3208 = vmatprep.mubr.f32.mxu0 0.0
        %3209 = vmatmul.mubr.f32.gmra.mrb[0].mxu0 %v2996
        %v3210 = vpop.f32.mrb[0].mxu0
        %v3211 = vadd.f32 0.0, %v3210
        %v3212 = vpop.f32.mrb[0].mxu0
        %3213 = vmatprep.mubr.f32.mxu0 0.0
        %3214 = vmatmul.mubr.f32.gmra.mrb[0].mxu0 %v2997
        %v3215 = vpop.f32.mrb[0].mxu0
        %v3216 = vadd.f32 0.0, %v3215
        %v3217 = vpop.f32.mrb[0].mxu0
        %3218 = vmatprep.mubr.f32.mxu0 0.0
        %3219 = vmatmul.mubr.f32.gmra.mrb[0].mxu0 %v2998
        %v3220 = vpop.f32.mrb[0].mxu0
        %v3221 = vadd.f32 0.0, %v3220
        %v3222 = vpop.f32.mrb[0].mxu0
        %3223 = vmatprep.mubr.f32.mxu0 0.0
        %3224 = vmatmul.mubr.f32.gmra.mrb[0].mxu0 %v2999
        %v3225 = vpop.f32.mrb[0].mxu0
        %v3226 = vadd.f32 0.0, %v3225
        %v3227 = vpop.f32.mrb[0].mxu0
        %3228 = vmatprep.mubr.f32.mxu0 0.0
        %3229 = vmatmul.mubr.f32.gmra.mrb[0].mxu0 %v3000
        %v3230 = vpop.f32.mrb[0].mxu0
        %v3231 = vadd.f32 0.0, %v3230
        %v3232 = vpop.f32.mrb[0].mxu0
        %3233 = vmatprep.mubr.f32.mxu0 0.0
        %3234 = vmatmul.mubr.f32.gmra.mrb[0].mxu0 %v3001
        %v3235 = vpop.f32.mrb[0].mxu0
        %v3236 = vadd.f32 0.0, %v3235
        %v3237 = vpop.f32.mrb[0].mxu0
        %3238 = vmatprep.mubr.f32.mxu0 0.0
        %3239 = vmatmul.mubr.f32.gmra.mrb[0].mxu0 %v3002
        %v3240 = vpop.f32.mrb[0].mxu0
        %v3241 = vadd.f32 0.0, %v3240
        %v3242 = vpop.f32.mrb[0].mxu0
        %3243 = vdwg.mxu0
        %v3244 = vld [vmem:[%s8] sm:$0x1]
        %v3245 = vld [vmem:[%s9] sm:$0x1]
        %v3246 = vadd.f32 %v3086, %v3091
        %v3247 = vadd.f32 %v3246, %v3096
        %v3248 = vadd.f32 %v3247, %v3101
        %v3249 = vadd.f32 %v3248, %v3106
        %v3250 = vadd.f32 %v3249, %v3111
        %v3251 = vadd.f32 %v3250, %v3116
        %v3252 = vadd.f32 %v3251, %v3121
        %v3253 = vadd.f32 %v3252, %v3126
        %v3254 = vadd.f32 %v3253, %v3131
        %v3255 = vadd.f32 %v3254, %v3136
        %v3256 = vadd.f32 %v3255, %v3141
        %v3257 = vadd.f32 %v3256, %v3146
        %v3258 = vadd.f32 %v3257, %v3151
        %v3259 = vadd.f32 %v3258, %v3156
        %v3260 = vadd.f32 %v3259, %v3161
        %v3261 = vadd.f32 %v3260, %v3166
        %v3262 = vadd.f32 %v3261, %v3171
        %v3263 = vadd.f32 %v3262, %v3176
        %v3264 = vadd.f32 %v3263, %v3181
        %v3265 = vadd.f32 %v3264, %v3186
        %v3266 = vadd.f32 %v3265, %v3191
        %v3267 = vadd.f32 %v3266, %v3196
        %v3268 = vadd.f32 %v3267, %v3201
        %v3269 = vadd.f32 %v3268, %v3206
        %v3270 = vadd.f32 %v3269, %v3211
        %v3271 = vadd.f32 %v3270, %v3216
        %v3272 = vadd.f32 %v3271, %v3221
        %v3273 = vadd.f32 %v3272, %v3226
        %v3274 = vadd.f32 %v3273, %v3231
        %v3275 = vadd.f32 %v3274, %v3236
        %v3276 = vadd.f32 %v3275, %v3241
        %v3277 = vrot.slane %v3276, 4
        %v3278 = vadd.f32 %v3276, %v3277
        %v3279 = vrot.slane %v3278, 2
        %v3280 = vadd.f32 %v3278, %v3279
        %v3281 = vrot.slane %v3280, 1
        %v3282 = vadd.f32 %v3280, %v3281
        %v3283 = vmul.f32 %v3086, %v3086
        %v3284 = vmul.f32 %v3091, %v3091
        %v3285 = vmul.f32 %v3096, %v3096
        %v3286 = vmul.f32 %v3101, %v3101
        %v3287 = vmul.f32 %v3106, %v3106
        %v3288 = vmul.f32 %v3111, %v3111
        %v3289 = vmul.f32 %v3116, %v3116
        %v3290 = vmul.f32 %v3121, %v3121
        %v3291 = vmul.f32 %v3126, %v3126
        %v3292 = vmul.f32 %v3131, %v3131
        %v3293 = vmul.f32 %v3136, %v3136
        %v3294 = vmul.f32 %v3141, %v3141
        %v3295 = vmul.f32 %v3146, %v3146
        %v3296 = vmul.f32 %v3151, %v3151
        %v3297 = vmul.f32 %v3156, %v3156
        %v3298 = vmul.f32 %v3161, %v3161
        %v3299 = vmul.f32 %v3166, %v3166
        %v3300 = vmul.f32 %v3171, %v3171
        %v3301 = vmul.f32 %v3176, %v3176
        %v3302 = vmul.f32 %v3181, %v3181
        %v3303 = vmul.f32 %v3186, %v3186
        %v3304 = vmul.f32 %v3191, %v3191
        %v3305 = vmul.f32 %v3196, %v3196
        %v3306 = vmul.f32 %v3201, %v3201
        %v3307 = vmul.f32 %v3206, %v3206
        %v3308 = vmul.f32 %v3211, %v3211
        %v3309 = vmul.f32 %v3216, %v3216
        %v3310 = vmul.f32 %v3221, %v3221
        %v3311 = vmul.f32 %v3226, %v3226
        %v3312 = vmul.f32 %v3231, %v3231
        %v3313 = vmul.f32 %v3236, %v3236
        %v3314 = vmul.f32 %v3241, %v3241
        %v3315 = vadd.f32 %v3283, %v3284
        %v3316 = vadd.f32 %v3315, %v3285
        %v3317 = vadd.f32 %v3316, %v3286
        %v3318 = vadd.f32 %v3317, %v3287
        %v3319 = vadd.f32 %v3318, %v3288
        %v3320 = vadd.f32 %v3319, %v3289
        %v3321 = vadd.f32 %v3320, %v3290
        %v3322 = vadd.f32 %v3321, %v3291
        %v3323 = vadd.f32 %v3322, %v3292
        %v3324 = vadd.f32 %v3323, %v3293
        %v3325 = vadd.f32 %v3324, %v3294
        %v3326 = vadd.f32 %v3325, %v3295
        %v3327 = vadd.f32 %v3326, %v3296
        %v3328 = vadd.f32 %v3327, %v3297
        %v3329 = vadd.f32 %v3328, %v3298
        %v3330 = vadd.f32 %v3329, %v3299
        %v3331 = vadd.f32 %v3330, %v3300
        %v3332 = vadd.f32 %v3331, %v3301
        %v3333 = vadd.f32 %v3332, %v3302
        %v3334 = vadd.f32 %v3333, %v3303
        %v3335 = vadd.f32 %v3334, %v3304
        %v3336 = vadd.f32 %v3335, %v3305
        %v3337 = vadd.f32 %v3336, %v3306
        %v3338 = vadd.f32 %v3337, %v3307
        %v3339 = vadd.f32 %v3338, %v3308
        %v3340 = vadd.f32 %v3339, %v3309
        %v3341 = vadd.f32 %v3340, %v3310
        %v3342 = vadd.f32 %v3341, %v3311
        %v3343 = vadd.f32 %v3342, %v3312
        %v3344 = vadd.f32 %v3343, %v3313
        %v3345 = vadd.f32 %v3344, %v3314
        %v3346 = vrot.slane %v3345, 4
        %v3347 = vadd.f32 %v3345, %v3346
        %v3348 = vrot.slane %v3347, 2
        %v3349 = vadd.f32 %v3347, %v3348
        %v3350 = vrot.slane %v3349, 1
        %v3351 = vadd.f32 %v3349, %v3350
        %v3352 = vmul.f32 %v3282, 0.00390625
        %v3353 = vmul.f32 %v3351, 0.00390625
        %v3354 = vmul.f32 %v3352, %v3352
        %v3355 = vsub.f32 %v3353, %v3354
        %v3356 = vadd.f32 %v3355, 1e-05
        %v3357 = vrsqrt.pop %v3356
        %v3358 = vsub.f32 %v3086, %v3352
        %v3359 = vsub.f32 %v3091, %v3352
        %v3360 = vsub.f32 %v3096, %v3352
        %v3361 = vsub.f32 %v3101, %v3352
        %v3362 = vsub.f32 %v3106, %v3352
        %v3363 = vsub.f32 %v3111, %v3352
        %v3364 = vsub.f32 %v3116, %v3352
        %v3365 = vsub.f32 %v3121, %v3352
        %v3366 = vsub.f32 %v3126, %v3352
        %v3367 = vsub.f32 %v3131, %v3352
        %v3368 = vsub.f32 %v3136, %v3352
        %v3369 = vsub.f32 %v3141, %v3352
        %v3370 = vsub.f32 %v3146, %v3352
        %v3371 = vsub.f32 %v3151, %v3352
        %v3372 = vsub.f32 %v3156, %v3352
        %v3373 = vsub.f32 %v3161, %v3352
        %v3374 = vsub.f32 %v3166, %v3352
        %v3375 = vsub.f32 %v3171, %v3352
        %v3376 = vsub.f32 %v3176, %v3352
        %v3377 = vsub.f32 %v3181, %v3352
        %v3378 = vsub.f32 %v3186, %v3352
        %v3379 = vsub.f32 %v3191, %v3352
        %v3380 = vsub.f32 %v3196, %v3352
        %v3381 = vsub.f32 %v3201, %v3352
        %v3382 = vsub.f32 %v3206, %v3352
        %v3383 = vsub.f32 %v3211, %v3352
        %v3384 = vsub.f32 %v3216, %v3352
        %v3385 = vsub.f32 %v3221, %v3352
        %v3386 = vsub.f32 %v3226, %v3352
        %v3387 = vsub.f32 %v3231, %v3352
        %v3388 = vsub.f32 %v3236, %v3352
        %v3389 = vsub.f32 %v3241, %v3352
        %v3390 = vmul.f32 %v3357, %v3244
        %v3391 = vlaneseq
        %v3392 = vshrl.u32 %v3391, 7
        %v3393 = vsub.s32 0, %v3392
        %v3394 = vrot.slane %v3390, %v3393
        %v3395 = vmul.f32 %v3358, %v3394
        %v3396 = vmul.f32 %v3359, %v3394
        %v3397 = vmul.f32 %v3360, %v3394
        %v3398 = vmul.f32 %v3361, %v3394
        %v3399 = vmul.f32 %v3362, %v3394
        %v3400 = vmul.f32 %v3363, %v3394
        %v3401 = vmul.f32 %v3364, %v3394
        %v3402 = vmul.f32 %v3365, %v3394
        %v3403 = vmul.f32 %v3366, %v3394
        %v3404 = vmul.f32 %v3367, %v3394
        %v3405 = vmul.f32 %v3368, %v3394
        %v3406 = vmul.f32 %v3369, %v3394
        %v3407 = vmul.f32 %v3370, %v3394
        %v3408 = vmul.f32 %v3371, %v3394
        %v3409 = vmul.f32 %v3372, %v3394
        %v3410 = vmul.f32 %v3373, %v3394
        %v3411 = vmul.f32 %v3374, %v3394
        %v3412 = vmul.f32 %v3375, %v3394
        %v3413 = vmul.f32 %v3376, %v3394
        %v3414 = vmul.f32 %v3377, %v3394
        %v3415 = vmul.f32 %v3378, %v3394
        %v3416 = vmul.f32 %v3379, %v3394
        %v3417 = vmul.f32 %v3380, %v3394
        %v3418 = vmul.f32 %v3381, %v3394
        %v3419 = vmul.f32 %v3382, %v3394
        %v3420 = vmul.f32 %v3383, %v3394
        %v3421 = vmul.f32 %v3384, %v3394
        %v3422 = vmul.f32 %v3385, %v3394
        %v3423 = vmul.f32 %v3386, %v3394
        %v3424 = vmul.f32 %v3387, %v3394
        %v3425 = vmul.f32 %v3388, %v3394
        %v3426 = vmul.f32 %v3389, %v3394
        %v3428 = vlaneseq
        %v3429 = vshrl.u32 %v3428, 7
        %v3430 = vsub.s32 0, %v3429
        %v3431 = vrot.slane %v3245, %v3430
        %v3433 = vadd.f32 %v3395, %v3431
        %v3434 = vadd.f32 %v3396, %v3431
        %v3435 = vadd.f32 %v3397, %v3431
        %v3436 = vadd.f32 %v3398, %v3431
        %v3437 = vadd.f32 %v3399, %v3431
        %v3438 = vadd.f32 %v3400, %v3431
        %v3439 = vadd.f32 %v3401, %v3431
        %v3440 = vadd.f32 %v3402, %v3431
        %v3441 = vadd.f32 %v3403, %v3431
        %v3442 = vadd.f32 %v3404, %v3431
        %v3443 = vadd.f32 %v3405, %v3431
        %v3444 = vadd.f32 %v3406, %v3431
        %v3445 = vadd.f32 %v3407, %v3431
        %v3446 = vadd.f32 %v3408, %v3431
        %v3447 = vadd.f32 %v3409, %v3431
        %v3448 = vadd.f32 %v3410, %v3431
        %v3449 = vadd.f32 %v3411, %v3431
        %v3450 = vadd.f32 %v3412, %v3431
        %v3451 = vadd.f32 %v3413, %v3431
        %v3452 = vadd.f32 %v3414, %v3431
        %v3453 = vadd.f32 %v3415, %v3431
        %v3454 = vadd.f32 %v3416, %v3431
        %v3455 = vadd.f32 %v3417, %v3431
        %v3456 = vadd.f32 %v3418, %v3431
        %v3457 = vadd.f32 %v3419, %v3431
        %v3458 = vadd.f32 %v3420, %v3431
        %v3459 = vadd.f32 %v3421, %v3431
        %v3460 = vadd.f32 %v3422, %v3431
        %v3461 = vadd.f32 %v3423, %v3431
        %v3462 = vadd.f32 %v3424, %v3431
        %v3463 = vadd.f32 %v3425, %v3431
        %v3464 = vadd.f32 %v3426, %v3431
        %v3465 = vld [vmem:[#allocation11] sm:$0xff]
        %v3466 = vld [vmem:[#allocation11 + $0x8] sm:$0xff]
        %v3467 = vld [vmem:[#allocation11 + $0x10] sm:$0xff]
        %v3468 = vld [vmem:[#allocation11 + $0x18] sm:$0xff]
        %v3469 = vld [vmem:[#allocation11 + $0x20] sm:$0xff]
        %v3470 = vld [vmem:[#allocation11 + $0x28] sm:$0xff]
        %v3471 = vld [vmem:[#allocation11 + $0x30] sm:$0xff]
        %v3472 = vld [vmem:[#allocation11 + $0x38] sm:$0xff]
        %v3473 = vld [vmem:[#allocation11 + $0x40] sm:$0xff]
        %v3474 = vld [vmem:[#allocation11 + $0x48] sm:$0xff]
        %v3475 = vld [vmem:[#allocation11 + $0x50] sm:$0xff]
        %v3476 = vld [vmem:[#allocation11 + $0x58] sm:$0xff]
        %v3477 = vld [vmem:[#allocation11 + $0x60] sm:$0xff]
        %v3478 = vld [vmem:[#allocation11 + $0x68] sm:$0xff]
        %v3479 = vld [vmem:[#allocation11 + $0x70] sm:$0xff]
        %v3480 = vld [vmem:[#allocation11 + $0x78] sm:$0xff]
        %3481 = vmatprep.subr.mxu0 0.0
        %3482 = vmatpush1.msra.mxu0 %v3465
        %3483 = vmatprep.subr.mxu0 0.0
        %3484 = vmatpush1.msra.mxu0 %v3466
        %3485 = vmatprep.subr.mxu0 0.0
        %3486 = vmatpush1.msra.mxu0 %v3467
        %3487 = vmatprep.subr.mxu0 0.0
        %3488 = vmatpush1.msra.mxu0 %v3468
        %3489 = vmatprep.subr.mxu0 0.0
        %3490 = vmatpush1.msra.mxu0 %v3469
        %3491 = vmatprep.subr.mxu0 0.0
        %3492 = vmatpush1.msra.mxu0 %v3470
        %3493 = vmatprep.subr.mxu0 0.0
        %3494 = vmatpush1.msra.mxu0 %v3471
        %3495 = vmatprep.subr.mxu0 0.0
        %3496 = vmatpush1.msra.mxu0 %v3472
        %3497 = vmatprep.subr.mxu0 0.0
        %3498 = vmatpush1.msra.mxu0 %v3473
        %3499 = vmatprep.subr.mxu0 0.0
        %3500 = vmatpush1.msra.mxu0 %v3474
        %3501 = vmatprep.subr.mxu0 0.0
        %3502 = vmatpush1.msra.mxu0 %v3475
        %3503 = vmatprep.subr.mxu0 0.0
        %3504 = vmatpush1.msra.mxu0 %v3476
        %3505 = vmatprep.subr.mxu0 0.0
        %3506 = vmatpush1.msra.mxu0 %v3477
        %3507 = vmatprep.subr.mxu0 0.0
        %3508 = vmatpush1.msra.mxu0 %v3478
        %3509 = vmatprep.subr.mxu0 0.0
        %3510 = vmatpush1.msra.mxu0 %v3479
        %3511 = vmatprep.subr.mxu0 0.0
        %3512 = vmatpush1.msra.mxu0 %v3480
        %3513 = vmatprep.subr.mxu0 0.0
        %3514 = vmatpush1.msra.mxu0 0.0
        %3515 = vmatprep.subr.mxu0 0.0
        %3516 = vmatpush1.msra.mxu0 0.0
        %3517 = vmatprep.subr.mxu0 0.0
        %3518 = vmatpush1.msra.mxu0 0.0
        %3519 = vmatprep.subr.mxu0 0.0
        %3520 = vmatpush1.msra.mxu0 0.0
        %3521 = vmatprep.subr.mxu0 0.0
        %3522 = vmatpush1.msra.mxu0 0.0
        %3523 = vmatprep.subr.mxu0 0.0
        %3524 = vmatpush1.msra.mxu0 0.0
        %3525 = vmatprep.subr.mxu0 0.0
        %3526 = vmatpush1.msra.mxu0 0.0
        %3527 = vmatprep.subr.mxu0 0.0
        %3528 = vmatpush1.msra.mxu0 0.0
        %3529 = vmatprep.subr.mxu0 0.0
        %3530 = vmatpush1.msra.mxu0 0.0
        %3531 = vmatprep.subr.mxu0 0.0
        %3532 = vmatpush1.msra.mxu0 0.0
        %3533 = vmatprep.subr.mxu0 0.0
        %3534 = vmatpush1.msra.mxu0 0.0
        %3535 = vmatprep.subr.mxu0 0.0
        %3536 = vmatpush1.msra.mxu0 0.0
        %3537 = vmatprep.subr.mxu0 0.0
        %3538 = vmatpush1.msra.mxu0 0.0
        %3539 = vmatprep.subr.mxu0 0.0
        %3540 = vmatpush1.msra.mxu0 0.0
        %3541 = vmatprep.subr.mxu0 0.0
        %3542 = vmatpush1.msra.mxu0 0.0
        %3543 = vmatprep.subr.mxu0 0.0
        %3544 = vmatpush1.msra.mxu0 0.0
        %3545 = vmatprep.mubr.f32.mxu0 0.0
        %3546 = vmatmul.mubr.f32.gmra.mrb[0].mxu0 %v517
        %v3547 = vpop.f32.mrb[0].mxu0
        %v3548 = vadd.f32 0.0, %v3547
        %v3549 = vpop.f32.mrb[0].mxu0
        %3550 = vmatprep.mubr.f32.mxu0 0.0
        %3551 = vmatmul.mubr.f32.gmra.mrb[0].mxu0 %v518
        %v3552 = vpop.f32.mrb[0].mxu0
        %v3553 = vadd.f32 0.0, %v3552
        %v3554 = vpop.f32.mrb[0].mxu0
        %3555 = vmatprep.mubr.f32.mxu0 0.0
        %3556 = vmatmul.mubr.f32.gmra.mrb[0].mxu0 %v519
        %v3557 = vpop.f32.mrb[0].mxu0
        %v3558 = vadd.f32 0.0, %v3557
        %v3559 = vpop.f32.mrb[0].mxu0
        %3560 = vmatprep.mubr.f32.mxu0 0.0
        %3561 = vmatmul.mubr.f32.gmra.mrb[0].mxu0 %v520
        %v3562 = vpop.f32.mrb[0].mxu0
        %v3563 = vadd.f32 0.0, %v3562
        %v3564 = vpop.f32.mrb[0].mxu0
        %3565 = vmatprep.mubr.f32.mxu0 0.0
        %3566 = vmatmul.mubr.f32.gmra.mrb[0].mxu0 %v521
        %v3567 = vpop.f32.mrb[0].mxu0
        %v3568 = vadd.f32 0.0, %v3567
        %v3569 = vpop.f32.mrb[0].mxu0
        %3570 = vmatprep.mubr.f32.mxu0 0.0
        %3571 = vmatmul.mubr.f32.gmra.mrb[0].mxu0 %v522
        %v3572 = vpop.f32.mrb[0].mxu0
        %v3573 = vadd.f32 0.0, %v3572
        %v3574 = vpop.f32.mrb[0].mxu0
        %3575 = vmatprep.mubr.f32.mxu0 0.0
        %3576 = vmatmul.mubr.f32.gmra.mrb[0].mxu0 %v523
        %v3577 = vpop.f32.mrb[0].mxu0
        %v3578 = vadd.f32 0.0, %v3577
        %v3579 = vpop.f32.mrb[0].mxu0
        %3580 = vmatprep.mubr.f32.mxu0 0.0
        %3581 = vmatmul.mubr.f32.gmra.mrb[0].mxu0 %v524
        %v3582 = vpop.f32.mrb[0].mxu0
        %v3583 = vadd.f32 0.0, %v3582
        %v3584 = vpop.f32.mrb[0].mxu0
        %3585 = vmatprep.mubr.f32.mxu0 0.0
        %3586 = vmatmul.mubr.f32.gmra.mrb[0].mxu0 %v525
        %v3587 = vpop.f32.mrb[0].mxu0
        %v3588 = vadd.f32 0.0, %v3587
        %v3589 = vpop.f32.mrb[0].mxu0
        %3590 = vmatprep.mubr.f32.mxu0 0.0
        %3591 = vmatmul.mubr.f32.gmra.mrb[0].mxu0 %v526
        %v3592 = vpop.f32.mrb[0].mxu0
        %v3593 = vadd.f32 0.0, %v3592
        %v3594 = vpop.f32.mrb[0].mxu0
        %3595 = vmatprep.mubr.f32.mxu0 0.0
        %3596 = vmatmul.mubr.f32.gmra.mrb[0].mxu0 %v527
        %v3597 = vpop.f32.mrb[0].mxu0
        %v3598 = vadd.f32 0.0, %v3597
        %v3599 = vpop.f32.mrb[0].mxu0
        %3600 = vmatprep.mubr.f32.mxu0 0.0
        %3601 = vmatmul.mubr.f32.gmra.mrb[0].mxu0 %v528
        %v3602 = vpop.f32.mrb[0].mxu0
        %v3603 = vadd.f32 0.0, %v3602
        %v3604 = vpop.f32.mrb[0].mxu0
        %3605 = vmatprep.mubr.f32.mxu0 0.0
        %3606 = vmatmul.mubr.f32.gmra.mrb[0].mxu0 %v529
        %v3607 = vpop.f32.mrb[0].mxu0
        %v3608 = vadd.f32 0.0, %v3607
        %v3609 = vpop.f32.mrb[0].mxu0
        %3610 = vmatprep.mubr.f32.mxu0 0.0
        %3611 = vmatmul.mubr.f32.gmra.mrb[0].mxu0 %v530
        %v3612 = vpop.f32.mrb[0].mxu0
        %v3613 = vadd.f32 0.0, %v3612
        %v3614 = vpop.f32.mrb[0].mxu0
        %3615 = vmatprep.mubr.f32.mxu0 0.0
        %3616 = vmatmul.mubr.f32.gmra.mrb[0].mxu0 %v531
        %v3617 = vpop.f32.mrb[0].mxu0
        %v3618 = vadd.f32 0.0, %v3617
        %v3619 = vpop.f32.mrb[0].mxu0
        %3620 = vmatprep.mubr.f32.mxu0 0.0
        %3621 = vmatmul.mubr.f32.gmra.mrb[0].mxu0 %v532
        %v3622 = vpop.f32.mrb[0].mxu0
        %v3623 = vadd.f32 0.0, %v3622
        %v3624 = vpop.f32.mrb[0].mxu0
        %3625 = vmatprep.mubr.f32.mxu0 0.0
        %3626 = vmatmul.mubr.f32.gmra.mrb[0].mxu0 %v533
        %v3627 = vpop.f32.mrb[0].mxu0
        %v3628 = vadd.f32 0.0, %v3627
        %v3629 = vpop.f32.mrb[0].mxu0
        %3630 = vmatprep.mubr.f32.mxu0 0.0
        %3631 = vmatmul.mubr.f32.gmra.mrb[0].mxu0 %v534
        %v3632 = vpop.f32.mrb[0].mxu0
        %v3633 = vadd.f32 0.0, %v3632
        %v3634 = vpop.f32.mrb[0].mxu0
        %3635 = vmatprep.mubr.f32.mxu0 0.0
        %3636 = vmatmul.mubr.f32.gmra.mrb[0].mxu0 %v535
        %v3637 = vpop.f32.mrb[0].mxu0
        %v3638 = vadd.f32 0.0, %v3637
        %v3639 = vpop.f32.mrb[0].mxu0
        %3640 = vmatprep.mubr.f32.mxu0 0.0
        %3641 = vmatmul.mubr.f32.gmra.mrb[0].mxu0 %v536
        %v3642 = vpop.f32.mrb[0].mxu0
        %v3643 = vadd.f32 0.0, %v3642
        %v3644 = vpop.f32.mrb[0].mxu0
        %3645 = vmatprep.mubr.f32.mxu0 0.0
        %3646 = vmatmul.mubr.f32.gmra.mrb[0].mxu0 %v537
        %v3647 = vpop.f32.mrb[0].mxu0
        %v3648 = vadd.f32 0.0, %v3647
        %v3649 = vpop.f32.mrb[0].mxu0
        %3650 = vmatprep.mubr.f32.mxu0 0.0
        %3651 = vmatmul.mubr.f32.gmra.mrb[0].mxu0 %v538
        %v3652 = vpop.f32.mrb[0].mxu0
        %v3653 = vadd.f32 0.0, %v3652
        %v3654 = vpop.f32.mrb[0].mxu0
        %3655 = vmatprep.mubr.f32.mxu0 0.0
        %3656 = vmatmul.mubr.f32.gmra.mrb[0].mxu0 %v539
        %v3657 = vpop.f32.mrb[0].mxu0
        %v3658 = vadd.f32 0.0, %v3657
        %v3659 = vpop.f32.mrb[0].mxu0
        %3660 = vmatprep.mubr.f32.mxu0 0.0
        %3661 = vmatmul.mubr.f32.gmra.mrb[0].mxu0 %v540
        %v3662 = vpop.f32.mrb[0].mxu0
        %v3663 = vadd.f32 0.0, %v3662
        %v3664 = vpop.f32.mrb[0].mxu0
        %3665 = vmatprep.mubr.f32.mxu0 0.0
        %3666 = vmatmul.mubr.f32.gmra.mrb[0].mxu0 %v541
        %v3667 = vpop.f32.mrb[0].mxu0
        %v3668 = vadd.f32 0.0, %v3667
        %v3669 = vpop.f32.mrb[0].mxu0
        %3670 = vmatprep.mubr.f32.mxu0 0.0
        %3671 = vmatmul.mubr.f32.gmra.mrb[0].mxu0 %v542
        %v3672 = vpop.f32.mrb[0].mxu0
        %v3673 = vadd.f32 0.0, %v3672
        %v3674 = vpop.f32.mrb[0].mxu0
        %3675 = vmatprep.mubr.f32.mxu0 0.0
        %3676 = vmatmul.mubr.f32.gmra.mrb[0].mxu0 %v543
        %v3677 = vpop.f32.mrb[0].mxu0
        %v3678 = vadd.f32 0.0, %v3677
        %v3679 = vpop.f32.mrb[0].mxu0
        %3680 = vmatprep.mubr.f32.mxu0 0.0
        %3681 = vmatmul.mubr.f32.gmra.mrb[0].mxu0 %v544
        %v3682 = vpop.f32.mrb[0].mxu0
        %v3683 = vadd.f32 0.0, %v3682
        %v3684 = vpop.f32.mrb[0].mxu0
        %3685 = vmatprep.mubr.f32.mxu0 0.0
        %3686 = vmatmul.mubr.f32.gmra.mrb[0].mxu0 %v545
        %v3687 = vpop.f32.mrb[0].mxu0
        %v3688 = vadd.f32 0.0, %v3687
        %v3689 = vpop.f32.mrb[0].mxu0
        %3690 = vmatprep.mubr.f32.mxu0 0.0
        %3691 = vmatmul.mubr.f32.gmra.mrb[0].mxu0 %v546
        %v3692 = vpop.f32.mrb[0].mxu0
        %v3693 = vadd.f32 0.0, %v3692
        %v3694 = vpop.f32.mrb[0].mxu0
        %3695 = vmatprep.mubr.f32.mxu0 0.0
        %3696 = vmatmul.mubr.f32.gmra.mrb[0].mxu0 %v547
        %v3697 = vpop.f32.mrb[0].mxu0
        %v3698 = vadd.f32 0.0, %v3697
        %v3699 = vpop.f32.mrb[0].mxu0
        %3700 = vmatprep.mubr.f32.mxu0 0.0
        %3701 = vmatmul.mubr.f32.gmra.mrb[0].mxu0 %v548
        %v3702 = vpop.f32.mrb[0].mxu0
        %v3703 = vadd.f32 0.0, %v3702
        %v3704 = vpop.f32.mrb[0].mxu0
        %3705 = vdwg.mxu0
        %v3706 = vld [vmem:[%s11] sm:$0x1]
        %v3707 = vld [vmem:[%s12] sm:$0x1]
        %v3708 = vadd.f32 %v3548, %v3553
        %v3709 = vadd.f32 %v3708, %v3558
        %v3710 = vadd.f32 %v3709, %v3563
        %v3711 = vadd.f32 %v3710, %v3568
        %v3712 = vadd.f32 %v3711, %v3573
        %v3713 = vadd.f32 %v3712, %v3578
        %v3714 = vadd.f32 %v3713, %v3583
        %v3715 = vadd.f32 %v3714, %v3588
        %v3716 = vadd.f32 %v3715, %v3593
        %v3717 = vadd.f32 %v3716, %v3598
        %v3718 = vadd.f32 %v3717, %v3603
        %v3719 = vadd.f32 %v3718, %v3608
        %v3720 = vadd.f32 %v3719, %v3613
        %v3721 = vadd.f32 %v3720, %v3618
        %v3722 = vadd.f32 %v3721, %v3623
        %v3723 = vadd.f32 %v3722, %v3628
        %v3724 = vadd.f32 %v3723, %v3633
        %v3725 = vadd.f32 %v3724, %v3638
        %v3726 = vadd.f32 %v3725, %v3643
        %v3727 = vadd.f32 %v3726, %v3648
        %v3728 = vadd.f32 %v3727, %v3653
        %v3729 = vadd.f32 %v3728, %v3658
        %v3730 = vadd.f32 %v3729, %v3663
        %v3731 = vadd.f32 %v3730, %v3668
        %v3732 = vadd.f32 %v3731, %v3673
        %v3733 = vadd.f32 %v3732, %v3678
        %v3734 = vadd.f32 %v3733, %v3683
        %v3735 = vadd.f32 %v3734, %v3688
        %v3736 = vadd.f32 %v3735, %v3693
        %v3737 = vadd.f32 %v3736, %v3698
        %v3738 = vadd.f32 %v3737, %v3703
        %v3739 = vrot.slane %v3738, 4
        %v3740 = vadd.f32 %v3738, %v3739
        %v3741 = vrot.slane %v3740, 2
        %v3742 = vadd.f32 %v3740, %v3741
        %v3743 = vrot.slane %v3742, 1
        %v3744 = vadd.f32 %v3742, %v3743
        %v3745 = vmul.f32 %v3548, %v3548
        %v3746 = vmul.f32 %v3553, %v3553
        %v3747 = vmul.f32 %v3558, %v3558
        %v3748 = vmul.f32 %v3563, %v3563
        %v3749 = vmul.f32 %v3568, %v3568
        %v3750 = vmul.f32 %v3573, %v3573
        %v3751 = vmul.f32 %v3578, %v3578
        %v3752 = vmul.f32 %v3583, %v3583
        %v3753 = vmul.f32 %v3588, %v3588
        %v3754 = vmul.f32 %v3593, %v3593
        %v3755 = vmul.f32 %v3598, %v3598
        %v3756 = vmul.f32 %v3603, %v3603
        %v3757 = vmul.f32 %v3608, %v3608
        %v3758 = vmul.f32 %v3613, %v3613
        %v3759 = vmul.f32 %v3618, %v3618
        %v3760 = vmul.f32 %v3623, %v3623
        %v3761 = vmul.f32 %v3628, %v3628
        %v3762 = vmul.f32 %v3633, %v3633
        %v3763 = vmul.f32 %v3638, %v3638
        %v3764 = vmul.f32 %v3643, %v3643
        %v3765 = vmul.f32 %v3648, %v3648
        %v3766 = vmul.f32 %v3653, %v3653
        %v3767 = vmul.f32 %v3658, %v3658
        %v3768 = vmul.f32 %v3663, %v3663
        %v3769 = vmul.f32 %v3668, %v3668
        %v3770 = vmul.f32 %v3673, %v3673
        %v3771 = vmul.f32 %v3678, %v3678
        %v3772 = vmul.f32 %v3683, %v3683
        %v3773 = vmul.f32 %v3688, %v3688
        %v3774 = vmul.f32 %v3693, %v3693
        %v3775 = vmul.f32 %v3698, %v3698
        %v3776 = vmul.f32 %v3703, %v3703
        %v3777 = vadd.f32 %v3745, %v3746
        %v3778 = vadd.f32 %v3777, %v3747
        %v3779 = vadd.f32 %v3778, %v3748
        %v3780 = vadd.f32 %v3779, %v3749
        %v3781 = vadd.f32 %v3780, %v3750
        %v3782 = vadd.f32 %v3781, %v3751
        %v3783 = vadd.f32 %v3782, %v3752
        %v3784 = vadd.f32 %v3783, %v3753
        %v3785 = vadd.f32 %v3784, %v3754
        %v3786 = vadd.f32 %v3785, %v3755
        %v3787 = vadd.f32 %v3786, %v3756
        %v3788 = vadd.f32 %v3787, %v3757
        %v3789 = vadd.f32 %v3788, %v3758
        %v3790 = vadd.f32 %v3789, %v3759
        %v3791 = vadd.f32 %v3790, %v3760
        %v3792 = vadd.f32 %v3791, %v3761
        %v3793 = vadd.f32 %v3792, %v3762
        %v3794 = vadd.f32 %v3793, %v3763
        %v3795 = vadd.f32 %v3794, %v3764
        %v3796 = vadd.f32 %v3795, %v3765
        %v3797 = vadd.f32 %v3796, %v3766
        %v3798 = vadd.f32 %v3797, %v3767
        %v3799 = vadd.f32 %v3798, %v3768
        %v3800 = vadd.f32 %v3799, %v3769
        %v3801 = vadd.f32 %v3800, %v3770
        %v3802 = vadd.f32 %v3801, %v3771
        %v3803 = vadd.f32 %v3802, %v3772
        %v3804 = vadd.f32 %v3803, %v3773
        %v3805 = vadd.f32 %v3804, %v3774
        %v3806 = vadd.f32 %v3805, %v3775
        %v3807 = vadd.f32 %v3806, %v3776
        %v3808 = vrot.slane %v3807, 4
        %v3809 = vadd.f32 %v3807, %v3808
        %v3810 = vrot.slane %v3809, 2
        %v3811 = vadd.f32 %v3809, %v3810
        %v3812 = vrot.slane %v3811, 1
        %v3813 = vadd.f32 %v3811, %v3812
        %v3814 = vmul.f32 %v3744, 0.00390625
        %v3815 = vmul.f32 %v3813, 0.00390625
        %v3816 = vmul.f32 %v3814, %v3814
        %v3817 = vsub.f32 %v3815, %v3816
        %v3818 = vadd.f32 %v3817, 1e-05
        %v3819 = vrsqrt.pop %v3818
        %v3820 = vsub.f32 %v3548, %v3814
        %v3821 = vsub.f32 %v3553, %v3814
        %v3822 = vsub.f32 %v3558, %v3814
        %v3823 = vsub.f32 %v3563, %v3814
        %v3824 = vsub.f32 %v3568, %v3814
        %v3825 = vsub.f32 %v3573, %v3814
        %v3826 = vsub.f32 %v3578, %v3814
        %v3827 = vsub.f32 %v3583, %v3814
        %v3828 = vsub.f32 %v3588, %v3814
        %v3829 = vsub.f32 %v3593, %v3814
        %v3830 = vsub.f32 %v3598, %v3814
        %v3831 = vsub.f32 %v3603, %v3814
        %v3832 = vsub.f32 %v3608, %v3814
        %v3833 = vsub.f32 %v3613, %v3814
        %v3834 = vsub.f32 %v3618, %v3814
        %v3835 = vsub.f32 %v3623, %v3814
        %v3836 = vsub.f32 %v3628, %v3814
        %v3837 = vsub.f32 %v3633, %v3814
        %v3838 = vsub.f32 %v3638, %v3814
        %v3839 = vsub.f32 %v3643, %v3814
        %v3840 = vsub.f32 %v3648, %v3814
        %v3841 = vsub.f32 %v3653, %v3814
        %v3842 = vsub.f32 %v3658, %v3814
        %v3843 = vsub.f32 %v3663, %v3814
        %v3844 = vsub.f32 %v3668, %v3814
        %v3845 = vsub.f32 %v3673, %v3814
        %v3846 = vsub.f32 %v3678, %v3814
        %v3847 = vsub.f32 %v3683, %v3814
        %v3848 = vsub.f32 %v3688, %v3814
        %v3849 = vsub.f32 %v3693, %v3814
        %v3850 = vsub.f32 %v3698, %v3814
        %v3851 = vsub.f32 %v3703, %v3814
        %v3852 = vmul.f32 %v3819, %v3706
        %v3853 = vlaneseq
        %v3854 = vshrl.u32 %v3853, 7
        %v3855 = vsub.s32 0, %v3854
        %v3856 = vrot.slane %v3852, %v3855
        %v3857 = vmul.f32 %v3820, %v3856
        %v3858 = vmul.f32 %v3821, %v3856
        %v3859 = vmul.f32 %v3822, %v3856
        %v3860 = vmul.f32 %v3823, %v3856
        %v3861 = vmul.f32 %v3824, %v3856
        %v3862 = vmul.f32 %v3825, %v3856
        %v3863 = vmul.f32 %v3826, %v3856
        %v3864 = vmul.f32 %v3827, %v3856
        %v3865 = vmul.f32 %v3828, %v3856
        %v3866 = vmul.f32 %v3829, %v3856
        %v3867 = vmul.f32 %v3830, %v3856
        %v3868 = vmul.f32 %v3831, %v3856
        %v3869 = vmul.f32 %v3832, %v3856
        %v3870 = vmul.f32 %v3833, %v3856
        %v3871 = vmul.f32 %v3834, %v3856
        %v3872 = vmul.f32 %v3835, %v3856
        %v3873 = vmul.f32 %v3836, %v3856
        %v3874 = vmul.f32 %v3837, %v3856
        %v3875 = vmul.f32 %v3838, %v3856
        %v3876 = vmul.f32 %v3839, %v3856
        %v3877 = vmul.f32 %v3840, %v3856
        %v3878 = vmul.f32 %v3841, %v3856
        %v3879 = vmul.f32 %v3842, %v3856
        %v3880 = vmul.f32 %v3843, %v3856
        %v3881 = vmul.f32 %v3844, %v3856
        %v3882 = vmul.f32 %v3845, %v3856
        %v3883 = vmul.f32 %v3846, %v3856
        %v3884 = vmul.f32 %v3847, %v3856
        %v3885 = vmul.f32 %v3848, %v3856
        %v3886 = vmul.f32 %v3849, %v3856
        %v3887 = vmul.f32 %v3850, %v3856
        %v3888 = vmul.f32 %v3851, %v3856
        %v3890 = vlaneseq
        %v3891 = vshrl.u32 %v3890, 7
        %v3892 = vsub.s32 0, %v3891
        %v3893 = vrot.slane %v3707, %v3892
        %v3895 = vadd.f32 %v3857, %v3893
        %v3896 = vadd.f32 %v3858, %v3893
        %v3897 = vadd.f32 %v3859, %v3893
        %v3898 = vadd.f32 %v3860, %v3893
        %v3899 = vadd.f32 %v3861, %v3893
        %v3900 = vadd.f32 %v3862, %v3893
        %v3901 = vadd.f32 %v3863, %v3893
        %v3902 = vadd.f32 %v3864, %v3893
        %v3903 = vadd.f32 %v3865, %v3893
        %v3904 = vadd.f32 %v3866, %v3893
        %v3905 = vadd.f32 %v3867, %v3893
        %v3906 = vadd.f32 %v3868, %v3893
        %v3907 = vadd.f32 %v3869, %v3893
        %v3908 = vadd.f32 %v3870, %v3893
        %v3909 = vadd.f32 %v3871, %v3893
        %v3910 = vadd.f32 %v3872, %v3893
        %v3911 = vadd.f32 %v3873, %v3893
        %v3912 = vadd.f32 %v3874, %v3893
        %v3913 = vadd.f32 %v3875, %v3893
        %v3914 = vadd.f32 %v3876, %v3893
        %v3915 = vadd.f32 %v3877, %v3893
        %v3916 = vadd.f32 %v3878, %v3893
        %v3917 = vadd.f32 %v3879, %v3893
        %v3918 = vadd.f32 %v3880, %v3893
        %v3919 = vadd.f32 %v3881, %v3893
        %v3920 = vadd.f32 %v3882, %v3893
        %v3921 = vadd.f32 %v3883, %v3893
        %v3922 = vadd.f32 %v3884, %v3893
        %v3923 = vadd.f32 %v3885, %v3893
        %v3924 = vadd.f32 %v3886, %v3893
        %v3925 = vadd.f32 %v3887, %v3893
        %v3926 = vadd.f32 %v3888, %v3893
        %v3927 = vadd.f32 %v3433, %v3895
        %v3928 = vadd.f32 %v3434, %v3896
        %v3929 = vadd.f32 %v3435, %v3897
        %v3930 = vadd.f32 %v3436, %v3898
        %v3931 = vadd.f32 %v3437, %v3899
        %v3932 = vadd.f32 %v3438, %v3900
        %v3933 = vadd.f32 %v3439, %v3901
        %v3934 = vadd.f32 %v3440, %v3902
        %v3935 = vadd.f32 %v3441, %v3903
        %v3936 = vadd.f32 %v3442, %v3904
        %v3937 = vadd.f32 %v3443, %v3905
        %v3938 = vadd.f32 %v3444, %v3906
        %v3939 = vadd.f32 %v3445, %v3907
        %v3940 = vadd.f32 %v3446, %v3908
        %v3941 = vadd.f32 %v3447, %v3909
        %v3942 = vadd.f32 %v3448, %v3910
        %v3943 = vadd.f32 %v3449, %v3911
        %v3944 = vadd.f32 %v3450, %v3912
        %v3945 = vadd.f32 %v3451, %v3913
        %v3946 = vadd.f32 %v3452, %v3914
        %v3947 = vadd.f32 %v3453, %v3915
        %v3948 = vadd.f32 %v3454, %v3916
        %v3949 = vadd.f32 %v3455, %v3917
        %v3950 = vadd.f32 %v3456, %v3918
        %v3951 = vadd.f32 %v3457, %v3919
        %v3952 = vadd.f32 %v3458, %v3920
        %v3953 = vadd.f32 %v3459, %v3921
        %v3954 = vadd.f32 %v3460, %v3922
        %v3955 = vadd.f32 %v3461, %v3923
        %v3956 = vadd.f32 %v3462, %v3924
        %v3957 = vadd.f32 %v3463, %v3925
        %v3958 = vadd.f32 %v3464, %v3926
        %v3959 = vmax.f32 %v3927, 0.0
        %v3960 = vmax.f32 %v3928, 0.0
        %v3961 = vmax.f32 %v3929, 0.0
        %v3962 = vmax.f32 %v3930, 0.0
        %v3963 = vmax.f32 %v3931, 0.0
        %v3964 = vmax.f32 %v3932, 0.0
        %v3965 = vmax.f32 %v3933, 0.0
        %v3966 = vmax.f32 %v3934, 0.0
        %v3967 = vmax.f32 %v3935, 0.0
        %v3968 = vmax.f32 %v3936, 0.0
        %v3969 = vmax.f32 %v3937, 0.0
        %v3970 = vmax.f32 %v3938, 0.0
        %v3971 = vmax.f32 %v3939, 0.0
        %v3972 = vmax.f32 %v3940, 0.0
        %v3973 = vmax.f32 %v3941, 0.0
        %v3974 = vmax.f32 %v3942, 0.0
        %v3975 = vmax.f32 %v3943, 0.0
        %v3976 = vmax.f32 %v3944, 0.0
        %v3977 = vmax.f32 %v3945, 0.0
        %v3978 = vmax.f32 %v3946, 0.0
        %v3979 = vmax.f32 %v3947, 0.0
        %v3980 = vmax.f32 %v3948, 0.0
        %v3981 = vmax.f32 %v3949, 0.0
        %v3982 = vmax.f32 %v3950, 0.0
        %v3983 = vmax.f32 %v3951, 0.0
        %v3984 = vmax.f32 %v3952, 0.0
        %v3985 = vmax.f32 %v3953, 0.0
        %v3986 = vmax.f32 %v3954, 0.0
        %v3987 = vmax.f32 %v3955, 0.0
        %v3988 = vmax.f32 %v3956, 0.0
        %v3989 = vmax.f32 %v3957, 0.0
        %v3990 = vmax.f32 %v3958, 0.0
        %3991 = vst [vmem:[%s516] sm:$0xff] %v3959
        %3992 = vst [vmem:[%s516 + $0x8] sm:$0xff] %v3960
        %3993 = vst [vmem:[%s516 + $0x10] sm:$0xff] %v3961
        %3994 = vst [vmem:[%s516 + $0x18] sm:$0xff] %v3962
        %3995 = vst [vmem:[%s516 + $0x20] sm:$0xff] %v3963
        %3996 = vst [vmem:[%s516 + $0x28] sm:$0xff] %v3964
        %3997 = vst [vmem:[%s516 + $0x30] sm:$0xff] %v3965
        %3998 = vst [vmem:[%s516 + $0x38] sm:$0xff] %v3966
        %3999 = vst [vmem:[%s516 + $0x40] sm:$0xff] %v3967
        %4000 = vst [vmem:[%s516 + $0x48] sm:$0xff] %v3968
        %4001 = vst [vmem:[%s516 + $0x50] sm:$0xff] %v3969
        %4002 = vst [vmem:[%s516 + $0x58] sm:$0xff] %v3970
        %4003 = vst [vmem:[%s516 + $0x60] sm:$0xff] %v3971
        %4004 = vst [vmem:[%s516 + $0x68] sm:$0xff] %v3972
        %4005 = vst [vmem:[%s516 + $0x70] sm:$0xff] %v3973
        %4006 = vst [vmem:[%s516 + $0x78] sm:$0xff] %v3974
        %4007 = vst [vmem:[%s516 + $0x80] sm:$0xff] %v3975
        %4008 = vst [vmem:[%s516 + $0x88] sm:$0xff] %v3976
        %4009 = vst [vmem:[%s516 + $0x90] sm:$0xff] %v3977
        %4010 = vst [vmem:[%s516 + $0x98] sm:$0xff] %v3978
        %4011 = vst [vmem:[%s516 + $0xa0] sm:$0xff] %v3979
        %4012 = vst [vmem:[%s516 + $0xa8] sm:$0xff] %v3980
        %4013 = vst [vmem:[%s516 + $0xb0] sm:$0xff] %v3981
        %4014 = vst [vmem:[%s516 + $0xb8] sm:$0xff] %v3982
        %4015 = vst [vmem:[%s516 + $0xc0] sm:$0xff] %v3983
        %4016 = vst [vmem:[%s516 + $0xc8] sm:$0xff] %v3984
        %4017 = vst [vmem:[%s516 + $0xd0] sm:$0xff] %v3985
        %4018 = vst [vmem:[%s516 + $0xd8] sm:$0xff] %v3986
        %4019 = vst [vmem:[%s516 + $0xe0] sm:$0xff] %v3987
        %4020 = vst [vmem:[%s516 + $0xe8] sm:$0xff] %v3988
        %4021 = vst [vmem:[%s516 + $0xf0] sm:$0xff] %v3989
        %4022 = vst [vmem:[%s516 + $0xf8] sm:$0xff] %v3990
        %s4023 = sand.u32 %s318, 1
        %s4024 = scalar_lea.sflag [#allocation5], %s4023
        %s4025 = sand.u32 %s318, 1
        %s4026 = smul.addr %s4025, 256
        %s4027 = scalar_lea.vmem [#allocation12], %s4026
        // Predicated region
        $region93: #{tpu_custom_call.1} parent=71 // pred_check
          %p4028 = pneg %p328
        $region94: #{tpu_custom_call.1} parent=71 // pred_check_branch
          %4030 = sbr.rel (%p4028) target = $region96
        $region95: #{tpu_custom_call.1} parent=71 // pred_region
          %s4032 = ssub.s32 4096, 4096
          %4033 = vsyncadd %s4024, %s4032
          %s4034 = smul.addr %s32, 32
          %s4035 = smul.addr %s4034, 128
          %s4036 = scalar_lea.hbm %s13, %s4035
          %s4037 = sshll.u32 %s4027, 4
          %s4038 = int_to_ptr.vmem [resolvable:$true] %s4037
          %4043 = dma.vmem_to_hbm [thread:$0]  %s4038, 4096, %s4036, %s4024, 128, 128, 8
        $region96: #{tpu_custom_call.1} parent=71 // pred_fallthru
          _
      $region72: #{tpu_custom_call.1} parent=5 // pred_fallthru
        _
      %p4044 = scmp.le.s32.totalorder 2, %s27
      // Predicated region
      $region97: #{tpu_custom_call.1} parent=5 // pred_check
        %p4045 = pneg %p4044
      $region98: #{tpu_custom_call.1} parent=5 // pred_check_branch
        %4047 = sbr.rel (%p4045) target = $region100
      $region99: #{tpu_custom_call.1} parent=5 // pred_region
        %s4048 = ssub.s32 %s27, 2
        // Predicated region
        $region101: #{tpu_custom_call.1} parent=99 // pred_check
          %p4049 = pneg %p334
        $region102: #{tpu_custom_call.1} parent=99 // pred_check_branch
          %4051 = sbr.rel (%p4049) target = $region104
        $region103: #{tpu_custom_call.1} parent=99 // pred_region
          %s4052 = sand.u32 %s319, 1
          %s4053 = scalar_lea.sflag [#allocation5], %s4052
          %s4054 = sand.u32 %s319, 1
          %s4055 = smul.addr %s4054, 256
          %s4056 = scalar_lea.vmem [#allocation12], %s4055
          %4057 = dma.done %s4053, 4096
        $region104: #{tpu_custom_call.1} parent=99 // pred_fallthru
          _
      $region100: #{tpu_custom_call.1} parent=5 // pred_fallthru
        _
    $region6: #{tpu_custom_call.1} parent=1 // loop_footer
      %s31 = sadd.s32 1, %s27
    $region7: #{tpu_custom_call.1} parent=1 // loop_footer_branch
      %26 = sbr.rel target = $region3
    $region8: #{tpu_custom_call.1} parent=1 // loop_exit
      _
    %4058 = vsyncpa [#allocation4], 1
    %s4059 = scalar_lea.sflag [#allocation4], 1
    %4060 = vsyncpa %s4059, 1
    %4061 = vsyncpa [#allocation7], 1
    %4062 = vsyncpa [#allocation10], 1
    %4063 = vsyncpa [#allocation5], 1
    %s4064 = scalar_lea.sflag [#allocation5], 1
    %4065 = vsyncpa %s4064, 1

</llo_original>
